<compile_context>
chip_gen: v5e
topology: v5e:2x2
jax: 0.10.0
libtpu: 0.0.40
codegen_flags: <defaults>
</compile_context>

<pallas_src>
import jax
import jax.numpy as jnp
from jax import lax
from jax.experimental import pallas as pl
from jax.experimental.pallas import tpu as pltpu

# ---- static hyper-parameters (free globals in the PyTorch snippet) ----
INV_SCALE_FACTOR = 8.0   # e.g. sqrt(head_dim)
DROPOUT_P = 0.0          # TODO(synk): dropout is eval-mode identity; training-mode
                         # dropout would need pltpu.prng_seed/prng_random_bits masking.

VMEM_TILE_BUDGET = 40 * 1024 * 1024   # keep well under v7x's 64 MiB per TensorCore


def _attn_kernel(q_ref, k_ref, v_ref, o_ref):
    # q_ref: (TILE_L, D) bf16, k_ref: (S, D) bf16, v_ref: (S, N) bf16,
    # o_ref: (TILE_L, N) out_dtype.
    # QK^T without materializing k.T: contract last dims on the MXU, f32 acc.
    s = lax.dot_general(
        q_ref[...], k_ref[...],
        dimension_numbers=(((1,), (1,)), ((), ())),
        preferred_element_type=jnp.float32,
    )  # (TILE_L, S) f32

    # softmax(s / c) == exp((s - max(s)) / c) / sum(...); fold the 1/c scale
    # into the already-required (s - s_max) VPU pass over the logits.
    s_max = jnp.max(s, axis=-1, keepdims=True)
    p = jnp.exp((s - s_max) * (1.0 / INV_SCALE_FACTOR))          # f32, values in (0, 1]
    denom = jnp.sum(p, axis=-1, keepdims=True)
    inv_denom = pl.reciprocal(denom, approx=True)                # EUP vrcp, idle slot

    s_len = p.shape[-1]
    n_len = o_ref.shape[-1]
    if n_len >= s_len:
        # Normalize the smaller (TILE_L, S) probabilities before P @ V.
        p = p * inv_denom
        out = jnp.dot(p.astype(jnp.bfloat16), v_ref[...],
                      preferred_element_type=jnp.float32)        # (TILE_L, N) f32
    else:
        # Defer normalization to the smaller (TILE_L, N) output.
        out = jnp.dot(p.astype(jnp.bfloat16), v_ref[...],
                      preferred_element_type=jnp.float32)
        out = out * inv_denom

    # dropout (identity in eval mode), then store in the output dtype.
    o_ref[...] = out.astype(o_ref.dtype)


def _vmem_footprint(tile_l, S, D, N, out_bytes):
    """Per-step VMEM bytes: pipeline buffers + in-kernel temporaries.

    Q / K / out are double-buffered. Value is modelled as double-buffered too,
    so the estimate also covers the fallback path where pl.Buffered(1) is not
    available (if it is, we simply leave a spare V tile of headroom).
    """
    buffers = (2 * tile_l * D * 2             # q tile (bf16) x2
               + 2 * S * D * 2                # k tile (bf16) x2
               + 2 * S * N * 2                # value tile (bf16), worst-case x2
               + 2 * tile_l * N * out_bytes)  # out tile x2
    temps = tile_l * S * (4 + 4 + 2)          # s (f32), p (f32), p cast to bf16
    return buffers + temps


def _pick_tile_l(L, S, D, N, out_bytes):
    # Prefer 128: the kernel is HBM-bound at module shapes, so larger L tiles
    # only grow the exposed first-fetch prologue / last-writeback epilogue.
    # Shrink further when N is large enough that the out / value tiles would
    # threaten v7x's 64 MiB VMEM.
    for t in (128, 64, 32, 16, 8):
        if L % t == 0 and _vmem_footprint(t, S, D, N, out_bytes) <= VMEM_TILE_BUDGET:
            return t
    return L  # tiny or non-multiple-of-8 L: use the whole axis as one block


def attention_forward(in1, in2, value, *, out_dtype=jnp.bfloat16):
    """in1: (B, L, D), in2: (B, S, D), value: (S, N) -> (B, L, N) in out_dtype.

    Matches Model.forward in eval mode (dropout = identity). Q/K/V run through
    the MXU in bf16 with f32 accumulation; pass out_dtype=jnp.float32 for an
    f32 result at the cost of doubling the dominant HBM writeback stream.
    """
    B, L, D = in1.shape
    Bk, S, Dk = in2.shape
    Sv, N = value.shape
    assert B == Bk and D == Dk and S == Sv

    out_bytes = jnp.dtype(out_dtype).itemsize
    tile_l = _pick_tile_l(L, S, D, N, out_bytes)
    grid = (B, L // tile_l)

    # bf16 MXU operands (f32 accumulation in-kernel); also halves HBM->VMEM
    # traffic for the L-axis-resident K and value tiles.
    q_bf16 = in1.astype(jnp.bfloat16)
    k_bf16 = in2.astype(jnp.bfloat16)
    v_bf16 = value.astype(jnp.bfloat16)

    # VMEM limit = buffer-accurate footprint + in-kernel temporaries + fixed
    # headroom for Mosaic internal scratch, floored at 16 MiB and capped safely
    # below v7x's 64 MiB physical VMEM.
    vmem_limit = int(min(max(_vmem_footprint(tile_l, S, D, N, out_bytes)
                             + 2 * 1024 * 1024,
                             16 * 1024 * 1024),
                         48 * 1024 * 1024))

    def call(value_spec):
        return pl.pallas_call(
            _attn_kernel,
            out_shape=jax.ShapeDtypeStruct((B, L, N), out_dtype),
            grid_spec=pltpu.PrefetchScalarGridSpec(
                num_scalar_prefetch=0,
                grid=grid,
                in_specs=[
                    # leading batch dim squeezed out of the kernel view (None)
                    pl.BlockSpec((None, tile_l, D), lambda b, l: (b, l, 0)),  # q tile
                    pl.BlockSpec((None, S, D),      lambda b, l: (b, 0, 0)),  # k, L-resident
                    value_spec,                                               # shared value
                ],
                out_specs=pl.BlockSpec((None, tile_l, N), lambda b, l: (b, l, 0)),
            ),
            compiler_params=pltpu.CompilerParams(
                dimension_semantics=("parallel", "parallel"),
                vmem_limit_bytes=vmem_limit,
            ),
        )(q_bf16, k_bf16, v_bf16)

    try:
        # value's block index never changes across the grid, so double-buffering
        # it only wastes S*N*2 bytes of VMEM; request a single buffer.
        return call(pl.BlockSpec((S, N), lambda b, l: (0, 0),
                                 pipeline_mode=pl.Buffered(1)))
    except Exception:
        # jax / Mosaic build without pipeline_mode support: default buffering.
        return call(pl.BlockSpec((S, N), lambda b, l: (0, 0)))


def reference_forward(in1, in2, value):
    qk = jnp.einsum("bld,bsd->bls", in1, in2)
    scaled = qk / INV_SCALE_FACTOR
    p = jax.nn.softmax(scaled, axis=-1)
    return jnp.einsum("bls,sn->bln", p, value)


if __name__ == "__main__":
    key = jax.random.PRNGKey(0)
    k1, k2, k3 = jax.random.split(key, 3)

    # Small shapes consistent with the module: value's first dim S is the
    # softmax-axis length (module uses S=512, N=4096; smaller N here).
    B, L, S, D, N = 2, 256, 512, 128, 256

    in1 = jax.random.normal(k1, (B, L, D), dtype=jnp.float32)
    in2 = jax.random.normal(k2, (B, S, D), dtype=jnp.float32)
    value = jax.random.normal(k3, (S, N), dtype=jnp.float32)  # deterministic "Param"

    out = jax.block_until_ready(attention_forward(in1, in2, value))
    ref = reference_forward(in1, in2, value)

    assert out.shape == (B, L, N)
    # bf16 MXU operands + bf16 output (f32 accumulation) -> loosened tolerance
    # vs. the pure-f32 reference.
    assert jnp.allclose(out.astype(jnp.float32), ref, atol=5e-2, rtol=5e-2), \
        "mismatch vs reference"

    print("KERNEL_OK")
</pallas_src>

<mosaic_0001>
module attributes {stable_mosaic.version = 11 : i64} {
  func.func @_attn_kernel(%arg0: i32, %arg1: i32, %arg2: memref<1x128x128xbf16, #tpu.memory_space<vmem>>, %arg3: memref<1x512x128xbf16, #tpu.memory_space<vmem>>, %arg4: memref<512x256xbf16, #tpu.memory_space<vmem>>, %arg5: memref<1x128x256xbf16, #tpu.memory_space<vmem>>) attributes {dimension_semantics = [#tpu.dimension_semantics<parallel>, #tpu.dimension_semantics<parallel>], iteration_bounds = array<i64: 2, 2>, scalar_prefetch = 0 : i64, scratch_operands = 0 : i64, tpu.core_type = #tpu.core_type<tc>, window_params = [{transform_indices = @transform_0, window_bounds = array<i64: 1, 128, 128>}, {transform_indices = @transform_1, window_bounds = array<i64: 1, 512, 128>}, {pipeline_mode = #tpu.pipeline_mode<synchronous>, transform_indices = @transform_2, window_bounds = array<i64: 512, 256>}, {transform_indices = @transform_3, window_bounds = array<i64: 1, 128, 256>}]} {
    %c0 = arith.constant 0 : index
    %c0_0 = arith.constant 0 : index
    %c0_1 = arith.constant 0 : index
    %0 = vector.load %arg2[%c0, %c0_0, %c0_1] : memref<1x128x128xbf16, #tpu.memory_space<vmem>>, vector<1x128x128xbf16>
    %1 = vector.shape_cast %0 : vector<1x128x128xbf16> to vector<128x128xbf16>
    %c0_2 = arith.constant 0 : index
    %c0_3 = arith.constant 0 : index
    %c0_4 = arith.constant 0 : index
    %2 = vector.load %arg3[%c0_2, %c0_3, %c0_4] : memref<1x512x128xbf16, #tpu.memory_space<vmem>>, vector<1x512x128xbf16>
    %3 = vector.shape_cast %2 : vector<1x512x128xbf16> to vector<512x128xbf16>
    %cst = arith.constant dense<0.000000e+00> : vector<128x512xf32>
    %4 = tpu.matmul %1, %3, %cst {dimension_numbers = #tpu.dot_dimension_numbers<[1], [1], [0], [0], [0, 0, 1, 0], [], []>} : vector<128x128xbf16>, vector<512x128xbf16>, vector<128x512xf32> -> vector<128x512xf32>
    %cst_5 = arith.constant dense<0xFF800000> : vector<128xf32>
    %5 = vector.multi_reduction <maximumf>, %4, %cst_5 [1] : vector<128x512xf32> to vector<128xf32>
    %6 = vector.shape_cast %5 : vector<128xf32> to vector<128x1xf32>
    %7 = vector.broadcast %6 : vector<128x1xf32> to vector<128x512xf32>
    %8 = arith.subf %4, %7 : vector<128x512xf32>
    %cst_6 = arith.constant 1.250000e-01 : f32
    %9 = vector.broadcast %cst_6 : f32 to vector<128x512xf32>
    %10 = arith.mulf %8, %9 : vector<128x512xf32>
    %11 = math.exp %10 : vector<128x512xf32>
    %cst_7 = arith.constant dense<0.000000e+00> : vector<128xf32>
    %12 = vector.multi_reduction <add>, %11, %cst_7 [1] : vector<128x512xf32> to vector<128xf32>
    %13 = vector.shape_cast %12 : vector<128xf32> to vector<128x1xf32>
    %14 = tpu.reciprocal %13 {approx = true} : vector<128x1xf32> -> vector<128x1xf32>
    %15 = arith.truncf %11 : vector<128x512xf32> to vector<128x512xbf16>
    %c0_8 = arith.constant 0 : index
    %c0_9 = arith.constant 0 : index
    %16 = vector.load %arg4[%c0_8, %c0_9] : memref<512x256xbf16, #tpu.memory_space<vmem>>, vector<512x256xbf16>
    %cst_10 = arith.constant dense<0.000000e+00> : vector<128x256xf32>
    %17 = tpu.matmul %15, %16, %cst_10 {dimension_numbers = #tpu.dot_dimension_numbers<[1], [0], [0], [1], [0, 0, 1, 1], [], []>} : vector<128x512xbf16>, vector<512x256xbf16>, vector<128x256xf32> -> vector<128x256xf32>
    %18 = vector.broadcast %14 : vector<128x1xf32> to vector<128x256xf32>
    %19 = arith.mulf %17, %18 : vector<128x256xf32>
    %20 = arith.truncf %19 : vector<128x256xf32> to vector<128x256xbf16>
    %c0_11 = arith.constant 0 : index
    %c0_12 = arith.constant 0 : index
    %c0_13 = arith.constant 0 : index
    %21 = vector.load %arg5[%c0_11, %c0_12, %c0_13] : memref<1x128x256xbf16, #tpu.memory_space<vmem>>, vector<1x128x256xbf16>
    %22 = vector.shape_cast %21 : vector<1x128x256xbf16> to vector<128x256xbf16>
    %23 = vector.shape_cast %20 : vector<128x256xbf16> to vector<1x128x256xbf16>
    tpu.vector_store %arg5[%c0_11, %c0_12, %c0_13], %23 {strides = array<i32>} : memref<1x128x256xbf16, #tpu.memory_space<vmem>>, vector<1x128x256xbf16>,
    return
  }
  func.func @transform_0(%arg0: i32, %arg1: i32) -> (i32, i32, i32) {
    %c0_i32 = arith.constant 0 : i32
    %c0_i32_0 = arith.constant 0 : i32
    return %arg0, %arg1, %c0_i32 : i32, i32, i32
  }
  func.func @transform_1(%arg0: i32, %arg1: i32) -> (i32, i32, i32) {
    %c0_i32 = arith.constant 0 : i32
    %c0_i32_0 = arith.constant 0 : i32
    %c0_i32_1 = arith.constant 0 : i32
    return %arg0, %c0_i32, %c0_i32_0 : i32, i32, i32
  }
  func.func @transform_2(%arg0: i32, %arg1: i32) -> (i32, i32) {
    %c0_i32 = arith.constant 0 : i32
    %c0_i32_0 = arith.constant 0 : i32
    %c0_i32_1 = arith.constant 0 : i32
    return %c0_i32, %c0_i32_0 : i32, i32
  }
  func.func @transform_3(%arg0: i32, %arg1: i32) -> (i32, i32, i32) {
    %c0_i32 = arith.constant 0 : i32
    %c0_i32_0 = arith.constant 0 : i32
    return %arg0, %arg1, %c0_i32 : i32, i32, i32
  }
}

module attributes {stable_mosaic.version = 11 : i64} {
  func.func @_attn_kernel(%arg0: i32, %arg1: i32, %arg2: memref<1x128x128xbf16, #tpu.memory_space<vmem>>, %arg3: memref<1x512x128xbf16, #tpu.memory_space<vmem>>, %arg4: memref<512x256xbf16, #tpu.memory_space<vmem>>, %arg5: memref<1x128x256xbf16, #tpu.memory_space<vmem>>) attributes {dimension_semantics = [#tpu.dimension_semantics<parallel>, #tpu.dimension_semantics<parallel>], iteration_bounds = array<i64: 2, 2>, scalar_prefetch = 0 : i64, scratch_operands = 0 : i64, tpu.core_type = #tpu.core_type<tc>, window_params = [{transform_indices = @transform_0, window_bounds = array<i64: 1, 128, 128>}, {transform_indices = @transform_1, window_bounds = array<i64: 1, 512, 128>}, {pipeline_mode = #tpu.pipeline_mode<synchronous>, transform_indices = @transform_2, window_bounds = array<i64: 512, 256>}, {transform_indices = @transform_3, window_bounds = array<i64: 1, 128, 256>}]} {
    %c0 = arith.constant 0 : index
    %c0_0 = arith.constant 0 : index
    %c0_1 = arith.constant 0 : index
    %0 = vector.load %arg2[%c0, %c0_0, %c0_1] : memref<1x128x128xbf16, #tpu.memory_space<vmem>>, vector<1x128x128xbf16>
    %1 = vector.shape_cast %0 : vector<1x128x128xbf16> to vector<128x128xbf16>
    %c0_2 = arith.constant 0 : index
    %c0_3 = arith.constant 0 : index
    %c0_4 = arith.constant 0 : index
    %2 = vector.load %arg3[%c0_2, %c0_3, %c0_4] : memref<1x512x128xbf16, #tpu.memory_space<vmem>>, vector<1x512x128xbf16>
    %3 = vector.shape_cast %2 : vector<1x512x128xbf16> to vector<512x128xbf16>
    %cst = arith.constant dense<0.000000e+00> : vector<128x512xf32>
    %4 = tpu.matmul %1, %3, %cst {dimension_numbers = #tpu.dot_dimension_numbers<[1], [1], [0], [0], [0, 0, 1, 0], [], []>} : vector<128x128xbf16>, vector<512x128xbf16>, vector<128x512xf32> -> vector<128x512xf32>
    %cst_5 = arith.constant dense<0xFF800000> : vector<128xf32>
    %5 = vector.multi_reduction <maximumf>, %4, %cst_5 [1] : vector<128x512xf32> to vector<128xf32>
    %6 = vector.shape_cast %5 : vector<128xf32> to vector<128x1xf32>
    %7 = vector.broadcast %6 : vector<128x1xf32> to vector<128x512xf32>
    %8 = arith.subf %4, %7 : vector<128x512xf32>
    %cst_6 = arith.constant 1.250000e-01 : f32
    %9 = vector.broadcast %cst_6 : f32 to vector<128x512xf32>
    %10 = arith.mulf %8, %9 : vector<128x512xf32>
    %11 = math.exp %10 : vector<128x512xf32>
    %cst_7 = arith.constant dense<0.000000e+00> : vector<128xf32>
    %12 = vector.multi_reduction <add>, %11, %cst_7 [1] : vector<128x512xf32> to vector<128xf32>
    %13 = vector.shape_cast %12 : vector<128xf32> to vector<128x1xf32>
    %14 = tpu.reciprocal %13 {approx = true} : vector<128x1xf32> -> vector<128x1xf32>
    %15 = arith.truncf %11 : vector<128x512xf32> to vector<128x512xbf16>
    %c0_8 = arith.constant 0 : index
    %c0_9 = arith.constant 0 : index
    %16 = vector.load %arg4[%c0_8, %c0_9] : memref<512x256xbf16, #tpu.memory_space<vmem>>, vector<512x256xbf16>
    %cst_10 = arith.constant dense<0.000000e+00> : vector<128x256xf32>
    %17 = tpu.matmul %15, %16, %cst_10 {dimension_numbers = #tpu.dot_dimension_numbers<[1], [0], [0], [1], [0, 0, 1, 1], [], []>} : vector<128x512xbf16>, vector<512x256xbf16>, vector<128x256xf32> -> vector<128x256xf32>
    %18 = vector.broadcast %14 : vector<128x1xf32> to vector<128x256xf32>
    %19 = arith.mulf %17, %18 : vector<128x256xf32>
    %20 = arith.truncf %19 : vector<128x256xf32> to vector<128x256xbf16>
    %c0_11 = arith.constant 0 : index
    %c0_12 = arith.constant 0 : index
    %c0_13 = arith.constant 0 : index
    %21 = vector.load %arg5[%c0_11, %c0_12, %c0_13] : memref<1x128x256xbf16, #tpu.memory_space<vmem>>, vector<1x128x256xbf16>
    %22 = vector.shape_cast %21 : vector<1x128x256xbf16> to vector<128x256xbf16>
    %23 = vector.shape_cast %20 : vector<128x256xbf16> to vector<1x128x256xbf16>
    tpu.vector_store %arg5[%c0_11, %c0_12, %c0_13], %23 {strides = array<i32>} : memref<1x128x256xbf16, #tpu.memory_space<vmem>>, vector<1x128x256xbf16>,
    return
  }
  func.func @transform_0(%arg0: i32, %arg1: i32) -> (i32, i32, i32) {
    %c0_i32 = arith.constant 0 : i32
    %c0_i32_0 = arith.constant 0 : i32
    return %arg0, %arg1, %c0_i32 : i32, i32, i32
  }
  func.func @transform_1(%arg0: i32, %arg1: i32) -> (i32, i32, i32) {
    %c0_i32 = arith.constant 0 : i32
    %c0_i32_0 = arith.constant 0 : i32
    %c0_i32_1 = arith.constant 0 : i32
    return %arg0, %c0_i32, %c0_i32_0 : i32, i32, i32
  }
  func.func @transform_2(%arg0: i32, %arg1: i32) -> (i32, i32) {
    %c0_i32 = arith.constant 0 : i32
    %c0_i32_0 = arith.constant 0 : i32
    %c0_i32_1 = arith.constant 0 : i32
    return %c0_i32, %c0_i32_0 : i32, i32
  }
  func.func @transform_3(%arg0: i32, %arg1: i32) -> (i32, i32, i32) {
    %c0_i32 = arith.constant 0 : i32
    %c0_i32_0 = arith.constant 0 : i32
    return %arg0, %arg1, %c0_i32 : i32, i32, i32
  }
}

</mosaic_0001>

<llo_original>
// kernel: tpu_custom_call.1
$region0: #{tpu_custom_call.1}
  #allocation0 [shape = 'u32[]', space=smem, size = 0x4, offset = 0x4, fixed_abs, tag = 'smem constant byte address 0x4 - core index']
  #allocation1 [shape = 'u32[72,128]{1,0:T(1,128)}', space=vmem, size = 0x9000, scoped, tag = 'internal scratch']
  %s0 = inlined_call_operand.hbm [shape: bf16[2,256,128], index: 0, kind: input, shape index: {}]
  %s1 = inlined_call_operand.hbm [shape: bf16[2,512,128], index: 1, kind: input, shape index: {}]
  %s2 = inlined_call_operand.hbm [shape: bf16[512,256], index: 2, kind: input, shape index: {}]
  %s3 = inlined_call_operand.hbm [shape: bf16[2,256,256], index: 3, kind: output, shape index: {}]
  %s4 = sld [smem:[#allocation0]]
  $region57: #{tpu_custom_call.1} parent=0
    _
  %s6 = ssub.s32 1, %s4
  %s7 = scalar_select 0, %s6, %s4
  $region1: #{tpu_custom_call.1} parent=0
    #allocation2 [shape = 'u8[65536]{0}', space=vmem, size = 0x10000, scoped, tag = 'input window, operand 0']
    #allocation3 [shape = 's32[2]{0}', space=sflag, size = 0x8, scoped, tag = 'scoped memory for tpu_custom_call.1']
    #allocation4 [shape = 's32[2]{0}', space=sflag, size = 0x8, scoped, tag = 'scoped memory for tpu_custom_call.1']
    #allocation5 [shape = 'u8[262144]{0}', space=vmem, size = 0x40000, scoped, tag = 'input window, operand 1']
    #allocation6 [shape = 's32[2]{0}', space=sflag, size = 0x8, scoped, tag = 'scoped memory for tpu_custom_call.1']
    #allocation7 [shape = 'u8[262144]{0}', space=vmem, size = 0x40000, scoped, tag = 'input window, operand 2, single buffered']
    #allocation8 [shape = 'u8[131072]{0}', space=vmem, size = 0x20000, scoped, tag = 'output window, operand 0']
    %8 = vsyncpa [#allocation3], 0
    %s9 = scalar_lea.sflag [#allocation3], 1
    %10 = vsyncpa %s9, 0
    %11 = vsyncpa [#allocation6], 0
    %s12 = scalar_lea.sflag [#allocation6], 1
    %13 = vsyncpa %s12, 0
    %14 = vsyncpa [#allocation4], 0
    %s15 = scalar_lea.sflag [#allocation4], 1
    %16 = vsyncpa %s15, 0
    loop: start=0, step=1, limit=6
    $region2: #{tpu_custom_call.1} parent=1 // loop_pre_header
      _
    $region3: #{tpu_custom_call.1} parent=1 // loop_header
      %s18 = sphi 0, %s22
      %p19 = scmp.ge.s32.totalorder %s18, 6
      %s25 = sphi 0, %s37
      %s26 = sphi 0, %s33
      %s27 = sphi 0, %s25
      %s28 = sphi 0, %s26
      %s29 = sphi 0, %s27
      %s30 = sphi 0, %s28
      %s42 = sphi 0, %s44
      %s45 = sphi 0, %s42
      %s46 = sphi 0, %s45
      %s62 = sphi 0, %s46
      %s68 = sphi 0, %s70
      %s71 = sphi 0, %s68
      %s72 = sphi 0, %s71
      %s88 = sphi 0, %s72
      %s92 = sphi 0, %s92
      %s94 = sphi 0, %s92
      %s95 = sphi 0, %s94
      %s109 = sphi 0, %s95
      %s117 = sphi 0, %s119
      %s120 = sphi 0, %s117
      %s121 = sphi 0, %s120
      %s137 = sphi 0, %s121
    $region4: #{tpu_custom_call.1} parent=1 // loop_header_branch
      %21 = sbr.rel (%p19) target = $region8
    $region5: #{tpu_custom_call.1} parent=1 // loop_body
      %s23 = ssub.s32 %s18, 1
      %s24 = ssub.s32 %s18, 2
      %s31 = sadd.s32 1, %s26
      %p32 = scmp.ge.s32.totalorder %s31, 2
      %s33 = scalar_select %p32, 0, %s31
      %s34 = sadd.s32 1, %s25
      %s35 = scalar_select %p32, %s34, %s25
      %p36 = scmp.ge.s32.totalorder %s35, 2
      %s37 = scalar_select %p36, 0, %s35
      %s38 = ssub.s32 %s25, %s37
      %s39 = ssub.s32 %s26, %s33
      %s40 = sor.u32 %s38, %s39
      %p41 = scmp.eq.s32.totalorder %s40, 0
      %s43 = sadd.s32 %s42, 1
      %s44 = scalar_select %p41, %s42, %s43
      %p47 = pneg %p41
      %p48 = scmp.eq.s32.totalorder %s18, 3
      %p49 = por %p47, %p48
      %p50 = scmp.ne.s32.totalorder %s42, %s45
      %p51 = scmp.eq.s32.totalorder %s18, 0
      %p52 = por %p50, %p51
      %p53 = scmp.ne.s32.totalorder %s42, %s45
      %p54 = scmp.eq.s32.totalorder %s23, 3
      %p55 = por %p53, %p54
      %p56 = scmp.ne.s32.totalorder %s45, %s46
      %p57 = scmp.eq.s32.totalorder %s23, 0
      %p58 = por %p56, %p57
      %p59 = scmp.ne.s32.totalorder %s45, %s46
      %p60 = scmp.eq.s32.totalorder %s24, 3
      %p61 = por %p59, %p60
      %p63 = scmp.ne.s32.totalorder %s46, %s62
      %p64 = scmp.eq.s32.totalorder %s24, 0
      %p65 = por %p63, %p64
      %s66 = ssub.s32 %s25, %s37
      %p67 = scmp.eq.s32.totalorder %s66, 0
      %s69 = sadd.s32 %s68, 1
      %s70 = scalar_select %p67, %s68, %s69
      %p73 = pneg %p67
      %p74 = scmp.eq.s32.totalorder %s18, 3
      %p75 = por %p73, %p74
      %p76 = scmp.ne.s32.totalorder %s68, %s71
      %p77 = scmp.eq.s32.totalorder %s18, 0
      %p78 = por %p76, %p77
      %p79 = scmp.ne.s32.totalorder %s68, %s71
      %p80 = scmp.eq.s32.totalorder %s23, 3
      %p81 = por %p79, %p80
      %p82 = scmp.ne.s32.totalorder %s71, %s72
      %p83 = scmp.eq.s32.totalorder %s23, 0
      %p84 = por %p82, %p83
      %p85 = scmp.ne.s32.totalorder %s71, %s72
      %p86 = scmp.eq.s32.totalorder %s24, 3
      %p87 = por %p85, %p86
      %p89 = scmp.ne.s32.totalorder %s72, %s88
      %p90 = scmp.eq.s32.totalorder %s24, 0
      %p91 = por %p89, %p90
      %s93 = sadd.s32 %s92, 1
      %p96 = scmp.eq.s32.totalorder %s18, 3
      %p97 = scmp.ne.s32.totalorder %s92, %s94
      %p98 = scmp.eq.s32.totalorder %s18, 0
      %p99 = por %p97, %p98
      %p100 = scmp.ne.s32.totalorder %s92, %s94
      %p101 = scmp.eq.s32.totalorder %s23, 3
      %p102 = por %p100, %p101
      %p103 = scmp.ne.s32.totalorder %s94, %s95
      %p104 = scmp.eq.s32.totalorder %s23, 0
      %p105 = por %p103, %p104
      %p106 = scmp.ne.s32.totalorder %s94, %s95
      %p107 = scmp.eq.s32.totalorder %s24, 3
      %p108 = por %p106, %p107
      %p110 = scmp.ne.s32.totalorder %s95, %s109
      %p111 = scmp.eq.s32.totalorder %s24, 0
      %p112 = por %p110, %p111
      %s113 = ssub.s32 %s25, %s37
      %s114 = ssub.s32 %s26, %s33
      %s115 = sor.u32 %s113, %s114
      %p116 = scmp.eq.s32.totalorder %s115, 0
      %s118 = sadd.s32 %s117, 1
      %s119 = scalar_select %p116, %s117, %s118
      %p122 = pneg %p116
      %p123 = scmp.eq.s32.totalorder %s18, 3
      %p124 = por %p122, %p123
      %p125 = scmp.ne.s32.totalorder %s117, %s120
      %p126 = scmp.eq.s32.totalorder %s18, 0
      %p127 = por %p125, %p126
      %p128 = scmp.ne.s32.totalorder %s117, %s120
      %p129 = scmp.eq.s32.totalorder %s23, 3
      %p130 = por %p128, %p129
      %p131 = scmp.ne.s32.totalorder %s120, %s121
      %p132 = scmp.eq.s32.totalorder %s23, 0
      %p133 = por %p131, %p132
      %p134 = scmp.ne.s32.totalorder %s120, %s121
      %p135 = scmp.eq.s32.totalorder %s24, 3
      %p136 = por %p134, %p135
      %p138 = scmp.ne.s32.totalorder %s121, %s137
      %p139 = scmp.eq.s32.totalorder %s24, 0
      %p140 = por %p138, %p139
      %p141 = scmp.le.s32.totalorder 1, %s18
      %p142 = scmp.lt.s32.totalorder %s18, 5
      %p143 = pnand %p141, %p142
      %p144 = pneg %p143
      // Predicated region
      $region9: #{tpu_custom_call.1} parent=5 // pred_check
        _
      $region10: #{tpu_custom_call.1} parent=5 // pred_check_branch
        %146 = sbr.rel (%p143) target = $region12
      $region11: #{tpu_custom_call.1} parent=5 // pred_region
        %s147 = ssub.s32 %s18, 1
        // Predicated region
        $region13: #{tpu_custom_call.1} parent=11 // pred_check
          %p148 = pneg %p105
        $region14: #{tpu_custom_call.1} parent=11 // pred_check_branch
          %150 = sbr.rel (%p148) target = $region16
        $region15: #{tpu_custom_call.1} parent=11 // pred_region
          %152 = vsyncadd [#allocation6], 0
          %s153 = sshll.u32 %s2, 4
          %s154 = int_to_ptr.hbm [resolvable:$true] %s153
          %s155 = sshll.u32 [#allocation7], 4
          %s156 = int_to_ptr.vmem [resolvable:$true] %s155
          %161 = dma.hbm_to_vmem [thread:$0]  %s154, 8192, %s156, [#allocation6], 128, 128, 8
        $region16: #{tpu_custom_call.1} parent=11 // pred_fallthru
          _
      $region12: #{tpu_custom_call.1} parent=5 // pred_fallthru
        _
      %p162 = scmp.lt.s32.totalorder %s18, 4
      // Predicated region
      $region17: #{tpu_custom_call.1} parent=5 // pred_check
        %p163 = pneg %p162
      $region18: #{tpu_custom_call.1} parent=5 // pred_check_branch
        %165 = sbr.rel (%p163) target = $region20
      $region19: #{tpu_custom_call.1} parent=5 // pred_region
        // Predicated region
        $region21: #{tpu_custom_call.1} parent=19 // pred_check
          %p166 = pneg %p52
        $region22: #{tpu_custom_call.1} parent=19 // pred_check_branch
          %168 = sbr.rel (%p166) target = $region24
        $region23: #{tpu_custom_call.1} parent=19 // pred_region
          %s169 = sand.u32 %s42, 1
          %s170 = scalar_lea.sflag [#allocation3], %s169
          %s171 = sand.u32 %s42, 1
          %s172 = smul.addr %s171, 64
          %s173 = scalar_lea.vmem [#allocation2], %s172
          %s174 = smul.u32 16, %s26
          %176 = vsyncadd %s170, 0
          %s177 = smul.addr %s25, 32
          %s178 = sadd.s32 %s174, %s177
          %s179 = smul.addr %s178, 4
          %s180 = scalar_lea.hbm %s0, %s179
          %s181 = sshll.u32 %s180, 4
          %s182 = int_to_ptr.hbm [resolvable:$true] %s181
          %s183 = sshll.u32 %s173, 4
          %s184 = int_to_ptr.vmem [resolvable:$true] %s183
          %189 = dma.hbm_to_vmem [thread:$0]  %s182, 1024, %s184, %s170, 64, 64, 4
        $region24: #{tpu_custom_call.1} parent=19 // pred_fallthru
          _
        // Predicated region
        $region25: #{tpu_custom_call.1} parent=19 // pred_check
          %p190 = pneg %p78
        $region26: #{tpu_custom_call.1} parent=19 // pred_check_branch
          %192 = sbr.rel (%p190) target = $region28
        $region27: #{tpu_custom_call.1} parent=19 // pred_region
          %s193 = sand.u32 %s18, 1
          %s194 = scalar_lea.sflag [#allocation6], %s193
          %s195 = sand.u32 %s68, 1
          %s196 = smul.addr %s195, 256
          %s197 = scalar_lea.vmem [#allocation5], %s196
          %199 = vsyncadd %s194, 0
          %s200 = smul.addr %s25, 64
          %s201 = smul.addr %s200, 4
          %s202 = scalar_lea.hbm %s1, %s201
          %s203 = sshll.u32 %s202, 4
          %s204 = int_to_ptr.hbm [resolvable:$true] %s203
          %s205 = sshll.u32 %s197, 4
          %s206 = int_to_ptr.vmem [resolvable:$true] %s205
          %211 = dma.hbm_to_vmem [thread:$0]  %s204, 4096, %s206, %s194, 64, 64, 4
        $region28: #{tpu_custom_call.1} parent=19 // pred_fallthru
          _
      $region20: #{tpu_custom_call.1} parent=5 // pred_fallthru
        _
      %p212 = scmp.le.s32.totalorder 1, %s18
      %p213 = scmp.lt.s32.totalorder %s18, 5
      %p214 = pnand %p212, %p213
      %p215 = pneg %p214
      // Predicated region
      $region29: #{tpu_custom_call.1} parent=5 // pred_check
        _
      $region30: #{tpu_custom_call.1} parent=5 // pred_check_branch
        %217 = sbr.rel (%p214) target = $region32
      $region31: #{tpu_custom_call.1} parent=5 // pred_region
        %s218 = ssub.s32 %s18, 1
        %s219 = sand.u32 %s45, 1
        %s220 = scalar_lea.sflag [#allocation3], %s219
        %s221 = sand.u32 %s45, 1
        %s222 = smul.addr %s221, 64
        %s223 = scalar_lea.vmem [#allocation2], %s222
        // Predicated region
        $region33: #{tpu_custom_call.1} parent=31 // pred_check
          %p224 = pneg %p58
        $region34: #{tpu_custom_call.1} parent=31 // pred_check_branch
          %226 = sbr.rel (%p224) target = $region36
        $region35: #{tpu_custom_call.1} parent=31 // pred_region
          %228 = dma.done %s220, 1024
        $region36: #{tpu_custom_call.1} parent=31 // pred_fallthru
          _
        %s229 = sand.u32 %s23, 1
        %s230 = scalar_lea.sflag [#allocation6], %s229
        %s231 = sand.u32 %s71, 1
        %s232 = smul.addr %s231, 256
        %s233 = scalar_lea.vmem [#allocation5], %s232
        // Predicated region
        $region37: #{tpu_custom_call.1} parent=31 // pred_check
          %p234 = pneg %p84
        $region38: #{tpu_custom_call.1} parent=31 // pred_check_branch
          %236 = sbr.rel (%p234) target = $region40
        $region39: #{tpu_custom_call.1} parent=31 // pred_region
          %238 = dma.done %s230, 4096
        $region40: #{tpu_custom_call.1} parent=31 // pred_fallthru
          _
        // Predicated region
        $region41: #{tpu_custom_call.1} parent=31 // pred_check
          %p239 = pneg %p105
        $region42: #{tpu_custom_call.1} parent=31 // pred_check_branch
          %241 = sbr.rel (%p239) target = $region44
        $region43: #{tpu_custom_call.1} parent=31 // pred_region
          %243 = dma.done [#allocation6], 8192
        $region44: #{tpu_custom_call.1} parent=31 // pred_fallthru
          _
        %s244 = sand.u32 %s45, 1
        %s245 = scalar_lea.sflag [#allocation3], %s244
        %s246 = sand.u32 %s45, 1
        %s247 = smul.addr %s246, 64
        %s248 = scalar_lea.vmem [#allocation2], %s247
        %p249 = pneg %p58
        %p250 = pneg %p55
        %s251 = sand.u32 %s23, 1
        %s252 = scalar_lea.sflag [#allocation6], %s251
        %s253 = sand.u32 %s71, 1
        %s254 = smul.addr %s253, 256
        %s255 = scalar_lea.vmem [#allocation5], %s254
        %p256 = pneg %p84
        %p257 = pneg %p81
        %p258 = pneg %p105
        %p259 = pneg %p102
        %p260 = pneg %p133
        %p261 = pneg %p130
        %s262 = sand.u32 %s120, 1
        %s263 = scalar_lea.sflag [#allocation4], %s262
        %s264 = sand.u32 %s120, 1
        %s265 = smul.addr %s264, 128
        %s266 = scalar_lea.vmem [#allocation8], %s265
        %s267 = smul.u32 16, %s28
        %s268 = smul.u32 16, %s28
        %v269 = vld [vmem:[%s223] sm:$0xf]
        %v270 = vld [vmem:[%s223 + $0x4] sm:$0xf]
        %v271 = vld [vmem:[%s223 + $0x8] sm:$0xf]
        %v272 = vld [vmem:[%s223 + $0xc] sm:$0xf]
        %v273 = vld [vmem:[%s223 + $0x10] sm:$0xf]
        %v274 = vld [vmem:[%s223 + $0x14] sm:$0xf]
        %v275 = vld [vmem:[%s223 + $0x18] sm:$0xf]
        %v276 = vld [vmem:[%s223 + $0x1c] sm:$0xf]
        %v277 = vld [vmem:[%s223 + $0x20] sm:$0xf]
        %v278 = vld [vmem:[%s223 + $0x24] sm:$0xf]
        %v279 = vld [vmem:[%s223 + $0x28] sm:$0xf]
        %v280 = vld [vmem:[%s223 + $0x2c] sm:$0xf]
        %v281 = vld [vmem:[%s223 + $0x30] sm:$0xf]
        %v282 = vld [vmem:[%s223 + $0x34] sm:$0xf]
        %v283 = vld [vmem:[%s223 + $0x38] sm:$0xf]
        %v284 = vld [vmem:[%s223 + $0x3c] sm:$0xf]
        %v285 = vld [vmem:[%s233] sm:$0xf]
        %v286 = vld [vmem:[%s233 + $0x4] sm:$0xf]
        %v287 = vld [vmem:[%s233 + $0x8] sm:$0xf]
        %v288 = vld [vmem:[%s233 + $0xc] sm:$0xf]
        %v289 = vld [vmem:[%s233 + $0x10] sm:$0xf]
        %v290 = vld [vmem:[%s233 + $0x14] sm:$0xf]
        %v291 = vld [vmem:[%s233 + $0x18] sm:$0xf]
        %v292 = vld [vmem:[%s233 + $0x1c] sm:$0xf]
        %v293 = vld [vmem:[%s233 + $0x20] sm:$0xf]
        %v294 = vld [vmem:[%s233 + $0x24] sm:$0xf]
        %v295 = vld [vmem:[%s233 + $0x28] sm:$0xf]
        %v296 = vld [vmem:[%s233 + $0x2c] sm:$0xf]
        %v297 = vld [vmem:[%s233 + $0x30] sm:$0xf]
        %v298 = vld [vmem:[%s233 + $0x34] sm:$0xf]
        %v299 = vld [vmem:[%s233 + $0x38] sm:$0xf]
        %v300 = vld [vmem:[%s233 + $0x3c] sm:$0xf]
        %v301 = vld [vmem:[%s233 + $0x40] sm:$0xf]
        %v302 = vld [vmem:[%s233 + $0x44] sm:$0xf]
        %v303 = vld [vmem:[%s233 + $0x48] sm:$0xf]
        %v304 = vld [vmem:[%s233 + $0x4c] sm:$0xf]
        %v305 = vld [vmem:[%s233 + $0x50] sm:$0xf]
        %v306 = vld [vmem:[%s233 + $0x54] sm:$0xf]
        %v307 = vld [vmem:[%s233 + $0x58] sm:$0xf]
        %v308 = vld [vmem:[%s233 + $0x5c] sm:$0xf]
        %v309 = vld [vmem:[%s233 + $0x60] sm:$0xf]
        %v310 = vld [vmem:[%s233 + $0x64] sm:$0xf]
        %v311 = vld [vmem:[%s233 + $0x68] sm:$0xf]
        %v312 = vld [vmem:[%s233 + $0x6c] sm:$0xf]
        %v313 = vld [vmem:[%s233 + $0x70] sm:$0xf]
        %v314 = vld [vmem:[%s233 + $0x74] sm:$0xf]
        %v315 = vld [vmem:[%s233 + $0x78] sm:$0xf]
        %v316 = vld [vmem:[%s233 + $0x7c] sm:$0xf]
        %v317 = vld [vmem:[%s233 + $0x80] sm:$0xf]
        %v318 = vld [vmem:[%s233 + $0x84] sm:$0xf]
        %v319 = vld [vmem:[%s233 + $0x88] sm:$0xf]
        %v320 = vld [vmem:[%s233 + $0x8c] sm:$0xf]
        %v321 = vld [vmem:[%s233 + $0x90] sm:$0xf]
        %v322 = vld [vmem:[%s233 + $0x94] sm:$0xf]
        %v323 = vld [vmem:[%s233 + $0x98] sm:$0xf]
        %v324 = vld [vmem:[%s233 + $0x9c] sm:$0xf]
        %v325 = vld [vmem:[%s233 + $0xa0] sm:$0xf]
        %v326 = vld [vmem:[%s233 + $0xa4] sm:$0xf]
        %v327 = vld [vmem:[%s233 + $0xa8] sm:$0xf]
        %v328 = vld [vmem:[%s233 + $0xac] sm:$0xf]
        %v329 = vld [vmem:[%s233 + $0xb0] sm:$0xf]
        %v330 = vld [vmem:[%s233 + $0xb4] sm:$0xf]
        %v331 = vld [vmem:[%s233 + $0xb8] sm:$0xf]
        %v332 = vld [vmem:[%s233 + $0xbc] sm:$0xf]
        %v333 = vld [vmem:[%s233 + $0xc0] sm:$0xf]
        %v334 = vld [vmem:[%s233 + $0xc4] sm:$0xf]
        %v335 = vld [vmem:[%s233 + $0xc8] sm:$0xf]
        %v336 = vld [vmem:[%s233 + $0xcc] sm:$0xf]
        %v337 = vld [vmem:[%s233 + $0xd0] sm:$0xf]
        %v338 = vld [vmem:[%s233 + $0xd4] sm:$0xf]
        %v339 = vld [vmem:[%s233 + $0xd8] sm:$0xf]
        %v340 = vld [vmem:[%s233 + $0xdc] sm:$0xf]
        %v341 = vld [vmem:[%s233 + $0xe0] sm:$0xf]
        %v342 = vld [vmem:[%s233 + $0xe4] sm:$0xf]
        %v343 = vld [vmem:[%s233 + $0xe8] sm:$0xf]
        %v344 = vld [vmem:[%s233 + $0xec] sm:$0xf]
        %v345 = vld [vmem:[%s233 + $0xf0] sm:$0xf]
        %v346 = vld [vmem:[%s233 + $0xf4] sm:$0xf]
        %v347 = vld [vmem:[%s233 + $0xf8] sm:$0xf]
        %v348 = vld [vmem:[%s233 + $0xfc] sm:$0xf]
        %v365 = vunpack.c.l.b16 %v269
        %v366 = vunpack.c.l.b16 %v270
        %v367 = vunpack.c.l.b16 %v271
        %v368 = vunpack.c.l.b16 %v272
        %v369 = vunpack.c.l.b16 %v273
        %v370 = vunpack.c.l.b16 %v274
        %v371 = vunpack.c.l.b16 %v275
        %v372 = vunpack.c.l.b16 %v276
        %v373 = vunpack.c.l.b16 %v277
        %v374 = vunpack.c.l.b16 %v278
        %v375 = vunpack.c.l.b16 %v279
        %v376 = vunpack.c.l.b16 %v280
        %v377 = vunpack.c.l.b16 %v281
        %v378 = vunpack.c.l.b16 %v282
        %v379 = vunpack.c.l.b16 %v283
        %v380 = vunpack.c.l.b16 %v284
        %v381 = vpack.c.b16 %v366, %v365
        %v382 = vpack.c.b16 %v368, %v367
        %v383 = vpack.c.b16 %v370, %v369
        %v384 = vpack.c.b16 %v372, %v371
        %v385 = vpack.c.b16 %v374, %v373
        %v386 = vpack.c.b16 %v376, %v375
        %v387 = vpack.c.b16 %v378, %v377
        %v388 = vpack.c.b16 %v380, %v379
        %v461 = vunpack.c.l.b16 %v285
        %v462 = vunpack.c.l.b16 %v286
        %v463 = vunpack.c.l.b16 %v287
        %v464 = vunpack.c.l.b16 %v288
        %v465 = vunpack.c.l.b16 %v289
        %v466 = vunpack.c.l.b16 %v290
        %v467 = vunpack.c.l.b16 %v291
        %v468 = vunpack.c.l.b16 %v292
        %v469 = vunpack.c.l.b16 %v293
        %v470 = vunpack.c.l.b16 %v294
        %v471 = vunpack.c.l.b16 %v295
        %v472 = vunpack.c.l.b16 %v296
        %v473 = vunpack.c.l.b16 %v297
        %v474 = vunpack.c.l.b16 %v298
        %v475 = vunpack.c.l.b16 %v299
        %v476 = vunpack.c.l.b16 %v300
        %v477 = vunpack.c.l.b16 %v301
        %v478 = vunpack.c.l.b16 %v302
        %v479 = vunpack.c.l.b16 %v303
        %v480 = vunpack.c.l.b16 %v304
        %v481 = vunpack.c.l.b16 %v305
        %v482 = vunpack.c.l.b16 %v306
        %v483 = vunpack.c.l.b16 %v307
        %v484 = vunpack.c.l.b16 %v308
        %v485 = vunpack.c.l.b16 %v309
        %v486 = vunpack.c.l.b16 %v310
        %v487 = vunpack.c.l.b16 %v311
        %v488 = vunpack.c.l.b16 %v312
        %v489 = vunpack.c.l.b16 %v313
        %v490 = vunpack.c.l.b16 %v314
        %v491 = vunpack.c.l.b16 %v315
        %v492 = vunpack.c.l.b16 %v316
        %v493 = vunpack.c.l.b16 %v317
        %v494 = vunpack.c.l.b16 %v318
        %v495 = vunpack.c.l.b16 %v319
        %v496 = vunpack.c.l.b16 %v320
        %v497 = vunpack.c.l.b16 %v321
        %v498 = vunpack.c.l.b16 %v322
        %v499 = vunpack.c.l.b16 %v323
        %v500 = vunpack.c.l.b16 %v324
        %v501 = vunpack.c.l.b16 %v325
        %v502 = vunpack.c.l.b16 %v326
        %v503 = vunpack.c.l.b16 %v327
        %v504 = vunpack.c.l.b16 %v328
        %v505 = vunpack.c.l.b16 %v329
        %v506 = vunpack.c.l.b16 %v330
        %v507 = vunpack.c.l.b16 %v331
        %v508 = vunpack.c.l.b16 %v332
        %v509 = vunpack.c.l.b16 %v333
        %v510 = vunpack.c.l.b16 %v334
        %v511 = vunpack.c.l.b16 %v335
        %v512 = vunpack.c.l.b16 %v336
        %v513 = vunpack.c.l.b16 %v337
        %v514 = vunpack.c.l.b16 %v338
        %v515 = vunpack.c.l.b16 %v339
        %v516 = vunpack.c.l.b16 %v340
        %v517 = vunpack.c.l.b16 %v341
        %v518 = vunpack.c.l.b16 %v342
        %v519 = vunpack.c.l.b16 %v343
        %v520 = vunpack.c.l.b16 %v344
        %v521 = vunpack.c.l.b16 %v345
        %v522 = vunpack.c.l.b16 %v346
        %v523 = vunpack.c.l.b16 %v347
        %v524 = vunpack.c.l.b16 %v348
        %v525 = vpack.c.b16 %v462, %v461
        %v526 = vpack.c.b16 %v464, %v463
        %v527 = vpack.c.b16 %v466, %v465
        %v528 = vpack.c.b16 %v468, %v467
        %v529 = vpack.c.b16 %v470, %v469
        %v530 = vpack.c.b16 %v472, %v471
        %v531 = vpack.c.b16 %v474, %v473
        %v532 = vpack.c.b16 %v476, %v475
        %v533 = vpack.c.b16 %v478, %v477
        %v534 = vpack.c.b16 %v480, %v479
        %v535 = vpack.c.b16 %v482, %v481
        %v536 = vpack.c.b16 %v484, %v483
        %v537 = vpack.c.b16 %v486, %v485
        %v538 = vpack.c.b16 %v488, %v487
        %v539 = vpack.c.b16 %v490, %v489
        %v540 = vpack.c.b16 %v492, %v491
        %v541 = vpack.c.b16 %v494, %v493
        %v542 = vpack.c.b16 %v496, %v495
        %v543 = vpack.c.b16 %v498, %v497
        %v544 = vpack.c.b16 %v500, %v499
        %v545 = vpack.c.b16 %v502, %v501
        %v546 = vpack.c.b16 %v504, %v503
        %v547 = vpack.c.b16 %v506, %v505
        %v548 = vpack.c.b16 %v508, %v507
        %v549 = vpack.c.b16 %v510, %v509
        %v550 = vpack.c.b16 %v512, %v511
        %v551 = vpack.c.b16 %v514, %v513
        %v552 = vpack.c.b16 %v516, %v515
        %v553 = vpack.c.b16 %v518, %v517
        %v554 = vpack.c.b16 %v520, %v519
        %v555 = vpack.c.b16 %v522, %v521
        %v556 = vpack.c.b16 %v524, %v523
        %589 = vmatpush.bf16.xpose.msra.mxu0 %v532
        %590 = vmatpush.bf16.xpose.msra.mxu0 %v531
        %591 = vmatpush.bf16.xpose.msra.mxu0 %v530
        %592 = vmatpush.bf16.xpose.msra.mxu0 %v529
        %593 = vmatpush.bf16.xpose.msra.mxu0 %v528
        %594 = vmatpush.bf16.xpose.msra.mxu0 %v527
        %595 = vmatpush.bf16.xpose.msra.mxu0 %v526
        %596 = vmatpush.bf16.xpose.msra.mxu0 %v525
        %597 = vmatmul.bf16.gmra.mxu0 %v381
        %v598 = vpop.f32.mrf.mxu0
        %v599 = vadd.f32 0.0, %v598
        %v600 = vpop.f32.mrf.mxu0
        %v601 = vadd.f32 0.0, %v600
        %602 = vmatmul.bf16.gmra.mxu0 %v382
        %v603 = vpop.f32.mrf.mxu0
        %v604 = vadd.f32 0.0, %v603
        %v605 = vpop.f32.mrf.mxu0
        %v606 = vadd.f32 0.0, %v605
        %607 = vmatmul.bf16.gmra.mxu0 %v383
        %v608 = vpop.f32.mrf.mxu0
        %v609 = vadd.f32 0.0, %v608
        %v610 = vpop.f32.mrf.mxu0
        %v611 = vadd.f32 0.0, %v610
        %612 = vmatmul.bf16.gmra.mxu0 %v384
        %v613 = vpop.f32.mrf.mxu0
        %v614 = vadd.f32 0.0, %v613
        %v615 = vpop.f32.mrf.mxu0
        %v616 = vadd.f32 0.0, %v615
        %617 = vmatmul.bf16.gmra.mxu0 %v385
        %v618 = vpop.f32.mrf.mxu0
        %v619 = vadd.f32 0.0, %v618
        %v620 = vpop.f32.mrf.mxu0
        %v621 = vadd.f32 0.0, %v620
        %622 = vmatmul.bf16.gmra.mxu0 %v386
        %v623 = vpop.f32.mrf.mxu0
        %v624 = vadd.f32 0.0, %v623
        %v625 = vpop.f32.mrf.mxu0
        %v626 = vadd.f32 0.0, %v625
        %627 = vmatmul.bf16.gmra.mxu0 %v387
        %v628 = vpop.f32.mrf.mxu0
        %v629 = vadd.f32 0.0, %v628
        %v630 = vpop.f32.mrf.mxu0
        %v631 = vadd.f32 0.0, %v630
        %632 = vmatmul.bf16.gmra.mxu0 %v388
        %v633 = vpop.f32.mrf.mxu0
        %v634 = vadd.f32 0.0, %v633
        %v635 = vpop.f32.mrf.mxu0
        %v636 = vadd.f32 0.0, %v635
        %637 = vdwg.mxu0
        %638 = vmatpush.bf16.xpose.msra.mxu0 %v540
        %639 = vmatpush.bf16.xpose.msra.mxu0 %v539
        %640 = vmatpush.bf16.xpose.msra.mxu0 %v538
        %641 = vmatpush.bf16.xpose.msra.mxu0 %v537
        %642 = vmatpush.bf16.xpose.msra.mxu0 %v536
        %643 = vmatpush.bf16.xpose.msra.mxu0 %v535
        %644 = vmatpush.bf16.xpose.msra.mxu0 %v534
        %645 = vmatpush.bf16.xpose.msra.mxu0 %v533
        %646 = vmatmul.bf16.gmra.mxu0 %v381
        %v647 = vpop.f32.mrf.mxu0
        %v648 = vadd.f32 0.0, %v647
        %v649 = vpop.f32.mrf.mxu0
        %v650 = vadd.f32 0.0, %v649
        %651 = vmatmul.bf16.gmra.mxu0 %v382
        %v652 = vpop.f32.mrf.mxu0
        %v653 = vadd.f32 0.0, %v652
        %v654 = vpop.f32.mrf.mxu0
        %v655 = vadd.f32 0.0, %v654
        %656 = vmatmul.bf16.gmra.mxu0 %v383
        %v657 = vpop.f32.mrf.mxu0
        %v658 = vadd.f32 0.0, %v657
        %v659 = vpop.f32.mrf.mxu0
        %v660 = vadd.f32 0.0, %v659
        %661 = vmatmul.bf16.gmra.mxu0 %v384
        %v662 = vpop.f32.mrf.mxu0
        %v663 = vadd.f32 0.0, %v662
        %v664 = vpop.f32.mrf.mxu0
        %v665 = vadd.f32 0.0, %v664
        %666 = vmatmul.bf16.gmra.mxu0 %v385
        %v667 = vpop.f32.mrf.mxu0
        %v668 = vadd.f32 0.0, %v667
        %v669 = vpop.f32.mrf.mxu0
        %v670 = vadd.f32 0.0, %v669
        %671 = vmatmul.bf16.gmra.mxu0 %v386
        %v672 = vpop.f32.mrf.mxu0
        %v673 = vadd.f32 0.0, %v672
        %v674 = vpop.f32.mrf.mxu0
        %v675 = vadd.f32 0.0, %v674
        %676 = vmatmul.bf16.gmra.mxu0 %v387
        %v677 = vpop.f32.mrf.mxu0
        %v678 = vadd.f32 0.0, %v677
        %v679 = vpop.f32.mrf.mxu0
        %v680 = vadd.f32 0.0, %v679
        %681 = vmatmul.bf16.gmra.mxu0 %v388
        %v682 = vpop.f32.mrf.mxu0
        %v683 = vadd.f32 0.0, %v682
        %v684 = vpop.f32.mrf.mxu0
        %v685 = vadd.f32 0.0, %v684
        %686 = vdwg.mxu0
        %687 = vmatpush.bf16.xpose.msra.mxu0 %v548
        %688 = vmatpush.bf16.xpose.msra.mxu0 %v547
        %689 = vmatpush.bf16.xpose.msra.mxu0 %v546
        %690 = vmatpush.bf16.xpose.msra.mxu0 %v545
        %691 = vmatpush.bf16.xpose.msra.mxu0 %v544
        %692 = vmatpush.bf16.xpose.msra.mxu0 %v543
        %693 = vmatpush.bf16.xpose.msra.mxu0 %v542
        %694 = vmatpush.bf16.xpose.msra.mxu0 %v541
        %695 = vmatmul.bf16.gmra.mxu0 %v381
        %v696 = vpop.f32.mrf.mxu0
        %v697 = vadd.f32 0.0, %v696
        %v698 = vpop.f32.mrf.mxu0
        %v699 = vadd.f32 0.0, %v698
        %700 = vmatmul.bf16.gmra.mxu0 %v382
        %v701 = vpop.f32.mrf.mxu0
        %v702 = vadd.f32 0.0, %v701
        %v703 = vpop.f32.mrf.mxu0
        %v704 = vadd.f32 0.0, %v703
        %705 = vmatmul.bf16.gmra.mxu0 %v383
        %v706 = vpop.f32.mrf.mxu0
        %v707 = vadd.f32 0.0, %v706
        %v708 = vpop.f32.mrf.mxu0
        %v709 = vadd.f32 0.0, %v708
        %710 = vmatmul.bf16.gmra.mxu0 %v384
        %v711 = vpop.f32.mrf.mxu0
        %v712 = vadd.f32 0.0, %v711
        %v713 = vpop.f32.mrf.mxu0
        %v714 = vadd.f32 0.0, %v713
        %715 = vmatmul.bf16.gmra.mxu0 %v385
        %v716 = vpop.f32.mrf.mxu0
        %v717 = vadd.f32 0.0, %v716
        %v718 = vpop.f32.mrf.mxu0
        %v719 = vadd.f32 0.0, %v718
        %720 = vmatmul.bf16.gmra.mxu0 %v386
        %v721 = vpop.f32.mrf.mxu0
        %v722 = vadd.f32 0.0, %v721
        %v723 = vpop.f32.mrf.mxu0
        %v724 = vadd.f32 0.0, %v723
        %725 = vmatmul.bf16.gmra.mxu0 %v387
        %v726 = vpop.f32.mrf.mxu0
        %v727 = vadd.f32 0.0, %v726
        %v728 = vpop.f32.mrf.mxu0
        %v729 = vadd.f32 0.0, %v728
        %730 = vmatmul.bf16.gmra.mxu0 %v388
        %v731 = vpop.f32.mrf.mxu0
        %v732 = vadd.f32 0.0, %v731
        %v733 = vpop.f32.mrf.mxu0
        %v734 = vadd.f32 0.0, %v733
        %735 = vdwg.mxu0
        %736 = vmatpush.bf16.xpose.msra.mxu0 %v556
        %737 = vmatpush.bf16.xpose.msra.mxu0 %v555
        %738 = vmatpush.bf16.xpose.msra.mxu0 %v554
        %739 = vmatpush.bf16.xpose.msra.mxu0 %v553
        %740 = vmatpush.bf16.xpose.msra.mxu0 %v552
        %741 = vmatpush.bf16.xpose.msra.mxu0 %v551
        %742 = vmatpush.bf16.xpose.msra.mxu0 %v550
        %743 = vmatpush.bf16.xpose.msra.mxu0 %v549
        %744 = vmatmul.bf16.gmra.mxu0 %v381
        %v745 = vpop.f32.mrf.mxu0
        %v746 = vadd.f32 0.0, %v745
        %v747 = vpop.f32.mrf.mxu0
        %v748 = vadd.f32 0.0, %v747
        %749 = vmatmul.bf16.gmra.mxu0 %v382
        %v750 = vpop.f32.mrf.mxu0
        %v751 = vadd.f32 0.0, %v750
        %v752 = vpop.f32.mrf.mxu0
        %v753 = vadd.f32 0.0, %v752
        %754 = vmatmul.bf16.gmra.mxu0 %v383
        %v755 = vpop.f32.mrf.mxu0
        %v756 = vadd.f32 0.0, %v755
        %v757 = vpop.f32.mrf.mxu0
        %v758 = vadd.f32 0.0, %v757
        %759 = vmatmul.bf16.gmra.mxu0 %v384
        %v760 = vpop.f32.mrf.mxu0
        %v761 = vadd.f32 0.0, %v760
        %v762 = vpop.f32.mrf.mxu0
        %v763 = vadd.f32 0.0, %v762
        %764 = vmatmul.bf16.gmra.mxu0 %v385
        %v765 = vpop.f32.mrf.mxu0
        %v766 = vadd.f32 0.0, %v765
        %v767 = vpop.f32.mrf.mxu0
        %v768 = vadd.f32 0.0, %v767
        %769 = vmatmul.bf16.gmra.mxu0 %v386
        %v770 = vpop.f32.mrf.mxu0
        %v771 = vadd.f32 0.0, %v770
        %v772 = vpop.f32.mrf.mxu0
        %v773 = vadd.f32 0.0, %v772
        %774 = vmatmul.bf16.gmra.mxu0 %v387
        %v775 = vpop.f32.mrf.mxu0
        %v776 = vadd.f32 0.0, %v775
        %v777 = vpop.f32.mrf.mxu0
        %v778 = vadd.f32 0.0, %v777
        %779 = vmatmul.bf16.gmra.mxu0 %v388
        %v780 = vpop.f32.mrf.mxu0
        %v781 = vadd.f32 0.0, %v780
        %v782 = vpop.f32.mrf.mxu0
        %v783 = vadd.f32 0.0, %v782
        %784 = vdwg.mxu0
        %v785 = vmax.f32 %v599, %v648
        %v786 = vmax.f32 %v785, %v697
        %v787 = vmax.f32 %v786, %v746
        %788 = vmax.xlane.f32.xlu0 %v787
        %v789 = vpop.xlane.xlu0 %788
        %v790 = vmax.f32 %v601, %v650
        %v791 = vmax.f32 %v790, %v699
        %v792 = vmax.f32 %v791, %v748
        %793 = vmax.xlane.f32.xlu0 %v792
        %v794 = vpop.xlane.xlu0 %793
        %v795 = vmax.f32 %v604, %v653
        %v796 = vmax.f32 %v795, %v702
        %v797 = vmax.f32 %v796, %v751
        %798 = vmax.xlane.f32.xlu0 %v797
        %v799 = vpop.xlane.xlu0 %798
        %v800 = vmax.f32 %v606, %v655
        %v801 = vmax.f32 %v800, %v704
        %v802 = vmax.f32 %v801, %v753
        %803 = vmax.xlane.f32.xlu0 %v802
        %v804 = vpop.xlane.xlu0 %803
        %v805 = vmax.f32 %v609, %v658
        %v806 = vmax.f32 %v805, %v707
        %v807 = vmax.f32 %v806, %v756
        %808 = vmax.xlane.f32.xlu0 %v807
        %v809 = vpop.xlane.xlu0 %808
        %v810 = vmax.f32 %v611, %v660
        %v811 = vmax.f32 %v810, %v709
        %v812 = vmax.f32 %v811, %v758
        %813 = vmax.xlane.f32.xlu0 %v812
        %v814 = vpop.xlane.xlu0 %813
        %v815 = vmax.f32 %v614, %v663
        %v816 = vmax.f32 %v815, %v712
        %v817 = vmax.f32 %v816, %v761
        %818 = vmax.xlane.f32.xlu0 %v817
        %v819 = vpop.xlane.xlu0 %818
        %v820 = vmax.f32 %v616, %v665
        %v821 = vmax.f32 %v820, %v714
        %v822 = vmax.f32 %v821, %v763
        %823 = vmax.xlane.f32.xlu0 %v822
        %v824 = vpop.xlane.xlu0 %823
        %v825 = vmax.f32 %v619, %v668
        %v826 = vmax.f32 %v825, %v717
        %v827 = vmax.f32 %v826, %v766
        %828 = vmax.xlane.f32.xlu0 %v827
        %v829 = vpop.xlane.xlu0 %828
        %v830 = vmax.f32 %v621, %v670
        %v831 = vmax.f32 %v830, %v719
        %v832 = vmax.f32 %v831, %v768
        %833 = vmax.xlane.f32.xlu0 %v832
        %v834 = vpop.xlane.xlu0 %833
        %v835 = vmax.f32 %v624, %v673
        %v836 = vmax.f32 %v835, %v722
        %v837 = vmax.f32 %v836, %v771
        %838 = vmax.xlane.f32.xlu0 %v837
        %v839 = vpop.xlane.xlu0 %838
        %v840 = vmax.f32 %v626, %v675
        %v841 = vmax.f32 %v840, %v724
        %v842 = vmax.f32 %v841, %v773
        %843 = vmax.xlane.f32.xlu0 %v842
        %v844 = vpop.xlane.xlu0 %843
        %v845 = vmax.f32 %v629, %v678
        %v846 = vmax.f32 %v845, %v727
        %v847 = vmax.f32 %v846, %v776
        %848 = vmax.xlane.f32.xlu0 %v847
        %v849 = vpop.xlane.xlu0 %848
        %v850 = vmax.f32 %v631, %v680
        %v851 = vmax.f32 %v850, %v729
        %v852 = vmax.f32 %v851, %v778
        %853 = vmax.xlane.f32.xlu0 %v852
        %v854 = vpop.xlane.xlu0 %853
        %v855 = vmax.f32 %v634, %v683
        %v856 = vmax.f32 %v855, %v732
        %v857 = vmax.f32 %v856, %v781
        %858 = vmax.xlane.f32.xlu0 %v857
        %v859 = vpop.xlane.xlu0 %858
        %v860 = vmax.f32 %v636, %v685
        %v861 = vmax.f32 %v860, %v734
        %v862 = vmax.f32 %v861, %v783
        %863 = vmax.xlane.f32.xlu0 %v862
        %v864 = vpop.xlane.xlu0 %863
        %v865 = vsub.f32 %v599, %v789
        %v866 = vsub.f32 %v648, %v789
        %v867 = vsub.f32 %v697, %v789
        %v868 = vsub.f32 %v746, %v789
        %v869 = vsub.f32 %v601, %v794
        %v870 = vsub.f32 %v650, %v794
        %v871 = vsub.f32 %v699, %v794
        %v872 = vsub.f32 %v748, %v794
        %v873 = vsub.f32 %v604, %v799
        %v874 = vsub.f32 %v653, %v799
        %v875 = vsub.f32 %v702, %v799
        %v876 = vsub.f32 %v751, %v799
        %v877 = vsub.f32 %v606, %v804
        %v878 = vsub.f32 %v655, %v804
        %v879 = vsub.f32 %v704, %v804
        %v880 = vsub.f32 %v753, %v804
        %v881 = vsub.f32 %v609, %v809
        %v882 = vsub.f32 %v658, %v809
        %v883 = vsub.f32 %v707, %v809
        %v884 = vsub.f32 %v756, %v809
        %v885 = vsub.f32 %v611, %v814
        %v886 = vsub.f32 %v660, %v814
        %v887 = vsub.f32 %v709, %v814
        %v888 = vsub.f32 %v758, %v814
        %v889 = vsub.f32 %v614, %v819
        %v890 = vsub.f32 %v663, %v819
        %v891 = vsub.f32 %v712, %v819
        %v892 = vsub.f32 %v761, %v819
        %v893 = vsub.f32 %v616, %v824
        %v894 = vsub.f32 %v665, %v824
        %v895 = vsub.f32 %v714, %v824
        %v896 = vsub.f32 %v763, %v824
        %v897 = vsub.f32 %v619, %v829
        %v898 = vsub.f32 %v668, %v829
        %v899 = vsub.f32 %v717, %v829
        %v900 = vsub.f32 %v766, %v829
        %v901 = vsub.f32 %v621, %v834
        %v902 = vsub.f32 %v670, %v834
        %v903 = vsub.f32 %v719, %v834
        %v904 = vsub.f32 %v768, %v834
        %v905 = vsub.f32 %v624, %v839
        %v906 = vsub.f32 %v673, %v839
        %v907 = vsub.f32 %v722, %v839
        %v908 = vsub.f32 %v771, %v839
        %v909 = vsub.f32 %v626, %v844
        %v910 = vsub.f32 %v675, %v844
        %v911 = vsub.f32 %v724, %v844
        %v912 = vsub.f32 %v773, %v844
        %v913 = vsub.f32 %v629, %v849
        %v914 = vsub.f32 %v678, %v849
        %v915 = vsub.f32 %v727, %v849
        %v916 = vsub.f32 %v776, %v849
        %v917 = vsub.f32 %v631, %v854
        %v918 = vsub.f32 %v680, %v854
        %v919 = vsub.f32 %v729, %v854
        %v920 = vsub.f32 %v778, %v854
        %v921 = vsub.f32 %v634, %v859
        %v922 = vsub.f32 %v683, %v859
        %v923 = vsub.f32 %v732, %v859
        %v924 = vsub.f32 %v781, %v859
        %v925 = vsub.f32 %v636, %v864
        %v926 = vsub.f32 %v685, %v864
        %v927 = vsub.f32 %v734, %v864
        %v928 = vsub.f32 %v783, %v864
        %v929 = vmul.f32 %v865, 0.125
        %v930 = vmul.f32 %v866, 0.125
        %v931 = vmul.f32 %v867, 0.125
        %v932 = vmul.f32 %v868, 0.125
        %v933 = vmul.f32 %v869, 0.125
        %v934 = vmul.f32 %v870, 0.125
        %v935 = vmul.f32 %v871, 0.125
        %v936 = vmul.f32 %v872, 0.125
        %v937 = vmul.f32 %v873, 0.125
        %v938 = vmul.f32 %v874, 0.125
        %v939 = vmul.f32 %v875, 0.125
        %v940 = vmul.f32 %v876, 0.125
        %v941 = vmul.f32 %v877, 0.125
        %v942 = vmul.f32 %v878, 0.125
        %v943 = vmul.f32 %v879, 0.125
        %v944 = vmul.f32 %v880, 0.125
        %v945 = vmul.f32 %v881, 0.125
        %v946 = vmul.f32 %v882, 0.125
        %v947 = vmul.f32 %v883, 0.125
        %v948 = vmul.f32 %v884, 0.125
        %v949 = vmul.f32 %v885, 0.125
        %v950 = vmul.f32 %v886, 0.125
        %v951 = vmul.f32 %v887, 0.125
        %v952 = vmul.f32 %v888, 0.125
        %v953 = vmul.f32 %v889, 0.125
        %v954 = vmul.f32 %v890, 0.125
        %v955 = vmul.f32 %v891, 0.125
        %v956 = vmul.f32 %v892, 0.125
        %v957 = vmul.f32 %v893, 0.125
        %v958 = vmul.f32 %v894, 0.125
        %v959 = vmul.f32 %v895, 0.125
        %v960 = vmul.f32 %v896, 0.125
        %v961 = vmul.f32 %v897, 0.125
        %v962 = vmul.f32 %v898, 0.125
        %v963 = vmul.f32 %v899, 0.125
        %v964 = vmul.f32 %v900, 0.125
        %v965 = vmul.f32 %v901, 0.125
        %v966 = vmul.f32 %v902, 0.125
        %v967 = vmul.f32 %v903, 0.125
        %v968 = vmul.f32 %v904, 0.125
        %v969 = vmul.f32 %v905, 0.125
        %v970 = vmul.f32 %v906, 0.125
        %v971 = vmul.f32 %v907, 0.125
        %v972 = vmul.f32 %v908, 0.125
        %v973 = vmul.f32 %v909, 0.125
        %v974 = vmul.f32 %v910, 0.125
        %v975 = vmul.f32 %v911, 0.125
        %v976 = vmul.f32 %v912, 0.125
        %v977 = vmul.f32 %v913, 0.125
        %v978 = vmul.f32 %v914, 0.125
        %v979 = vmul.f32 %v915, 0.125
        %v980 = vmul.f32 %v916, 0.125
        %v981 = vmul.f32 %v917, 0.125
        %v982 = vmul.f32 %v918, 0.125
        %v983 = vmul.f32 %v919, 0.125
        %v984 = vmul.f32 %v920, 0.125
        %v985 = vmul.f32 %v921, 0.125
        %v986 = vmul.f32 %v922, 0.125
        %v987 = vmul.f32 %v923, 0.125
        %v988 = vmul.f32 %v924, 0.125
        %v989 = vmul.f32 %v925, 0.125
        %v990 = vmul.f32 %v926, 0.125
        %v991 = vmul.f32 %v927, 0.125
        %v992 = vmul.f32 %v928, 0.125
        %v993 = vmul.f32 %v929, 1.442695
        %v994 = vpow.pop %v993
        %v995 = vmul.f32 %v930, 1.442695
        %v996 = vpow.pop %v995
        %v997 = vmul.f32 %v931, 1.442695
        %v998 = vpow.pop %v997
        %v999 = vmul.f32 %v932, 1.442695
        %v1000 = vpow.pop %v999
        %v1001 = vmul.f32 %v933, 1.442695
        %v1002 = vpow.pop %v1001
        %v1003 = vmul.f32 %v934, 1.442695
        %v1004 = vpow.pop %v1003
        %v1005 = vmul.f32 %v935, 1.442695
        %v1006 = vpow.pop %v1005
        %v1007 = vmul.f32 %v936, 1.442695
        %v1008 = vpow.pop %v1007
        %v1009 = vmul.f32 %v937, 1.442695
        %v1010 = vpow.pop %v1009
        %v1011 = vmul.f32 %v938, 1.442695
        %v1012 = vpow.pop %v1011
        %v1013 = vmul.f32 %v939, 1.442695
        %v1014 = vpow.pop %v1013
        %v1015 = vmul.f32 %v940, 1.442695
        %v1016 = vpow.pop %v1015
        %v1017 = vmul.f32 %v941, 1.442695
        %v1018 = vpow.pop %v1017
        %v1019 = vmul.f32 %v942, 1.442695
        %v1020 = vpow.pop %v1019
        %v1021 = vmul.f32 %v943, 1.442695
        %v1022 = vpow.pop %v1021
        %v1023 = vmul.f32 %v944, 1.442695
        %v1024 = vpow.pop %v1023
        %v1025 = vmul.f32 %v945, 1.442695
        %v1026 = vpow.pop %v1025
        %v1027 = vmul.f32 %v946, 1.442695
        %v1028 = vpow.pop %v1027
        %v1029 = vmul.f32 %v947, 1.442695
        %v1030 = vpow.pop %v1029
        %v1031 = vmul.f32 %v948, 1.442695
        %v1032 = vpow.pop %v1031
        %v1033 = vmul.f32 %v949, 1.442695
        %v1034 = vpow.pop %v1033
        %v1035 = vmul.f32 %v950, 1.442695
        %v1036 = vpow.pop %v1035
        %v1037 = vmul.f32 %v951, 1.442695
        %v1038 = vpow.pop %v1037
        %v1039 = vmul.f32 %v952, 1.442695
        %v1040 = vpow.pop %v1039
        %v1041 = vmul.f32 %v953, 1.442695
        %v1042 = vpow.pop %v1041
        %v1043 = vmul.f32 %v954, 1.442695
        %v1044 = vpow.pop %v1043
        %v1045 = vmul.f32 %v955, 1.442695
        %v1046 = vpow.pop %v1045
        %v1047 = vmul.f32 %v956, 1.442695
        %v1048 = vpow.pop %v1047
        %v1049 = vmul.f32 %v957, 1.442695
        %v1050 = vpow.pop %v1049
        %v1051 = vmul.f32 %v958, 1.442695
        %v1052 = vpow.pop %v1051
        %v1053 = vmul.f32 %v959, 1.442695
        %v1054 = vpow.pop %v1053
        %v1055 = vmul.f32 %v960, 1.442695
        %v1056 = vpow.pop %v1055
        %v1057 = vmul.f32 %v961, 1.442695
        %v1058 = vpow.pop %v1057
        %v1059 = vmul.f32 %v962, 1.442695
        %v1060 = vpow.pop %v1059
        %v1061 = vmul.f32 %v963, 1.442695
        %v1062 = vpow.pop %v1061
        %v1063 = vmul.f32 %v964, 1.442695
        %v1064 = vpow.pop %v1063
        %v1065 = vmul.f32 %v965, 1.442695
        %v1066 = vpow.pop %v1065
        %v1067 = vmul.f32 %v966, 1.442695
        %v1068 = vpow.pop %v1067
        %v1069 = vmul.f32 %v967, 1.442695
        %v1070 = vpow.pop %v1069
        %v1071 = vmul.f32 %v968, 1.442695
        %v1072 = vpow.pop %v1071
        %v1073 = vmul.f32 %v969, 1.442695
        %v1074 = vpow.pop %v1073
        %v1075 = vmul.f32 %v970, 1.442695
        %v1076 = vpow.pop %v1075
        %v1077 = vmul.f32 %v971, 1.442695
        %v1078 = vpow.pop %v1077
        %v1079 = vmul.f32 %v972, 1.442695
        %v1080 = vpow.pop %v1079
        %v1081 = vmul.f32 %v973, 1.442695
        %v1082 = vpow.pop %v1081
        %v1083 = vmul.f32 %v974, 1.442695
        %v1084 = vpow.pop %v1083
        %v1085 = vmul.f32 %v975, 1.442695
        %v1086 = vpow.pop %v1085
        %v1087 = vmul.f32 %v976, 1.442695
        %v1088 = vpow.pop %v1087
        %v1089 = vmul.f32 %v977, 1.442695
        %v1090 = vpow.pop %v1089
        %v1091 = vmul.f32 %v978, 1.442695
        %v1092 = vpow.pop %v1091
        %v1093 = vmul.f32 %v979, 1.442695
        %v1094 = vpow.pop %v1093
        %v1095 = vmul.f32 %v980, 1.442695
        %v1096 = vpow.pop %v1095
        %v1097 = vmul.f32 %v981, 1.442695
        %v1098 = vpow.pop %v1097
        %v1099 = vmul.f32 %v982, 1.442695
        %v1100 = vpow.pop %v1099
        %v1101 = vmul.f32 %v983, 1.442695
        %v1102 = vpow.pop %v1101
        %v1103 = vmul.f32 %v984, 1.442695
        %v1104 = vpow.pop %v1103
        %v1105 = vmul.f32 %v985, 1.442695
        %v1106 = vpow.pop %v1105
        %v1107 = vmul.f32 %v986, 1.442695
        %v1108 = vpow.pop %v1107
        %v1109 = vmul.f32 %v987, 1.442695
        %v1110 = vpow.pop %v1109
        %v1111 = vmul.f32 %v988, 1.442695
        %v1112 = vpow.pop %v1111
        %v1113 = vmul.f32 %v989, 1.442695
        %v1114 = vpow.pop %v1113
        %v1115 = vmul.f32 %v990, 1.442695
        %v1116 = vpow.pop %v1115
        %v1117 = vmul.f32 %v991, 1.442695
        %v1118 = vpow.pop %v1117
        %v1119 = vmul.f32 %v992, 1.442695
        %v1120 = vpow.pop %v1119
        %v1121 = vadd.f32 %v994, %v996
        %v1122 = vadd.f32 %v1121, %v998
        %v1123 = vadd.f32 %v1122, %v1000
        %1124 = vadd.xlane.f32.xlu0 %v1123
        %v1125 = vpop.xlane.xlu0 %1124
        %v1126 = vadd.f32 %v1002, %v1004
        %v1127 = vadd.f32 %v1126, %v1006
        %v1128 = vadd.f32 %v1127, %v1008
        %1129 = vadd.xlane.f32.xlu0 %v1128
        %v1130 = vpop.xlane.xlu0 %1129
        %v1131 = vadd.f32 %v1010, %v1012
        %v1132 = vadd.f32 %v1131, %v1014
        %v1133 = vadd.f32 %v1132, %v1016
        %1134 = vadd.xlane.f32.xlu0 %v1133
        %v1135 = vpop.xlane.xlu0 %1134
        %v1136 = vadd.f32 %v1018, %v1020
        %v1137 = vadd.f32 %v1136, %v1022
        %v1138 = vadd.f32 %v1137, %v1024
        %1139 = vadd.xlane.f32.xlu0 %v1138
        %v1140 = vpop.xlane.xlu0 %1139
        %v1141 = vadd.f32 %v1026, %v1028
        %v1142 = vadd.f32 %v1141, %v1030
        %v1143 = vadd.f32 %v1142, %v1032
        %1144 = vadd.xlane.f32.xlu0 %v1143
        %v1145 = vpop.xlane.xlu0 %1144
        %v1146 = vadd.f32 %v1034, %v1036
        %v1147 = vadd.f32 %v1146, %v1038
        %v1148 = vadd.f32 %v1147, %v1040
        %1149 = vadd.xlane.f32.xlu0 %v1148
        %v1150 = vpop.xlane.xlu0 %1149
        %v1151 = vadd.f32 %v1042, %v1044
        %v1152 = vadd.f32 %v1151, %v1046
        %v1153 = vadd.f32 %v1152, %v1048
        %1154 = vadd.xlane.f32.xlu0 %v1153
        %v1155 = vpop.xlane.xlu0 %1154
        %v1156 = vadd.f32 %v1050, %v1052
        %v1157 = vadd.f32 %v1156, %v1054
        %v1158 = vadd.f32 %v1157, %v1056
        %1159 = vadd.xlane.f32.xlu0 %v1158
        %v1160 = vpop.xlane.xlu0 %1159
        %v1161 = vadd.f32 %v1058, %v1060
        %v1162 = vadd.f32 %v1161, %v1062
        %v1163 = vadd.f32 %v1162, %v1064
        %1164 = vadd.xlane.f32.xlu0 %v1163
        %v1165 = vpop.xlane.xlu0 %1164
        %v1166 = vadd.f32 %v1066, %v1068
        %v1167 = vadd.f32 %v1166, %v1070
        %v1168 = vadd.f32 %v1167, %v1072
        %1169 = vadd.xlane.f32.xlu0 %v1168
        %v1170 = vpop.xlane.xlu0 %1169
        %v1171 = vadd.f32 %v1074, %v1076
        %v1172 = vadd.f32 %v1171, %v1078
        %v1173 = vadd.f32 %v1172, %v1080
        %1174 = vadd.xlane.f32.xlu0 %v1173
        %v1175 = vpop.xlane.xlu0 %1174
        %v1176 = vadd.f32 %v1082, %v1084
        %v1177 = vadd.f32 %v1176, %v1086
        %v1178 = vadd.f32 %v1177, %v1088
        %1179 = vadd.xlane.f32.xlu0 %v1178
        %v1180 = vpop.xlane.xlu0 %1179
        %v1181 = vadd.f32 %v1090, %v1092
        %v1182 = vadd.f32 %v1181, %v1094
        %v1183 = vadd.f32 %v1182, %v1096
        %1184 = vadd.xlane.f32.xlu0 %v1183
        %v1185 = vpop.xlane.xlu0 %1184
        %v1186 = vadd.f32 %v1098, %v1100
        %v1187 = vadd.f32 %v1186, %v1102
        %v1188 = vadd.f32 %v1187, %v1104
        %1189 = vadd.xlane.f32.xlu0 %v1188
        %v1190 = vpop.xlane.xlu0 %1189
        %v1191 = vadd.f32 %v1106, %v1108
        %v1192 = vadd.f32 %v1191, %v1110
        %v1193 = vadd.f32 %v1192, %v1112
        %1194 = vadd.xlane.f32.xlu0 %v1193
        %v1195 = vpop.xlane.xlu0 %1194
        %v1196 = vadd.f32 %v1114, %v1116
        %v1197 = vadd.f32 %v1196, %v1118
        %v1198 = vadd.f32 %v1197, %v1120
        %1199 = vadd.xlane.f32.xlu0 %v1198
        %v1200 = vpop.xlane.xlu0 %1199
        %v1201 = vrcp.pop %v1125
        %v1202 = vrcp.pop %v1130
        %v1203 = vrcp.pop %v1135
        %v1204 = vrcp.pop %v1140
        %v1205 = vrcp.pop %v1145
        %v1206 = vrcp.pop %v1150
        %v1207 = vrcp.pop %v1155
        %v1208 = vrcp.pop %v1160
        %v1209 = vrcp.pop %v1165
        %v1210 = vrcp.pop %v1170
        %v1211 = vrcp.pop %v1175
        %v1212 = vrcp.pop %v1180
        %v1213 = vrcp.pop %v1185
        %v1214 = vrcp.pop %v1190
        %v1215 = vrcp.pop %v1195
        %v1216 = vrcp.pop %v1200
        %v1217 = vpack.c.bf16 %v1002, %v994
        %v1218 = vpack.c.bf16 %v1004, %v996
        %v1219 = vpack.c.bf16 %v1006, %v998
        %v1220 = vpack.c.bf16 %v1008, %v1000
        %v1221 = vpack.c.bf16 %v1018, %v1010
        %v1222 = vpack.c.bf16 %v1020, %v1012
        %v1223 = vpack.c.bf16 %v1022, %v1014
        %v1224 = vpack.c.bf16 %v1024, %v1016
        %v1225 = vpack.c.bf16 %v1034, %v1026
        %v1226 = vpack.c.bf16 %v1036, %v1028
        %v1227 = vpack.c.bf16 %v1038, %v1030
        %v1228 = vpack.c.bf16 %v1040, %v1032
        %v1229 = vpack.c.bf16 %v1050, %v1042
        %v1230 = vpack.c.bf16 %v1052, %v1044
        %v1231 = vpack.c.bf16 %v1054, %v1046
        %v1232 = vpack.c.bf16 %v1056, %v1048
        %v1233 = vpack.c.bf16 %v1066, %v1058
        %v1234 = vpack.c.bf16 %v1068, %v1060
        %v1235 = vpack.c.bf16 %v1070, %v1062
        %v1236 = vpack.c.bf16 %v1072, %v1064
        %v1237 = vpack.c.bf16 %v1082, %v1074
        %v1238 = vpack.c.bf16 %v1084, %v1076
        %v1239 = vpack.c.bf16 %v1086, %v1078
        %v1240 = vpack.c.bf16 %v1088, %v1080
        %v1241 = vpack.c.bf16 %v1098, %v1090
        %v1242 = vpack.c.bf16 %v1100, %v1092
        %v1243 = vpack.c.bf16 %v1102, %v1094
        %v1244 = vpack.c.bf16 %v1104, %v1096
        %v1245 = vpack.c.bf16 %v1114, %v1106
        %v1246 = vpack.c.bf16 %v1116, %v1108
        %v1247 = vpack.c.bf16 %v1118, %v1110
        %v1248 = vpack.c.bf16 %v1120, %v1112
        %v1249 = vld [vmem:[#allocation7] sm:$0xff]
        %v1250 = vld [vmem:[#allocation7 + $0x8] sm:$0xff]
        %v1251 = vld [vmem:[#allocation7 + $0x10] sm:$0xff]
        %v1252 = vld [vmem:[#allocation7 + $0x18] sm:$0xff]
        %v1253 = vld [vmem:[#allocation7 + $0x20] sm:$0xff]
        %v1254 = vld [vmem:[#allocation7 + $0x28] sm:$0xff]
        %v1255 = vld [vmem:[#allocation7 + $0x30] sm:$0xff]
        %v1256 = vld [vmem:[#allocation7 + $0x38] sm:$0xff]
        %v1257 = vld [vmem:[#allocation7 + $0x40] sm:$0xff]
        %v1258 = vld [vmem:[#allocation7 + $0x48] sm:$0xff]
        %v1259 = vld [vmem:[#allocation7 + $0x50] sm:$0xff]
        %v1260 = vld [vmem:[#allocation7 + $0x58] sm:$0xff]
        %v1261 = vld [vmem:[#allocation7 + $0x60] sm:$0xff]
        %v1262 = vld [vmem:[#allocation7 + $0x68] sm:$0xff]
        %v1263 = vld [vmem:[#allocation7 + $0x70] sm:$0xff]
        %v1264 = vld [vmem:[#allocation7 + $0x78] sm:$0xff]
        %v1265 = vld [vmem:[#allocation7 + $0x80] sm:$0xff]
        %v1266 = vld [vmem:[#allocation7 + $0x88] sm:$0xff]
        %v1267 = vld [vmem:[#allocation7 + $0x90] sm:$0xff]
        %v1268 = vld [vmem:[#allocation7 + $0x98] sm:$0xff]
        %v1269 = vld [vmem:[#allocation7 + $0xa0] sm:$0xff]
        %v1270 = vld [vmem:[#allocation7 + $0xa8] sm:$0xff]
        %v1271 = vld [vmem:[#allocation7 + $0xb0] sm:$0xff]
        %v1272 = vld [vmem:[#allocation7 + $0xb8] sm:$0xff]
        %v1273 = vld [vmem:[#allocation7 + $0xc0] sm:$0xff]
        %v1274 = vld [vmem:[#allocation7 + $0xc8] sm:$0xff]
        %v1275 = vld [vmem:[#allocation7 + $0xd0] sm:$0xff]
        %v1276 = vld [vmem:[#allocation7 + $0xd8] sm:$0xff]
        %v1277 = vld [vmem:[#allocation7 + $0xe0] sm:$0xff]
        %v1278 = vld [vmem:[#allocation7 + $0xe8] sm:$0xff]
        %v1279 = vld [vmem:[#allocation7 + $0xf0] sm:$0xff]
        %v1280 = vld [vmem:[#allocation7 + $0xf8] sm:$0xff]
        %v1281 = vld [vmem:[#allocation7 + $0x100] sm:$0xff]
        %v1282 = vld [vmem:[#allocation7 + $0x108] sm:$0xff]
        %v1283 = vld [vmem:[#allocation7 + $0x110] sm:$0xff]
        %v1284 = vld [vmem:[#allocation7 + $0x118] sm:$0xff]
        %v1285 = vld [vmem:[#allocation7 + $0x120] sm:$0xff]
        %v1286 = vld [vmem:[#allocation7 + $0x128] sm:$0xff]
        %v1287 = vld [vmem:[#allocation7 + $0x130] sm:$0xff]
        %v1288 = vld [vmem:[#allocation7 + $0x138] sm:$0xff]
        %v1289 = vld [vmem:[#allocation7 + $0x140] sm:$0xff]
        %v1290 = vld [vmem:[#allocation7 + $0x148] sm:$0xff]
        %v1291 = vld [vmem:[#allocation7 + $0x150] sm:$0xff]
        %v1292 = vld [vmem:[#allocation7 + $0x158] sm:$0xff]
        %v1293 = vld [vmem:[#allocation7 + $0x160] sm:$0xff]
        %v1294 = vld [vmem:[#allocation7 + $0x168] sm:$0xff]
        %v1295 = vld [vmem:[#allocation7 + $0x170] sm:$0xff]
        %v1296 = vld [vmem:[#allocation7 + $0x178] sm:$0xff]
        %v1297 = vld [vmem:[#allocation7 + $0x180] sm:$0xff]
        %v1298 = vld [vmem:[#allocation7 + $0x188] sm:$0xff]
        %v1299 = vld [vmem:[#allocation7 + $0x190] sm:$0xff]
        %v1300 = vld [vmem:[#allocation7 + $0x198] sm:$0xff]
        %v1301 = vld [vmem:[#allocation7 + $0x1a0] sm:$0xff]
        %v1302 = vld [vmem:[#allocation7 + $0x1a8] sm:$0xff]
        %v1303 = vld [vmem:[#allocation7 + $0x1b0] sm:$0xff]
        %v1304 = vld [vmem:[#allocation7 + $0x1b8] sm:$0xff]
        %v1305 = vld [vmem:[#allocation7 + $0x1c0] sm:$0xff]
        %v1306 = vld [vmem:[#allocation7 + $0x1c8] sm:$0xff]
        %v1307 = vld [vmem:[#allocation7 + $0x1d0] sm:$0xff]
        %v1308 = vld [vmem:[#allocation7 + $0x1d8] sm:$0xff]
        %v1309 = vld [vmem:[#allocation7 + $0x1e0] sm:$0xff]
        %v1310 = vld [vmem:[#allocation7 + $0x1e8] sm:$0xff]
        %v1311 = vld [vmem:[#allocation7 + $0x1f0] sm:$0xff]
        %v1312 = vld [vmem:[#allocation7 + $0x1f8] sm:$0xff]
        %v1377 = vunpack.c.l.b16 %v1249
        %v1378 = vunpack.c.h.b16 %v1249
        %v1379 = vunpack.c.l.b16 %v1250
        %v1380 = vunpack.c.h.b16 %v1250
        %v1381 = vunpack.c.l.b16 %v1251
        %v1382 = vunpack.c.h.b16 %v1251
        %v1383 = vunpack.c.l.b16 %v1252
        %v1384 = vunpack.c.h.b16 %v1252
        %v1385 = vunpack.c.l.b16 %v1253
        %v1386 = vunpack.c.h.b16 %v1253
        %v1387 = vunpack.c.l.b16 %v1254
        %v1388 = vunpack.c.h.b16 %v1254
        %v1389 = vunpack.c.l.b16 %v1255
        %v1390 = vunpack.c.h.b16 %v1255
        %v1391 = vunpack.c.l.b16 %v1256
        %v1392 = vunpack.c.h.b16 %v1256
        %v1393 = vunpack.c.l.b16 %v1257
        %v1394 = vunpack.c.h.b16 %v1257
        %v1395 = vunpack.c.l.b16 %v1258
        %v1396 = vunpack.c.h.b16 %v1258
        %v1397 = vunpack.c.l.b16 %v1259
        %v1398 = vunpack.c.h.b16 %v1259
        %v1399 = vunpack.c.l.b16 %v1260
        %v1400 = vunpack.c.h.b16 %v1260
        %v1401 = vunpack.c.l.b16 %v1261
        %v1402 = vunpack.c.h.b16 %v1261
        %v1403 = vunpack.c.l.b16 %v1262
        %v1404 = vunpack.c.h.b16 %v1262
        %v1405 = vunpack.c.l.b16 %v1263
        %v1406 = vunpack.c.h.b16 %v1263
        %v1407 = vunpack.c.l.b16 %v1264
        %v1408 = vunpack.c.h.b16 %v1264
        %v1409 = vunpack.c.l.b16 %v1265
        %v1410 = vunpack.c.h.b16 %v1265
        %v1411 = vunpack.c.l.b16 %v1266
        %v1412 = vunpack.c.h.b16 %v1266
        %v1413 = vunpack.c.l.b16 %v1267
        %v1414 = vunpack.c.h.b16 %v1267
        %v1415 = vunpack.c.l.b16 %v1268
        %v1416 = vunpack.c.h.b16 %v1268
        %v1417 = vunpack.c.l.b16 %v1269
        %v1418 = vunpack.c.h.b16 %v1269
        %v1419 = vunpack.c.l.b16 %v1270
        %v1420 = vunpack.c.h.b16 %v1270
        %v1421 = vunpack.c.l.b16 %v1271
        %v1422 = vunpack.c.h.b16 %v1271
        %v1423 = vunpack.c.l.b16 %v1272
        %v1424 = vunpack.c.h.b16 %v1272
        %v1425 = vunpack.c.l.b16 %v1273
        %v1426 = vunpack.c.h.b16 %v1273
        %v1427 = vunpack.c.l.b16 %v1274
        %v1428 = vunpack.c.h.b16 %v1274
        %v1429 = vunpack.c.l.b16 %v1275
        %v1430 = vunpack.c.h.b16 %v1275
        %v1431 = vunpack.c.l.b16 %v1276
        %v1432 = vunpack.c.h.b16 %v1276
        %v1433 = vunpack.c.l.b16 %v1277
        %v1434 = vunpack.c.h.b16 %v1277
        %v1435 = vunpack.c.l.b16 %v1278
        %v1436 = vunpack.c.h.b16 %v1278
        %v1437 = vunpack.c.l.b16 %v1279
        %v1438 = vunpack.c.h.b16 %v1279
        %v1439 = vunpack.c.l.b16 %v1280
        %v1440 = vunpack.c.h.b16 %v1280
        %v1441 = vunpack.c.l.b16 %v1281
        %v1442 = vunpack.c.h.b16 %v1281
        %v1443 = vunpack.c.l.b16 %v1282
        %v1444 = vunpack.c.h.b16 %v1282
        %v1445 = vunpack.c.l.b16 %v1283
        %v1446 = vunpack.c.h.b16 %v1283
        %v1447 = vunpack.c.l.b16 %v1284
        %v1448 = vunpack.c.h.b16 %v1284
        %v1449 = vunpack.c.l.b16 %v1285
        %v1450 = vunpack.c.h.b16 %v1285
        %v1451 = vunpack.c.l.b16 %v1286
        %v1452 = vunpack.c.h.b16 %v1286
        %v1453 = vunpack.c.l.b16 %v1287
        %v1454 = vunpack.c.h.b16 %v1287
        %v1455 = vunpack.c.l.b16 %v1288
        %v1456 = vunpack.c.h.b16 %v1288
        %v1457 = vunpack.c.l.b16 %v1289
        %v1458 = vunpack.c.h.b16 %v1289
        %v1459 = vunpack.c.l.b16 %v1290
        %v1460 = vunpack.c.h.b16 %v1290
        %v1461 = vunpack.c.l.b16 %v1291
        %v1462 = vunpack.c.h.b16 %v1291
        %v1463 = vunpack.c.l.b16 %v1292
        %v1464 = vunpack.c.h.b16 %v1292
        %v1465 = vunpack.c.l.b16 %v1293
        %v1466 = vunpack.c.h.b16 %v1293
        %v1467 = vunpack.c.l.b16 %v1294
        %v1468 = vunpack.c.h.b16 %v1294
        %v1469 = vunpack.c.l.b16 %v1295
        %v1470 = vunpack.c.h.b16 %v1295
        %v1471 = vunpack.c.l.b16 %v1296
        %v1472 = vunpack.c.h.b16 %v1296
        %v1473 = vunpack.c.l.b16 %v1297
        %v1474 = vunpack.c.h.b16 %v1297
        %v1475 = vunpack.c.l.b16 %v1298
        %v1476 = vunpack.c.h.b16 %v1298
        %v1477 = vunpack.c.l.b16 %v1299
        %v1478 = vunpack.c.h.b16 %v1299
        %v1479 = vunpack.c.l.b16 %v1300
        %v1480 = vunpack.c.h.b16 %v1300
        %v1481 = vunpack.c.l.b16 %v1301
        %v1482 = vunpack.c.h.b16 %v1301
        %v1483 = vunpack.c.l.b16 %v1302
        %v1484 = vunpack.c.h.b16 %v1302
        %v1485 = vunpack.c.l.b16 %v1303
        %v1486 = vunpack.c.h.b16 %v1303
        %v1487 = vunpack.c.l.b16 %v1304
        %v1488 = vunpack.c.h.b16 %v1304
        %v1489 = vunpack.c.l.b16 %v1305
        %v1490 = vunpack.c.h.b16 %v1305
        %v1491 = vunpack.c.l.b16 %v1306
        %v1492 = vunpack.c.h.b16 %v1306
        %v1493 = vunpack.c.l.b16 %v1307
        %v1494 = vunpack.c.h.b16 %v1307
        %v1495 = vunpack.c.l.b16 %v1308
        %v1496 = vunpack.c.h.b16 %v1308
        %v1497 = vunpack.c.l.b16 %v1309
        %v1498 = vunpack.c.h.b16 %v1309
        %v1499 = vunpack.c.l.b16 %v1310
        %v1500 = vunpack.c.h.b16 %v1310
        %v1501 = vunpack.c.l.b16 %v1311
        %v1502 = vunpack.c.h.b16 %v1311
        %v1503 = vunpack.c.l.b16 %v1312
        %v1504 = vunpack.c.h.b16 %v1312
        %v1505 = vpack.c.b16 %v1379, %v1377
        %v1506 = vpack.c.b16 %v1380, %v1378
        %v1507 = vpack.c.b16 %v1383, %v1381
        %v1508 = vpack.c.b16 %v1384, %v1382
        %v1509 = vpack.c.b16 %v1387, %v1385
        %v1510 = vpack.c.b16 %v1388, %v1386
        %v1511 = vpack.c.b16 %v1391, %v1389
        %v1512 = vpack.c.b16 %v1392, %v1390
        %v1513 = vpack.c.b16 %v1395, %v1393
        %v1514 = vpack.c.b16 %v1396, %v1394
        %v1515 = vpack.c.b16 %v1399, %v1397
        %v1516 = vpack.c.b16 %v1400, %v1398
        %v1517 = vpack.c.b16 %v1403, %v1401
        %v1518 = vpack.c.b16 %v1404, %v1402
        %v1519 = vpack.c.b16 %v1407, %v1405
        %v1520 = vpack.c.b16 %v1408, %v1406
        %v1521 = vpack.c.b16 %v1411, %v1409
        %v1522 = vpack.c.b16 %v1412, %v1410
        %v1523 = vpack.c.b16 %v1415, %v1413
        %v1524 = vpack.c.b16 %v1416, %v1414
        %v1525 = vpack.c.b16 %v1419, %v1417
        %v1526 = vpack.c.b16 %v1420, %v1418
        %v1527 = vpack.c.b16 %v1423, %v1421
        %v1528 = vpack.c.b16 %v1424, %v1422
        %v1529 = vpack.c.b16 %v1427, %v1425
        %v1530 = vpack.c.b16 %v1428, %v1426
        %v1531 = vpack.c.b16 %v1431, %v1429
        %v1532 = vpack.c.b16 %v1432, %v1430
        %v1533 = vpack.c.b16 %v1435, %v1433
        %v1534 = vpack.c.b16 %v1436, %v1434
        %v1535 = vpack.c.b16 %v1439, %v1437
        %v1536 = vpack.c.b16 %v1440, %v1438
        %v1537 = vpack.c.b16 %v1443, %v1441
        %v1538 = vpack.c.b16 %v1444, %v1442
        %v1539 = vpack.c.b16 %v1447, %v1445
        %v1540 = vpack.c.b16 %v1448, %v1446
        %v1541 = vpack.c.b16 %v1451, %v1449
        %v1542 = vpack.c.b16 %v1452, %v1450
        %v1543 = vpack.c.b16 %v1455, %v1453
        %v1544 = vpack.c.b16 %v1456, %v1454
        %v1545 = vpack.c.b16 %v1459, %v1457
        %v1546 = vpack.c.b16 %v1460, %v1458
        %v1547 = vpack.c.b16 %v1463, %v1461
        %v1548 = vpack.c.b16 %v1464, %v1462
        %v1549 = vpack.c.b16 %v1467, %v1465
        %v1550 = vpack.c.b16 %v1468, %v1466
        %v1551 = vpack.c.b16 %v1471, %v1469
        %v1552 = vpack.c.b16 %v1472, %v1470
        %v1553 = vpack.c.b16 %v1475, %v1473
        %v1554 = vpack.c.b16 %v1476, %v1474
        %v1555 = vpack.c.b16 %v1479, %v1477
        %v1556 = vpack.c.b16 %v1480, %v1478
        %v1557 = vpack.c.b16 %v1483, %v1481
        %v1558 = vpack.c.b16 %v1484, %v1482
        %v1559 = vpack.c.b16 %v1487, %v1485
        %v1560 = vpack.c.b16 %v1488, %v1486
        %v1561 = vpack.c.b16 %v1491, %v1489
        %v1562 = vpack.c.b16 %v1492, %v1490
        %v1563 = vpack.c.b16 %v1495, %v1493
        %v1564 = vpack.c.b16 %v1496, %v1494
        %v1565 = vpack.c.b16 %v1499, %v1497
        %v1566 = vpack.c.b16 %v1500, %v1498
        %v1567 = vpack.c.b16 %v1503, %v1501
        %v1568 = vpack.c.b16 %v1504, %v1502
        %1633 = vmatpush.bf16.msra.mxu0 %v1519
        %1634 = vmatpush.bf16.msra.mxu0 %v1517
        %1635 = vmatpush.bf16.msra.mxu0 %v1515
        %1636 = vmatpush.bf16.msra.mxu0 %v1513
        %1637 = vmatpush.bf16.msra.mxu0 %v1511
        %1638 = vmatpush.bf16.msra.mxu0 %v1509
        %1639 = vmatpush.bf16.msra.mxu0 %v1507
        %1640 = vmatpush.bf16.msra.mxu0 %v1505
        %1641 = vmatmul.bf16.gmra.mxu0 %v1217
        %v1642 = vpop.f32.mrf.mxu0
        %v1643 = vadd.f32 0.0, %v1642
        %v1644 = vpop.f32.mrf.mxu0
        %v1645 = vadd.f32 0.0, %v1644
        %1646 = vmatmul.bf16.gmra.mxu0 %v1221
        %v1647 = vpop.f32.mrf.mxu0
        %v1648 = vadd.f32 0.0, %v1647
        %v1649 = vpop.f32.mrf.mxu0
        %v1650 = vadd.f32 0.0, %v1649
        %1651 = vmatmul.bf16.gmra.mxu0 %v1225
        %v1652 = vpop.f32.mrf.mxu0
        %v1653 = vadd.f32 0.0, %v1652
        %v1654 = vpop.f32.mrf.mxu0
        %v1655 = vadd.f32 0.0, %v1654
        %1656 = vmatmul.bf16.gmra.mxu0 %v1229
        %v1657 = vpop.f32.mrf.mxu0
        %v1658 = vadd.f32 0.0, %v1657
        %v1659 = vpop.f32.mrf.mxu0
        %v1660 = vadd.f32 0.0, %v1659
        %1661 = vmatmul.bf16.gmra.mxu0 %v1233
        %v1662 = vpop.f32.mrf.mxu0
        %v1663 = vadd.f32 0.0, %v1662
        %v1664 = vpop.f32.mrf.mxu0
        %v1665 = vadd.f32 0.0, %v1664
        %1666 = vmatmul.bf16.gmra.mxu0 %v1237
        %v1667 = vpop.f32.mrf.mxu0
        %v1668 = vadd.f32 0.0, %v1667
        %v1669 = vpop.f32.mrf.mxu0
        %v1670 = vadd.f32 0.0, %v1669
        %1671 = vmatmul.bf16.gmra.mxu0 %v1241
        %v1672 = vpop.f32.mrf.mxu0
        %v1673 = vadd.f32 0.0, %v1672
        %v1674 = vpop.f32.mrf.mxu0
        %v1675 = vadd.f32 0.0, %v1674
        %1676 = vmatmul.bf16.gmra.mxu0 %v1245
        %v1677 = vpop.f32.mrf.mxu0
        %v1678 = vadd.f32 0.0, %v1677
        %v1679 = vpop.f32.mrf.mxu0
        %v1680 = vadd.f32 0.0, %v1679
        %1681 = vdwg.mxu0
        %1682 = vmatpush.bf16.msra.mxu0 %v1535
        %1683 = vmatpush.bf16.msra.mxu0 %v1533
        %1684 = vmatpush.bf16.msra.mxu0 %v1531
        %1685 = vmatpush.bf16.msra.mxu0 %v1529
        %1686 = vmatpush.bf16.msra.mxu0 %v1527
        %1687 = vmatpush.bf16.msra.mxu0 %v1525
        %1688 = vmatpush.bf16.msra.mxu0 %v1523
        %1689 = vmatpush.bf16.msra.mxu0 %v1521
        %1690 = vmatmul.bf16.gmra.mxu0 %v1218
        %v1691 = vpop.f32.mrf.mxu0
        %v1692 = vadd.f32 %v1643, %v1691
        %v1693 = vpop.f32.mrf.mxu0
        %v1694 = vadd.f32 %v1645, %v1693
        %1695 = vmatmul.bf16.gmra.mxu0 %v1222
        %v1696 = vpop.f32.mrf.mxu0
        %v1697 = vadd.f32 %v1648, %v1696
        %v1698 = vpop.f32.mrf.mxu0
        %v1699 = vadd.f32 %v1650, %v1698
        %1700 = vmatmul.bf16.gmra.mxu0 %v1226
        %v1701 = vpop.f32.mrf.mxu0
        %v1702 = vadd.f32 %v1653, %v1701
        %v1703 = vpop.f32.mrf.mxu0
        %v1704 = vadd.f32 %v1655, %v1703
        %1705 = vmatmul.bf16.gmra.mxu0 %v1230
        %v1706 = vpop.f32.mrf.mxu0
        %v1707 = vadd.f32 %v1658, %v1706
        %v1708 = vpop.f32.mrf.mxu0
        %v1709 = vadd.f32 %v1660, %v1708
        %1710 = vmatmul.bf16.gmra.mxu0 %v1234
        %v1711 = vpop.f32.mrf.mxu0
        %v1712 = vadd.f32 %v1663, %v1711
        %v1713 = vpop.f32.mrf.mxu0
        %v1714 = vadd.f32 %v1665, %v1713
        %1715 = vmatmul.bf16.gmra.mxu0 %v1238
        %v1716 = vpop.f32.mrf.mxu0
        %v1717 = vadd.f32 %v1668, %v1716
        %v1718 = vpop.f32.mrf.mxu0
        %v1719 = vadd.f32 %v1670, %v1718
        %1720 = vmatmul.bf16.gmra.mxu0 %v1242
        %v1721 = vpop.f32.mrf.mxu0
        %v1722 = vadd.f32 %v1673, %v1721
        %v1723 = vpop.f32.mrf.mxu0
        %v1724 = vadd.f32 %v1675, %v1723
        %1725 = vmatmul.bf16.gmra.mxu0 %v1246
        %v1726 = vpop.f32.mrf.mxu0
        %v1727 = vadd.f32 %v1678, %v1726
        %v1728 = vpop.f32.mrf.mxu0
        %v1729 = vadd.f32 %v1680, %v1728
        %1730 = vdwg.mxu0
        %1731 = vmatpush.bf16.msra.mxu0 %v1551
        %1732 = vmatpush.bf16.msra.mxu0 %v1549
        %1733 = vmatpush.bf16.msra.mxu0 %v1547
        %1734 = vmatpush.bf16.msra.mxu0 %v1545
        %1735 = vmatpush.bf16.msra.mxu0 %v1543
        %1736 = vmatpush.bf16.msra.mxu0 %v1541
        %1737 = vmatpush.bf16.msra.mxu0 %v1539
        %1738 = vmatpush.bf16.msra.mxu0 %v1537
        %1739 = vmatmul.bf16.gmra.mxu0 %v1219
        %v1740 = vpop.f32.mrf.mxu0
        %v1741 = vadd.f32 %v1692, %v1740
        %v1742 = vpop.f32.mrf.mxu0
        %v1743 = vadd.f32 %v1694, %v1742
        %1744 = vmatmul.bf16.gmra.mxu0 %v1223
        %v1745 = vpop.f32.mrf.mxu0
        %v1746 = vadd.f32 %v1697, %v1745
        %v1747 = vpop.f32.mrf.mxu0
        %v1748 = vadd.f32 %v1699, %v1747
        %1749 = vmatmul.bf16.gmra.mxu0 %v1227
        %v1750 = vpop.f32.mrf.mxu0
        %v1751 = vadd.f32 %v1702, %v1750
        %v1752 = vpop.f32.mrf.mxu0
        %v1753 = vadd.f32 %v1704, %v1752
        %1754 = vmatmul.bf16.gmra.mxu0 %v1231
        %v1755 = vpop.f32.mrf.mxu0
        %v1756 = vadd.f32 %v1707, %v1755
        %v1757 = vpop.f32.mrf.mxu0
        %v1758 = vadd.f32 %v1709, %v1757
        %1759 = vmatmul.bf16.gmra.mxu0 %v1235
        %v1760 = vpop.f32.mrf.mxu0
        %v1761 = vadd.f32 %v1712, %v1760
        %v1762 = vpop.f32.mrf.mxu0
        %v1763 = vadd.f32 %v1714, %v1762
        %1764 = vmatmul.bf16.gmra.mxu0 %v1239
        %v1765 = vpop.f32.mrf.mxu0
        %v1766 = vadd.f32 %v1717, %v1765
        %v1767 = vpop.f32.mrf.mxu0
        %v1768 = vadd.f32 %v1719, %v1767
        %1769 = vmatmul.bf16.gmra.mxu0 %v1243
        %v1770 = vpop.f32.mrf.mxu0
        %v1771 = vadd.f32 %v1722, %v1770
        %v1772 = vpop.f32.mrf.mxu0
        %v1773 = vadd.f32 %v1724, %v1772
        %1774 = vmatmul.bf16.gmra.mxu0 %v1247
        %v1775 = vpop.f32.mrf.mxu0
        %v1776 = vadd.f32 %v1727, %v1775
        %v1777 = vpop.f32.mrf.mxu0
        %v1778 = vadd.f32 %v1729, %v1777
        %1779 = vdwg.mxu0
        %1780 = vmatpush.bf16.msra.mxu0 %v1567
        %1781 = vmatpush.bf16.msra.mxu0 %v1565
        %1782 = vmatpush.bf16.msra.mxu0 %v1563
        %1783 = vmatpush.bf16.msra.mxu0 %v1561
        %1784 = vmatpush.bf16.msra.mxu0 %v1559
        %1785 = vmatpush.bf16.msra.mxu0 %v1557
        %1786 = vmatpush.bf16.msra.mxu0 %v1555
        %1787 = vmatpush.bf16.msra.mxu0 %v1553
        %1788 = vmatmul.bf16.gmra.mxu0 %v1220
        %v1789 = vpop.f32.mrf.mxu0
        %v1790 = vadd.f32 %v1741, %v1789
        %v1791 = vpop.f32.mrf.mxu0
        %v1792 = vadd.f32 %v1743, %v1791
        %1793 = vmatmul.bf16.gmra.mxu0 %v1224
        %v1794 = vpop.f32.mrf.mxu0
        %v1795 = vadd.f32 %v1746, %v1794
        %v1796 = vpop.f32.mrf.mxu0
        %v1797 = vadd.f32 %v1748, %v1796
        %1798 = vmatmul.bf16.gmra.mxu0 %v1228
        %v1799 = vpop.f32.mrf.mxu0
        %v1800 = vadd.f32 %v1751, %v1799
        %v1801 = vpop.f32.mrf.mxu0
        %v1802 = vadd.f32 %v1753, %v1801
        %1803 = vmatmul.bf16.gmra.mxu0 %v1232
        %v1804 = vpop.f32.mrf.mxu0
        %v1805 = vadd.f32 %v1756, %v1804
        %v1806 = vpop.f32.mrf.mxu0
        %v1807 = vadd.f32 %v1758, %v1806
        %1808 = vmatmul.bf16.gmra.mxu0 %v1236
        %v1809 = vpop.f32.mrf.mxu0
        %v1810 = vadd.f32 %v1761, %v1809
        %v1811 = vpop.f32.mrf.mxu0
        %v1812 = vadd.f32 %v1763, %v1811
        %1813 = vmatmul.bf16.gmra.mxu0 %v1240
        %v1814 = vpop.f32.mrf.mxu0
        %v1815 = vadd.f32 %v1766, %v1814
        %v1816 = vpop.f32.mrf.mxu0
        %v1817 = vadd.f32 %v1768, %v1816
        %1818 = vmatmul.bf16.gmra.mxu0 %v1244
        %v1819 = vpop.f32.mrf.mxu0
        %v1820 = vadd.f32 %v1771, %v1819
        %v1821 = vpop.f32.mrf.mxu0
        %v1822 = vadd.f32 %v1773, %v1821
        %1823 = vmatmul.bf16.gmra.mxu0 %v1248
        %v1824 = vpop.f32.mrf.mxu0
        %v1825 = vadd.f32 %v1776, %v1824
        %v1826 = vpop.f32.mrf.mxu0
        %v1827 = vadd.f32 %v1778, %v1826
        %1828 = vdwg.mxu0
        %1829 = vmatpush.bf16.msra.mxu0 %v1520
        %1830 = vmatpush.bf16.msra.mxu0 %v1518
        %1831 = vmatpush.bf16.msra.mxu0 %v1516
        %1832 = vmatpush.bf16.msra.mxu0 %v1514
        %1833 = vmatpush.bf16.msra.mxu0 %v1512
        %1834 = vmatpush.bf16.msra.mxu0 %v1510
        %1835 = vmatpush.bf16.msra.mxu0 %v1508
        %1836 = vmatpush.bf16.msra.mxu0 %v1506
        %1837 = vmatmul.bf16.gmra.mxu0 %v1217
        %v1838 = vpop.f32.mrf.mxu0
        %v1839 = vadd.f32 0.0, %v1838
        %v1840 = vpop.f32.mrf.mxu0
        %v1841 = vadd.f32 0.0, %v1840
        %1842 = vmatmul.bf16.gmra.mxu0 %v1221
        %v1843 = vpop.f32.mrf.mxu0
        %v1844 = vadd.f32 0.0, %v1843
        %v1845 = vpop.f32.mrf.mxu0
        %v1846 = vadd.f32 0.0, %v1845
        %1847 = vmatmul.bf16.gmra.mxu0 %v1225
        %v1848 = vpop.f32.mrf.mxu0
        %v1849 = vadd.f32 0.0, %v1848
        %v1850 = vpop.f32.mrf.mxu0
        %v1851 = vadd.f32 0.0, %v1850
        %1852 = vmatmul.bf16.gmra.mxu0 %v1229
        %v1853 = vpop.f32.mrf.mxu0
        %v1854 = vadd.f32 0.0, %v1853
        %v1855 = vpop.f32.mrf.mxu0
        %v1856 = vadd.f32 0.0, %v1855
        %1857 = vmatmul.bf16.gmra.mxu0 %v1233
        %v1858 = vpop.f32.mrf.mxu0
        %v1859 = vadd.f32 0.0, %v1858
        %v1860 = vpop.f32.mrf.mxu0
        %v1861 = vadd.f32 0.0, %v1860
        %1862 = vmatmul.bf16.gmra.mxu0 %v1237
        %v1863 = vpop.f32.mrf.mxu0
        %v1864 = vadd.f32 0.0, %v1863
        %v1865 = vpop.f32.mrf.mxu0
        %v1866 = vadd.f32 0.0, %v1865
        %1867 = vmatmul.bf16.gmra.mxu0 %v1241
        %v1868 = vpop.f32.mrf.mxu0
        %v1869 = vadd.f32 0.0, %v1868
        %v1870 = vpop.f32.mrf.mxu0
        %v1871 = vadd.f32 0.0, %v1870
        %1872 = vmatmul.bf16.gmra.mxu0 %v1245
        %v1873 = vpop.f32.mrf.mxu0
        %v1874 = vadd.f32 0.0, %v1873
        %v1875 = vpop.f32.mrf.mxu0
        %v1876 = vadd.f32 0.0, %v1875
        %1877 = vdwg.mxu0
        %1878 = vmatpush.bf16.msra.mxu0 %v1536
        %1879 = vmatpush.bf16.msra.mxu0 %v1534
        %1880 = vmatpush.bf16.msra.mxu0 %v1532
        %1881 = vmatpush.bf16.msra.mxu0 %v1530
        %1882 = vmatpush.bf16.msra.mxu0 %v1528
        %1883 = vmatpush.bf16.msra.mxu0 %v1526
        %1884 = vmatpush.bf16.msra.mxu0 %v1524
        %1885 = vmatpush.bf16.msra.mxu0 %v1522
        %1886 = vmatmul.bf16.gmra.mxu0 %v1218
        %v1887 = vpop.f32.mrf.mxu0
        %v1888 = vadd.f32 %v1839, %v1887
        %v1889 = vpop.f32.mrf.mxu0
        %v1890 = vadd.f32 %v1841, %v1889
        %1891 = vmatmul.bf16.gmra.mxu0 %v1222
        %v1892 = vpop.f32.mrf.mxu0
        %v1893 = vadd.f32 %v1844, %v1892
        %v1894 = vpop.f32.mrf.mxu0
        %v1895 = vadd.f32 %v1846, %v1894
        %1896 = vmatmul.bf16.gmra.mxu0 %v1226
        %v1897 = vpop.f32.mrf.mxu0
        %v1898 = vadd.f32 %v1849, %v1897
        %v1899 = vpop.f32.mrf.mxu0
        %v1900 = vadd.f32 %v1851, %v1899
        %1901 = vmatmul.bf16.gmra.mxu0 %v1230
        %v1902 = vpop.f32.mrf.mxu0
        %v1903 = vadd.f32 %v1854, %v1902
        %v1904 = vpop.f32.mrf.mxu0
        %v1905 = vadd.f32 %v1856, %v1904
        %1906 = vmatmul.bf16.gmra.mxu0 %v1234
        %v1907 = vpop.f32.mrf.mxu0
        %v1908 = vadd.f32 %v1859, %v1907
        %v1909 = vpop.f32.mrf.mxu0
        %v1910 = vadd.f32 %v1861, %v1909
        %1911 = vmatmul.bf16.gmra.mxu0 %v1238
        %v1912 = vpop.f32.mrf.mxu0
        %v1913 = vadd.f32 %v1864, %v1912
        %v1914 = vpop.f32.mrf.mxu0
        %v1915 = vadd.f32 %v1866, %v1914
        %1916 = vmatmul.bf16.gmra.mxu0 %v1242
        %v1917 = vpop.f32.mrf.mxu0
        %v1918 = vadd.f32 %v1869, %v1917
        %v1919 = vpop.f32.mrf.mxu0
        %v1920 = vadd.f32 %v1871, %v1919
        %1921 = vmatmul.bf16.gmra.mxu0 %v1246
        %v1922 = vpop.f32.mrf.mxu0
        %v1923 = vadd.f32 %v1874, %v1922
        %v1924 = vpop.f32.mrf.mxu0
        %v1925 = vadd.f32 %v1876, %v1924
        %1926 = vdwg.mxu0
        %1927 = vmatpush.bf16.msra.mxu0 %v1552
        %1928 = vmatpush.bf16.msra.mxu0 %v1550
        %1929 = vmatpush.bf16.msra.mxu0 %v1548
        %1930 = vmatpush.bf16.msra.mxu0 %v1546
        %1931 = vmatpush.bf16.msra.mxu0 %v1544
        %1932 = vmatpush.bf16.msra.mxu0 %v1542
        %1933 = vmatpush.bf16.msra.mxu0 %v1540
        %1934 = vmatpush.bf16.msra.mxu0 %v1538
        %1935 = vmatmul.bf16.gmra.mxu0 %v1219
        %v1936 = vpop.f32.mrf.mxu0
        %v1937 = vadd.f32 %v1888, %v1936
        %v1938 = vpop.f32.mrf.mxu0
        %v1939 = vadd.f32 %v1890, %v1938
        %1940 = vmatmul.bf16.gmra.mxu0 %v1223
        %v1941 = vpop.f32.mrf.mxu0
        %v1942 = vadd.f32 %v1893, %v1941
        %v1943 = vpop.f32.mrf.mxu0
        %v1944 = vadd.f32 %v1895, %v1943
        %1945 = vmatmul.bf16.gmra.mxu0 %v1227
        %v1946 = vpop.f32.mrf.mxu0
        %v1947 = vadd.f32 %v1898, %v1946
        %v1948 = vpop.f32.mrf.mxu0
        %v1949 = vadd.f32 %v1900, %v1948
        %1950 = vmatmul.bf16.gmra.mxu0 %v1231
        %v1951 = vpop.f32.mrf.mxu0
        %v1952 = vadd.f32 %v1903, %v1951
        %v1953 = vpop.f32.mrf.mxu0
        %v1954 = vadd.f32 %v1905, %v1953
        %1955 = vmatmul.bf16.gmra.mxu0 %v1235
        %v1956 = vpop.f32.mrf.mxu0
        %v1957 = vadd.f32 %v1908, %v1956
        %v1958 = vpop.f32.mrf.mxu0
        %v1959 = vadd.f32 %v1910, %v1958
        %1960 = vmatmul.bf16.gmra.mxu0 %v1239
        %v1961 = vpop.f32.mrf.mxu0
        %v1962 = vadd.f32 %v1913, %v1961
        %v1963 = vpop.f32.mrf.mxu0
        %v1964 = vadd.f32 %v1915, %v1963
        %1965 = vmatmul.bf16.gmra.mxu0 %v1243
        %v1966 = vpop.f32.mrf.mxu0
        %v1967 = vadd.f32 %v1918, %v1966
        %v1968 = vpop.f32.mrf.mxu0
        %v1969 = vadd.f32 %v1920, %v1968
        %1970 = vmatmul.bf16.gmra.mxu0 %v1247
        %v1971 = vpop.f32.mrf.mxu0
        %v1972 = vadd.f32 %v1923, %v1971
        %v1973 = vpop.f32.mrf.mxu0
        %v1974 = vadd.f32 %v1925, %v1973
        %1975 = vdwg.mxu0
        %1976 = vmatpush.bf16.msra.mxu0 %v1568
        %1977 = vmatpush.bf16.msra.mxu0 %v1566
        %1978 = vmatpush.bf16.msra.mxu0 %v1564
        %1979 = vmatpush.bf16.msra.mxu0 %v1562
        %1980 = vmatpush.bf16.msra.mxu0 %v1560
        %1981 = vmatpush.bf16.msra.mxu0 %v1558
        %1982 = vmatpush.bf16.msra.mxu0 %v1556
        %1983 = vmatpush.bf16.msra.mxu0 %v1554
        %1984 = vmatmul.bf16.gmra.mxu0 %v1220
        %v1985 = vpop.f32.mrf.mxu0
        %v1986 = vadd.f32 %v1937, %v1985
        %v1987 = vpop.f32.mrf.mxu0
        %v1988 = vadd.f32 %v1939, %v1987
        %1989 = vmatmul.bf16.gmra.mxu0 %v1224
        %v1990 = vpop.f32.mrf.mxu0
        %v1991 = vadd.f32 %v1942, %v1990
        %v1992 = vpop.f32.mrf.mxu0
        %v1993 = vadd.f32 %v1944, %v1992
        %1994 = vmatmul.bf16.gmra.mxu0 %v1228
        %v1995 = vpop.f32.mrf.mxu0
        %v1996 = vadd.f32 %v1947, %v1995
        %v1997 = vpop.f32.mrf.mxu0
        %v1998 = vadd.f32 %v1949, %v1997
        %1999 = vmatmul.bf16.gmra.mxu0 %v1232
        %v2000 = vpop.f32.mrf.mxu0
        %v2001 = vadd.f32 %v1952, %v2000
        %v2002 = vpop.f32.mrf.mxu0
        %v2003 = vadd.f32 %v1954, %v2002
        %2004 = vmatmul.bf16.gmra.mxu0 %v1236
        %v2005 = vpop.f32.mrf.mxu0
        %v2006 = vadd.f32 %v1957, %v2005
        %v2007 = vpop.f32.mrf.mxu0
        %v2008 = vadd.f32 %v1959, %v2007
        %2009 = vmatmul.bf16.gmra.mxu0 %v1240
        %v2010 = vpop.f32.mrf.mxu0
        %v2011 = vadd.f32 %v1962, %v2010
        %v2012 = vpop.f32.mrf.mxu0
        %v2013 = vadd.f32 %v1964, %v2012
        %2014 = vmatmul.bf16.gmra.mxu0 %v1244
        %v2015 = vpop.f32.mrf.mxu0
        %v2016 = vadd.f32 %v1967, %v2015
        %v2017 = vpop.f32.mrf.mxu0
        %v2018 = vadd.f32 %v1969, %v2017
        %2019 = vmatmul.bf16.gmra.mxu0 %v1248
        %v2020 = vpop.f32.mrf.mxu0
        %v2021 = vadd.f32 %v1972, %v2020
        %v2022 = vpop.f32.mrf.mxu0
        %v2023 = vadd.f32 %v1974, %v2022
        %2024 = vdwg.mxu0
        %v2025 = vmul.f32 %v1790, %v1201
        %v2026 = vmul.f32 %v1986, %v1201
        %v2027 = vmul.f32 %v1792, %v1202
        %v2028 = vmul.f32 %v1988, %v1202
        %v2029 = vmul.f32 %v1795, %v1203
        %v2030 = vmul.f32 %v1991, %v1203
        %v2031 = vmul.f32 %v1797, %v1204
        %v2032 = vmul.f32 %v1993, %v1204
        %v2033 = vmul.f32 %v1800, %v1205
        %v2034 = vmul.f32 %v1996, %v1205
        %v2035 = vmul.f32 %v1802, %v1206
        %v2036 = vmul.f32 %v1998, %v1206
        %v2037 = vmul.f32 %v1805, %v1207
        %v2038 = vmul.f32 %v2001, %v1207
        %v2039 = vmul.f32 %v1807, %v1208
        %v2040 = vmul.f32 %v2003, %v1208
        %v2041 = vmul.f32 %v1810, %v1209
        %v2042 = vmul.f32 %v2006, %v1209
        %v2043 = vmul.f32 %v1812, %v1210
        %v2044 = vmul.f32 %v2008, %v1210
        %v2045 = vmul.f32 %v1815, %v1211
        %v2046 = vmul.f32 %v2011, %v1211
        %v2047 = vmul.f32 %v1817, %v1212
        %v2048 = vmul.f32 %v2013, %v1212
        %v2049 = vmul.f32 %v1820, %v1213
        %v2050 = vmul.f32 %v2016, %v1213
        %v2051 = vmul.f32 %v1822, %v1214
        %v2052 = vmul.f32 %v2018, %v1214
        %v2053 = vmul.f32 %v1825, %v1215
        %v2054 = vmul.f32 %v2021, %v1215
        %v2055 = vmul.f32 %v1827, %v1216
        %v2056 = vmul.f32 %v2023, %v1216
        %v2057 = vpack.c.bf16 %v2026, %v2025
        %v2058 = vpack.c.bf16 %v2028, %v2027
        %v2059 = vpack.c.bf16 %v2030, %v2029
        %v2060 = vpack.c.bf16 %v2032, %v2031
        %v2061 = vpack.c.bf16 %v2034, %v2033
        %v2062 = vpack.c.bf16 %v2036, %v2035
        %v2063 = vpack.c.bf16 %v2038, %v2037
        %v2064 = vpack.c.bf16 %v2040, %v2039
        %v2065 = vpack.c.bf16 %v2042, %v2041
        %v2066 = vpack.c.bf16 %v2044, %v2043
        %v2067 = vpack.c.bf16 %v2046, %v2045
        %v2068 = vpack.c.bf16 %v2048, %v2047
        %v2069 = vpack.c.bf16 %v2050, %v2049
        %v2070 = vpack.c.bf16 %v2052, %v2051
        %v2071 = vpack.c.bf16 %v2054, %v2053
        %v2072 = vpack.c.bf16 %v2056, %v2055
        %2073 = vst [vmem:[%s266] sm:$0xff] %v2057
        %2074 = vst [vmem:[%s266 + $0x8] sm:$0xff] %v2058
        %2075 = vst [vmem:[%s266 + $0x10] sm:$0xff] %v2059
        %2076 = vst [vmem:[%s266 + $0x18] sm:$0xff] %v2060
        %2077 = vst [vmem:[%s266 + $0x20] sm:$0xff] %v2061
        %2078 = vst [vmem:[%s266 + $0x28] sm:$0xff] %v2062
        %2079 = vst [vmem:[%s266 + $0x30] sm:$0xff] %v2063
        %2080 = vst [vmem:[%s266 + $0x38] sm:$0xff] %v2064
        %2081 = vst [vmem:[%s266 + $0x40] sm:$0xff] %v2065
        %2082 = vst [vmem:[%s266 + $0x48] sm:$0xff] %v2066
        %2083 = vst [vmem:[%s266 + $0x50] sm:$0xff] %v2067
        %2084 = vst [vmem:[%s266 + $0x58] sm:$0xff] %v2068
        %2085 = vst [vmem:[%s266 + $0x60] sm:$0xff] %v2069
        %2086 = vst [vmem:[%s266 + $0x68] sm:$0xff] %v2070
        %2087 = vst [vmem:[%s266 + $0x70] sm:$0xff] %v2071
        %2088 = vst [vmem:[%s266 + $0x78] sm:$0xff] %v2072
        %s2089 = sand.u32 %s120, 1
        %s2090 = scalar_lea.sflag [#allocation4], %s2089
        %s2091 = sand.u32 %s120, 1
        %s2092 = smul.addr %s2091, 128
        %s2093 = scalar_lea.vmem [#allocation8], %s2092
        // Predicated region
        $region45: #{tpu_custom_call.1} parent=31 // pred_check
          %p2094 = pneg %p130
        $region46: #{tpu_custom_call.1} parent=31 // pred_check_branch
          %2096 = sbr.rel (%p2094) target = $region48
        $region47: #{tpu_custom_call.1} parent=31 // pred_region
          %s2097 = smul.u32 16, %s28
          %2099 = vsyncadd %s2090, 0
          %s2100 = smul.addr %s2097, 2
          %s2101 = smul.addr %s27, 64
          %s2102 = sadd.s32 %s2100, %s2101
          %s2103 = smul.addr %s2102, 4
          %s2104 = scalar_lea.hbm %s3, %s2103
          %s2105 = sshll.u32 %s2093, 4
          %s2106 = int_to_ptr.vmem [resolvable:$true] %s2105
          %s2107 = sshll.u32 %s2104, 4
          %s2108 = int_to_ptr.hbm [resolvable:$true] %s2107
          %2113 = dma.vmem_to_hbm [thread:$0]  %s2106, 2048, %s2108, %s2090, 128, 128, 8
        $region48: #{tpu_custom_call.1} parent=31 // pred_fallthru
          _
      $region32: #{tpu_custom_call.1} parent=5 // pred_fallthru
        _
      %p2114 = scmp.le.s32.totalorder 2, %s18
      // Predicated region
      $region49: #{tpu_custom_call.1} parent=5 // pred_check
        %p2115 = pneg %p2114
      $region50: #{tpu_custom_call.1} parent=5 // pred_check_branch
        %2117 = sbr.rel (%p2115) target = $region52
      $region51: #{tpu_custom_call.1} parent=5 // pred_region
        %s2118 = ssub.s32 %s18, 2
        // Predicated region
        $region53: #{tpu_custom_call.1} parent=51 // pred_check
          %p2119 = pneg %p136
        $region54: #{tpu_custom_call.1} parent=51 // pred_check_branch
          %2121 = sbr.rel (%p2119) target = $region56
        $region55: #{tpu_custom_call.1} parent=51 // pred_region
          %s2122 = sand.u32 %s121, 1
          %s2123 = scalar_lea.sflag [#allocation4], %s2122
          %s2124 = sand.u32 %s121, 1
          %s2125 = smul.addr %s2124, 128
          %s2126 = scalar_lea.vmem [#allocation8], %s2125
          %2128 = dma.done %s2123, 2048
        $region56: #{tpu_custom_call.1} parent=51 // pred_fallthru
          _
      $region52: #{tpu_custom_call.1} parent=5 // pred_fallthru
        _
    $region6: #{tpu_custom_call.1} parent=1 // loop_footer
      %s22 = sadd.s32 1, %s18
    $region7: #{tpu_custom_call.1} parent=1 // loop_footer_branch
      %17 = sbr.rel target = $region3
    $region8: #{tpu_custom_call.1} parent=1 // loop_exit
      _
    %2129 = vsyncpa [#allocation3], 1
    %s2130 = scalar_lea.sflag [#allocation3], 1
    %2131 = vsyncpa %s2130, 1
    %2132 = vsyncpa [#allocation6], 1
    %s2133 = scalar_lea.sflag [#allocation6], 1
    %2134 = vsyncpa %s2133, 1
    %2135 = vsyncpa [#allocation4], 1
    %s2136 = scalar_lea.sflag [#allocation4], 1
    %2137 = vsyncpa %s2136, 1

// kernel: tpu_custom_call.1
$region0: #{tpu_custom_call.1}
  #allocation0 [shape = 'u32[]', space=smem, size = 0x4, offset = 0x4, fixed_abs, tag = 'smem constant byte address 0x4 - core index']
  #allocation1 [shape = 'u32[72,128]{1,0:T(1,128)}', space=vmem, size = 0x9000, scoped, tag = 'internal scratch']
  %s0 = inlined_call_operand.hbm [shape: bf16[2,256,128], index: 0, kind: input, shape index: {}]
  %s1 = inlined_call_operand.hbm [shape: bf16[2,512,128], index: 1, kind: input, shape index: {}]
  %s2 = inlined_call_operand.hbm [shape: bf16[512,256], index: 2, kind: input, shape index: {}]
  %s3 = inlined_call_operand.hbm [shape: bf16[2,256,256], index: 3, kind: output, shape index: {}]
  %s4 = sld [smem:[#allocation0]]
  $region57: #{tpu_custom_call.1} parent=0
    _
  %s6 = ssub.s32 1, %s4
  %s7 = scalar_select 0, %s6, %s4
  $region1: #{tpu_custom_call.1} parent=0
    #allocation2 [shape = 'u8[65536]{0}', space=vmem, size = 0x10000, scoped, tag = 'input window, operand 0']
    #allocation3 [shape = 's32[2]{0}', space=sflag, size = 0x8, scoped, tag = 'scoped memory for tpu_custom_call.1']
    #allocation4 [shape = 's32[2]{0}', space=sflag, size = 0x8, scoped, tag = 'scoped memory for tpu_custom_call.1']
    #allocation5 [shape = 'u8[262144]{0}', space=vmem, size = 0x40000, scoped, tag = 'input window, operand 1']
    #allocation6 [shape = 's32[2]{0}', space=sflag, size = 0x8, scoped, tag = 'scoped memory for tpu_custom_call.1']
    #allocation7 [shape = 'u8[262144]{0}', space=vmem, size = 0x40000, scoped, tag = 'input window, operand 2, single buffered']
    #allocation8 [shape = 'u8[131072]{0}', space=vmem, size = 0x20000, scoped, tag = 'output window, operand 0']
    %8 = vsyncpa [#allocation3], 0
    %s9 = scalar_lea.sflag [#allocation3], 1
    %10 = vsyncpa %s9, 0
    %11 = vsyncpa [#allocation6], 0
    %s12 = scalar_lea.sflag [#allocation6], 1
    %13 = vsyncpa %s12, 0
    %14 = vsyncpa [#allocation4], 0
    %s15 = scalar_lea.sflag [#allocation4], 1
    %16 = vsyncpa %s15, 0
    loop: start=0, step=1, limit=6
    $region2: #{tpu_custom_call.1} parent=1 // loop_pre_header
      _
    $region3: #{tpu_custom_call.1} parent=1 // loop_header
      %s18 = sphi 0, %s22
      %p19 = scmp.ge.s32.totalorder %s18, 6
      %s25 = sphi 0, %s37
      %s26 = sphi 0, %s33
      %s27 = sphi 0, %s25
      %s28 = sphi 0, %s26
      %s29 = sphi 0, %s27
      %s30 = sphi 0, %s28
      %s42 = sphi 0, %s44
      %s45 = sphi 0, %s42
      %s46 = sphi 0, %s45
      %s62 = sphi 0, %s46
      %s68 = sphi 0, %s70
      %s71 = sphi 0, %s68
      %s72 = sphi 0, %s71
      %s88 = sphi 0, %s72
      %s92 = sphi 0, %s92
      %s94 = sphi 0, %s92
      %s95 = sphi 0, %s94
      %s109 = sphi 0, %s95
      %s117 = sphi 0, %s119
      %s120 = sphi 0, %s117
      %s121 = sphi 0, %s120
      %s137 = sphi 0, %s121
    $region4: #{tpu_custom_call.1} parent=1 // loop_header_branch
      %21 = sbr.rel (%p19) target = $region8
    $region5: #{tpu_custom_call.1} parent=1 // loop_body
      %s23 = ssub.s32 %s18, 1
      %s24 = ssub.s32 %s18, 2
      %s31 = sadd.s32 1, %s26
      %p32 = scmp.ge.s32.totalorder %s31, 2
      %s33 = scalar_select %p32, 0, %s31
      %s34 = sadd.s32 1, %s25
      %s35 = scalar_select %p32, %s34, %s25
      %p36 = scmp.ge.s32.totalorder %s35, 2
      %s37 = scalar_select %p36, 0, %s35
      %s38 = ssub.s32 %s25, %s37
      %s39 = ssub.s32 %s26, %s33
      %s40 = sor.u32 %s38, %s39
      %p41 = scmp.eq.s32.totalorder %s40, 0
      %s43 = sadd.s32 %s42, 1
      %s44 = scalar_select %p41, %s42, %s43
      %p47 = pneg %p41
      %p48 = scmp.eq.s32.totalorder %s18, 3
      %p49 = por %p47, %p48
      %p50 = scmp.ne.s32.totalorder %s42, %s45
      %p51 = scmp.eq.s32.totalorder %s18, 0
      %p52 = por %p50, %p51
      %p53 = scmp.ne.s32.totalorder %s42, %s45
      %p54 = scmp.eq.s32.totalorder %s23, 3
      %p55 = por %p53, %p54
      %p56 = scmp.ne.s32.totalorder %s45, %s46
      %p57 = scmp.eq.s32.totalorder %s23, 0
      %p58 = por %p56, %p57
      %p59 = scmp.ne.s32.totalorder %s45, %s46
      %p60 = scmp.eq.s32.totalorder %s24, 3
      %p61 = por %p59, %p60
      %p63 = scmp.ne.s32.totalorder %s46, %s62
      %p64 = scmp.eq.s32.totalorder %s24, 0
      %p65 = por %p63, %p64
      %s66 = ssub.s32 %s25, %s37
      %p67 = scmp.eq.s32.totalorder %s66, 0
      %s69 = sadd.s32 %s68, 1
      %s70 = scalar_select %p67, %s68, %s69
      %p73 = pneg %p67
      %p74 = scmp.eq.s32.totalorder %s18, 3
      %p75 = por %p73, %p74
      %p76 = scmp.ne.s32.totalorder %s68, %s71
      %p77 = scmp.eq.s32.totalorder %s18, 0
      %p78 = por %p76, %p77
      %p79 = scmp.ne.s32.totalorder %s68, %s71
      %p80 = scmp.eq.s32.totalorder %s23, 3
      %p81 = por %p79, %p80
      %p82 = scmp.ne.s32.totalorder %s71, %s72
      %p83 = scmp.eq.s32.totalorder %s23, 0
      %p84 = por %p82, %p83
      %p85 = scmp.ne.s32.totalorder %s71, %s72
      %p86 = scmp.eq.s32.totalorder %s24, 3
      %p87 = por %p85, %p86
      %p89 = scmp.ne.s32.totalorder %s72, %s88
      %p90 = scmp.eq.s32.totalorder %s24, 0
      %p91 = por %p89, %p90
      %s93 = sadd.s32 %s92, 1
      %p96 = scmp.eq.s32.totalorder %s18, 3
      %p97 = scmp.ne.s32.totalorder %s92, %s94
      %p98 = scmp.eq.s32.totalorder %s18, 0
      %p99 = por %p97, %p98
      %p100 = scmp.ne.s32.totalorder %s92, %s94
      %p101 = scmp.eq.s32.totalorder %s23, 3
      %p102 = por %p100, %p101
      %p103 = scmp.ne.s32.totalorder %s94, %s95
      %p104 = scmp.eq.s32.totalorder %s23, 0
      %p105 = por %p103, %p104
      %p106 = scmp.ne.s32.totalorder %s94, %s95
      %p107 = scmp.eq.s32.totalorder %s24, 3
      %p108 = por %p106, %p107
      %p110 = scmp.ne.s32.totalorder %s95, %s109
      %p111 = scmp.eq.s32.totalorder %s24, 0
      %p112 = por %p110, %p111
      %s113 = ssub.s32 %s25, %s37
      %s114 = ssub.s32 %s26, %s33
      %s115 = sor.u32 %s113, %s114
      %p116 = scmp.eq.s32.totalorder %s115, 0
      %s118 = sadd.s32 %s117, 1
      %s119 = scalar_select %p116, %s117, %s118
      %p122 = pneg %p116
      %p123 = scmp.eq.s32.totalorder %s18, 3
      %p124 = por %p122, %p123
      %p125 = scmp.ne.s32.totalorder %s117, %s120
      %p126 = scmp.eq.s32.totalorder %s18, 0
      %p127 = por %p125, %p126
      %p128 = scmp.ne.s32.totalorder %s117, %s120
      %p129 = scmp.eq.s32.totalorder %s23, 3
      %p130 = por %p128, %p129
      %p131 = scmp.ne.s32.totalorder %s120, %s121
      %p132 = scmp.eq.s32.totalorder %s23, 0
      %p133 = por %p131, %p132
      %p134 = scmp.ne.s32.totalorder %s120, %s121
      %p135 = scmp.eq.s32.totalorder %s24, 3
      %p136 = por %p134, %p135
      %p138 = scmp.ne.s32.totalorder %s121, %s137
      %p139 = scmp.eq.s32.totalorder %s24, 0
      %p140 = por %p138, %p139
      %p141 = scmp.le.s32.totalorder 1, %s18
      %p142 = scmp.lt.s32.totalorder %s18, 5
      %p143 = pnand %p141, %p142
      %p144 = pneg %p143
      // Predicated region
      $region9: #{tpu_custom_call.1} parent=5 // pred_check
        _
      $region10: #{tpu_custom_call.1} parent=5 // pred_check_branch
        %146 = sbr.rel (%p143) target = $region12
      $region11: #{tpu_custom_call.1} parent=5 // pred_region
        %s147 = ssub.s32 %s18, 1
        // Predicated region
        $region13: #{tpu_custom_call.1} parent=11 // pred_check
          %p148 = pneg %p105
        $region14: #{tpu_custom_call.1} parent=11 // pred_check_branch
          %150 = sbr.rel (%p148) target = $region16
        $region15: #{tpu_custom_call.1} parent=11 // pred_region
          %152 = vsyncadd [#allocation6], 0
          %s153 = sshll.u32 %s2, 4
          %s154 = int_to_ptr.hbm [resolvable:$true] %s153
          %s155 = sshll.u32 [#allocation7], 4
          %s156 = int_to_ptr.vmem [resolvable:$true] %s155
          %161 = dma.hbm_to_vmem [thread:$0]  %s154, 8192, %s156, [#allocation6], 128, 128, 8
        $region16: #{tpu_custom_call.1} parent=11 // pred_fallthru
          _
      $region12: #{tpu_custom_call.1} parent=5 // pred_fallthru
        _
      %p162 = scmp.lt.s32.totalorder %s18, 4
      // Predicated region
      $region17: #{tpu_custom_call.1} parent=5 // pred_check
        %p163 = pneg %p162
      $region18: #{tpu_custom_call.1} parent=5 // pred_check_branch
        %165 = sbr.rel (%p163) target = $region20
      $region19: #{tpu_custom_call.1} parent=5 // pred_region
        // Predicated region
        $region21: #{tpu_custom_call.1} parent=19 // pred_check
          %p166 = pneg %p52
        $region22: #{tpu_custom_call.1} parent=19 // pred_check_branch
          %168 = sbr.rel (%p166) target = $region24
        $region23: #{tpu_custom_call.1} parent=19 // pred_region
          %s169 = sand.u32 %s42, 1
          %s170 = scalar_lea.sflag [#allocation3], %s169
          %s171 = sand.u32 %s42, 1
          %s172 = smul.addr %s171, 64
          %s173 = scalar_lea.vmem [#allocation2], %s172
          %s174 = smul.u32 16, %s26
          %176 = vsyncadd %s170, 0
          %s177 = smul.addr %s25, 32
          %s178 = sadd.s32 %s174, %s177
          %s179 = smul.addr %s178, 4
          %s180 = scalar_lea.hbm %s0, %s179
          %s181 = sshll.u32 %s180, 4
          %s182 = int_to_ptr.hbm [resolvable:$true] %s181
          %s183 = sshll.u32 %s173, 4
          %s184 = int_to_ptr.vmem [resolvable:$true] %s183
          %189 = dma.hbm_to_vmem [thread:$0]  %s182, 1024, %s184, %s170, 64, 64, 4
        $region24: #{tpu_custom_call.1} parent=19 // pred_fallthru
          _
        // Predicated region
        $region25: #{tpu_custom_call.1} parent=19 // pred_check
          %p190 = pneg %p78
        $region26: #{tpu_custom_call.1} parent=19 // pred_check_branch
          %192 = sbr.rel (%p190) target = $region28
        $region27: #{tpu_custom_call.1} parent=19 // pred_region
          %s193 = sand.u32 %s18, 1
          %s194 = scalar_lea.sflag [#allocation6], %s193
          %s195 = sand.u32 %s68, 1
          %s196 = smul.addr %s195, 256
          %s197 = scalar_lea.vmem [#allocation5], %s196
          %199 = vsyncadd %s194, 0
          %s200 = smul.addr %s25, 64
          %s201 = smul.addr %s200, 4
          %s202 = scalar_lea.hbm %s1, %s201
          %s203 = sshll.u32 %s202, 4
          %s204 = int_to_ptr.hbm [resolvable:$true] %s203
          %s205 = sshll.u32 %s197, 4
          %s206 = int_to_ptr.vmem [resolvable:$true] %s205
          %211 = dma.hbm_to_vmem [thread:$0]  %s204, 4096, %s206, %s194, 64, 64, 4
        $region28: #{tpu_custom_call.1} parent=19 // pred_fallthru
          _
      $region20: #{tpu_custom_call.1} parent=5 // pred_fallthru
        _
      %p212 = scmp.le.s32.totalorder 1, %s18
      %p213 = scmp.lt.s32.totalorder %s18, 5
      %p214 = pnand %p212, %p213
      %p215 = pneg %p214
      // Predicated region
      $region29: #{tpu_custom_call.1} parent=5 // pred_check
        _
      $region30: #{tpu_custom_call.1} parent=5 // pred_check_branch
        %217 = sbr.rel (%p214) target = $region32
      $region31: #{tpu_custom_call.1} parent=5 // pred_region
        %s218 = ssub.s32 %s18, 1
        %s219 = sand.u32 %s45, 1
        %s220 = scalar_lea.sflag [#allocation3], %s219
        %s221 = sand.u32 %s45, 1
        %s222 = smul.addr %s221, 64
        %s223 = scalar_lea.vmem [#allocation2], %s222
        // Predicated region
        $region33: #{tpu_custom_call.1} parent=31 // pred_check
          %p224 = pneg %p58
        $region34: #{tpu_custom_call.1} parent=31 // pred_check_branch
          %226 = sbr.rel (%p224) target = $region36
        $region35: #{tpu_custom_call.1} parent=31 // pred_region
          %228 = dma.done %s220, 1024
        $region36: #{tpu_custom_call.1} parent=31 // pred_fallthru
          _
        %s229 = sand.u32 %s23, 1
        %s230 = scalar_lea.sflag [#allocation6], %s229
        %s231 = sand.u32 %s71, 1
        %s232 = smul.addr %s231, 256
        %s233 = scalar_lea.vmem [#allocation5], %s232
        // Predicated region
        $region37: #{tpu_custom_call.1} parent=31 // pred_check
          %p234 = pneg %p84
        $region38: #{tpu_custom_call.1} parent=31 // pred_check_branch
          %236 = sbr.rel (%p234) target = $region40
        $region39: #{tpu_custom_call.1} parent=31 // pred_region
          %238 = dma.done %s230, 4096
        $region40: #{tpu_custom_call.1} parent=31 // pred_fallthru
          _
        // Predicated region
        $region41: #{tpu_custom_call.1} parent=31 // pred_check
          %p239 = pneg %p105
        $region42: #{tpu_custom_call.1} parent=31 // pred_check_branch
          %241 = sbr.rel (%p239) target = $region44
        $region43: #{tpu_custom_call.1} parent=31 // pred_region
          %243 = dma.done [#allocation6], 8192
        $region44: #{tpu_custom_call.1} parent=31 // pred_fallthru
          _
        %s244 = sand.u32 %s45, 1
        %s245 = scalar_lea.sflag [#allocation3], %s244
        %s246 = sand.u32 %s45, 1
        %s247 = smul.addr %s246, 64
        %s248 = scalar_lea.vmem [#allocation2], %s247
        %p249 = pneg %p58
        %p250 = pneg %p55
        %s251 = sand.u32 %s23, 1
        %s252 = scalar_lea.sflag [#allocation6], %s251
        %s253 = sand.u32 %s71, 1
        %s254 = smul.addr %s253, 256
        %s255 = scalar_lea.vmem [#allocation5], %s254
        %p256 = pneg %p84
        %p257 = pneg %p81
        %p258 = pneg %p105
        %p259 = pneg %p102
        %p260 = pneg %p133
        %p261 = pneg %p130
        %s262 = sand.u32 %s120, 1
        %s263 = scalar_lea.sflag [#allocation4], %s262
        %s264 = sand.u32 %s120, 1
        %s265 = smul.addr %s264, 128
        %s266 = scalar_lea.vmem [#allocation8], %s265
        %s267 = smul.u32 16, %s28
        %s268 = smul.u32 16, %s28
        %v269 = vld [vmem:[%s223] sm:$0xf]
        %v270 = vld [vmem:[%s223 + $0x4] sm:$0xf]
        %v271 = vld [vmem:[%s223 + $0x8] sm:$0xf]
        %v272 = vld [vmem:[%s223 + $0xc] sm:$0xf]
        %v273 = vld [vmem:[%s223 + $0x10] sm:$0xf]
        %v274 = vld [vmem:[%s223 + $0x14] sm:$0xf]
        %v275 = vld [vmem:[%s223 + $0x18] sm:$0xf]
        %v276 = vld [vmem:[%s223 + $0x1c] sm:$0xf]
        %v277 = vld [vmem:[%s223 + $0x20] sm:$0xf]
        %v278 = vld [vmem:[%s223 + $0x24] sm:$0xf]
        %v279 = vld [vmem:[%s223 + $0x28] sm:$0xf]
        %v280 = vld [vmem:[%s223 + $0x2c] sm:$0xf]
        %v281 = vld [vmem:[%s223 + $0x30] sm:$0xf]
        %v282 = vld [vmem:[%s223 + $0x34] sm:$0xf]
        %v283 = vld [vmem:[%s223 + $0x38] sm:$0xf]
        %v284 = vld [vmem:[%s223 + $0x3c] sm:$0xf]
        %v285 = vld [vmem:[%s233] sm:$0xf]
        %v286 = vld [vmem:[%s233 + $0x4] sm:$0xf]
        %v287 = vld [vmem:[%s233 + $0x8] sm:$0xf]
        %v288 = vld [vmem:[%s233 + $0xc] sm:$0xf]
        %v289 = vld [vmem:[%s233 + $0x10] sm:$0xf]
        %v290 = vld [vmem:[%s233 + $0x14] sm:$0xf]
        %v291 = vld [vmem:[%s233 + $0x18] sm:$0xf]
        %v292 = vld [vmem:[%s233 + $0x1c] sm:$0xf]
        %v293 = vld [vmem:[%s233 + $0x20] sm:$0xf]
        %v294 = vld [vmem:[%s233 + $0x24] sm:$0xf]
        %v295 = vld [vmem:[%s233 + $0x28] sm:$0xf]
        %v296 = vld [vmem:[%s233 + $0x2c] sm:$0xf]
        %v297 = vld [vmem:[%s233 + $0x30] sm:$0xf]
        %v298 = vld [vmem:[%s233 + $0x34] sm:$0xf]
        %v299 = vld [vmem:[%s233 + $0x38] sm:$0xf]
        %v300 = vld [vmem:[%s233 + $0x3c] sm:$0xf]
        %v301 = vld [vmem:[%s233 + $0x40] sm:$0xf]
        %v302 = vld [vmem:[%s233 + $0x44] sm:$0xf]
        %v303 = vld [vmem:[%s233 + $0x48] sm:$0xf]
        %v304 = vld [vmem:[%s233 + $0x4c] sm:$0xf]
        %v305 = vld [vmem:[%s233 + $0x50] sm:$0xf]
        %v306 = vld [vmem:[%s233 + $0x54] sm:$0xf]
        %v307 = vld [vmem:[%s233 + $0x58] sm:$0xf]
        %v308 = vld [vmem:[%s233 + $0x5c] sm:$0xf]
        %v309 = vld [vmem:[%s233 + $0x60] sm:$0xf]
        %v310 = vld [vmem:[%s233 + $0x64] sm:$0xf]
        %v311 = vld [vmem:[%s233 + $0x68] sm:$0xf]
        %v312 = vld [vmem:[%s233 + $0x6c] sm:$0xf]
        %v313 = vld [vmem:[%s233 + $0x70] sm:$0xf]
        %v314 = vld [vmem:[%s233 + $0x74] sm:$0xf]
        %v315 = vld [vmem:[%s233 + $0x78] sm:$0xf]
        %v316 = vld [vmem:[%s233 + $0x7c] sm:$0xf]
        %v317 = vld [vmem:[%s233 + $0x80] sm:$0xf]
        %v318 = vld [vmem:[%s233 + $0x84] sm:$0xf]
        %v319 = vld [vmem:[%s233 + $0x88] sm:$0xf]
        %v320 = vld [vmem:[%s233 + $0x8c] sm:$0xf]
        %v321 = vld [vmem:[%s233 + $0x90] sm:$0xf]
        %v322 = vld [vmem:[%s233 + $0x94] sm:$0xf]
        %v323 = vld [vmem:[%s233 + $0x98] sm:$0xf]
        %v324 = vld [vmem:[%s233 + $0x9c] sm:$0xf]
        %v325 = vld [vmem:[%s233 + $0xa0] sm:$0xf]
        %v326 = vld [vmem:[%s233 + $0xa4] sm:$0xf]
        %v327 = vld [vmem:[%s233 + $0xa8] sm:$0xf]
        %v328 = vld [vmem:[%s233 + $0xac] sm:$0xf]
        %v329 = vld [vmem:[%s233 + $0xb0] sm:$0xf]
        %v330 = vld [vmem:[%s233 + $0xb4] sm:$0xf]
        %v331 = vld [vmem:[%s233 + $0xb8] sm:$0xf]
        %v332 = vld [vmem:[%s233 + $0xbc] sm:$0xf]
        %v333 = vld [vmem:[%s233 + $0xc0] sm:$0xf]
        %v334 = vld [vmem:[%s233 + $0xc4] sm:$0xf]
        %v335 = vld [vmem:[%s233 + $0xc8] sm:$0xf]
        %v336 = vld [vmem:[%s233 + $0xcc] sm:$0xf]
        %v337 = vld [vmem:[%s233 + $0xd0] sm:$0xf]
        %v338 = vld [vmem:[%s233 + $0xd4] sm:$0xf]
        %v339 = vld [vmem:[%s233 + $0xd8] sm:$0xf]
        %v340 = vld [vmem:[%s233 + $0xdc] sm:$0xf]
        %v341 = vld [vmem:[%s233 + $0xe0] sm:$0xf]
        %v342 = vld [vmem:[%s233 + $0xe4] sm:$0xf]
        %v343 = vld [vmem:[%s233 + $0xe8] sm:$0xf]
        %v344 = vld [vmem:[%s233 + $0xec] sm:$0xf]
        %v345 = vld [vmem:[%s233 + $0xf0] sm:$0xf]
        %v346 = vld [vmem:[%s233 + $0xf4] sm:$0xf]
        %v347 = vld [vmem:[%s233 + $0xf8] sm:$0xf]
        %v348 = vld [vmem:[%s233 + $0xfc] sm:$0xf]
        %v365 = vunpack.c.l.b16 %v269
        %v366 = vunpack.c.l.b16 %v270
        %v367 = vunpack.c.l.b16 %v271
        %v368 = vunpack.c.l.b16 %v272
        %v369 = vunpack.c.l.b16 %v273
        %v370 = vunpack.c.l.b16 %v274
        %v371 = vunpack.c.l.b16 %v275
        %v372 = vunpack.c.l.b16 %v276
        %v373 = vunpack.c.l.b16 %v277
        %v374 = vunpack.c.l.b16 %v278
        %v375 = vunpack.c.l.b16 %v279
        %v376 = vunpack.c.l.b16 %v280
        %v377 = vunpack.c.l.b16 %v281
        %v378 = vunpack.c.l.b16 %v282
        %v379 = vunpack.c.l.b16 %v283
        %v380 = vunpack.c.l.b16 %v284
        %v381 = vpack.c.b16 %v366, %v365
        %v382 = vpack.c.b16 %v368, %v367
        %v383 = vpack.c.b16 %v370, %v369
        %v384 = vpack.c.b16 %v372, %v371
        %v385 = vpack.c.b16 %v374, %v373
        %v386 = vpack.c.b16 %v376, %v375
        %v387 = vpack.c.b16 %v378, %v377
        %v388 = vpack.c.b16 %v380, %v379
        %v461 = vunpack.c.l.b16 %v285
        %v462 = vunpack.c.l.b16 %v286
        %v463 = vunpack.c.l.b16 %v287
        %v464 = vunpack.c.l.b16 %v288
        %v465 = vunpack.c.l.b16 %v289
        %v466 = vunpack.c.l.b16 %v290
        %v467 = vunpack.c.l.b16 %v291
        %v468 = vunpack.c.l.b16 %v292
        %v469 = vunpack.c.l.b16 %v293
        %v470 = vunpack.c.l.b16 %v294
        %v471 = vunpack.c.l.b16 %v295
        %v472 = vunpack.c.l.b16 %v296
        %v473 = vunpack.c.l.b16 %v297
        %v474 = vunpack.c.l.b16 %v298
        %v475 = vunpack.c.l.b16 %v299
        %v476 = vunpack.c.l.b16 %v300
        %v477 = vunpack.c.l.b16 %v301
        %v478 = vunpack.c.l.b16 %v302
        %v479 = vunpack.c.l.b16 %v303
        %v480 = vunpack.c.l.b16 %v304
        %v481 = vunpack.c.l.b16 %v305
        %v482 = vunpack.c.l.b16 %v306
        %v483 = vunpack.c.l.b16 %v307
        %v484 = vunpack.c.l.b16 %v308
        %v485 = vunpack.c.l.b16 %v309
        %v486 = vunpack.c.l.b16 %v310
        %v487 = vunpack.c.l.b16 %v311
        %v488 = vunpack.c.l.b16 %v312
        %v489 = vunpack.c.l.b16 %v313
        %v490 = vunpack.c.l.b16 %v314
        %v491 = vunpack.c.l.b16 %v315
        %v492 = vunpack.c.l.b16 %v316
        %v493 = vunpack.c.l.b16 %v317
        %v494 = vunpack.c.l.b16 %v318
        %v495 = vunpack.c.l.b16 %v319
        %v496 = vunpack.c.l.b16 %v320
        %v497 = vunpack.c.l.b16 %v321
        %v498 = vunpack.c.l.b16 %v322
        %v499 = vunpack.c.l.b16 %v323
        %v500 = vunpack.c.l.b16 %v324
        %v501 = vunpack.c.l.b16 %v325
        %v502 = vunpack.c.l.b16 %v326
        %v503 = vunpack.c.l.b16 %v327
        %v504 = vunpack.c.l.b16 %v328
        %v505 = vunpack.c.l.b16 %v329
        %v506 = vunpack.c.l.b16 %v330
        %v507 = vunpack.c.l.b16 %v331
        %v508 = vunpack.c.l.b16 %v332
        %v509 = vunpack.c.l.b16 %v333
        %v510 = vunpack.c.l.b16 %v334
        %v511 = vunpack.c.l.b16 %v335
        %v512 = vunpack.c.l.b16 %v336
        %v513 = vunpack.c.l.b16 %v337
        %v514 = vunpack.c.l.b16 %v338
        %v515 = vunpack.c.l.b16 %v339
        %v516 = vunpack.c.l.b16 %v340
        %v517 = vunpack.c.l.b16 %v341
        %v518 = vunpack.c.l.b16 %v342
        %v519 = vunpack.c.l.b16 %v343
        %v520 = vunpack.c.l.b16 %v344
        %v521 = vunpack.c.l.b16 %v345
        %v522 = vunpack.c.l.b16 %v346
        %v523 = vunpack.c.l.b16 %v347
        %v524 = vunpack.c.l.b16 %v348
        %v525 = vpack.c.b16 %v462, %v461
        %v526 = vpack.c.b16 %v464, %v463
        %v527 = vpack.c.b16 %v466, %v465
        %v528 = vpack.c.b16 %v468, %v467
        %v529 = vpack.c.b16 %v470, %v469
        %v530 = vpack.c.b16 %v472, %v471
        %v531 = vpack.c.b16 %v474, %v473
        %v532 = vpack.c.b16 %v476, %v475
        %v533 = vpack.c.b16 %v478, %v477
        %v534 = vpack.c.b16 %v480, %v479
        %v535 = vpack.c.b16 %v482, %v481
        %v536 = vpack.c.b16 %v484, %v483
        %v537 = vpack.c.b16 %v486, %v485
        %v538 = vpack.c.b16 %v488, %v487
        %v539 = vpack.c.b16 %v490, %v489
        %v540 = vpack.c.b16 %v492, %v491
        %v541 = vpack.c.b16 %v494, %v493
        %v542 = vpack.c.b16 %v496, %v495
        %v543 = vpack.c.b16 %v498, %v497
        %v544 = vpack.c.b16 %v500, %v499
        %v545 = vpack.c.b16 %v502, %v501
        %v546 = vpack.c.b16 %v504, %v503
        %v547 = vpack.c.b16 %v506, %v505
        %v548 = vpack.c.b16 %v508, %v507
        %v549 = vpack.c.b16 %v510, %v509
        %v550 = vpack.c.b16 %v512, %v511
        %v551 = vpack.c.b16 %v514, %v513
        %v552 = vpack.c.b16 %v516, %v515
        %v553 = vpack.c.b16 %v518, %v517
        %v554 = vpack.c.b16 %v520, %v519
        %v555 = vpack.c.b16 %v522, %v521
        %v556 = vpack.c.b16 %v524, %v523
        %589 = vmatpush.bf16.xpose.msra.mxu0 %v532
        %590 = vmatpush.bf16.xpose.msra.mxu0 %v531
        %591 = vmatpush.bf16.xpose.msra.mxu0 %v530
        %592 = vmatpush.bf16.xpose.msra.mxu0 %v529
        %593 = vmatpush.bf16.xpose.msra.mxu0 %v528
        %594 = vmatpush.bf16.xpose.msra.mxu0 %v527
        %595 = vmatpush.bf16.xpose.msra.mxu0 %v526
        %596 = vmatpush.bf16.xpose.msra.mxu0 %v525
        %597 = vmatmul.bf16.gmra.mxu0 %v381
        %v598 = vpop.f32.mrf.mxu0
        %v599 = vadd.f32 0.0, %v598
        %v600 = vpop.f32.mrf.mxu0
        %v601 = vadd.f32 0.0, %v600
        %602 = vmatmul.bf16.gmra.mxu0 %v382
        %v603 = vpop.f32.mrf.mxu0
        %v604 = vadd.f32 0.0, %v603
        %v605 = vpop.f32.mrf.mxu0
        %v606 = vadd.f32 0.0, %v605
        %607 = vmatmul.bf16.gmra.mxu0 %v383
        %v608 = vpop.f32.mrf.mxu0
        %v609 = vadd.f32 0.0, %v608
        %v610 = vpop.f32.mrf.mxu0
        %v611 = vadd.f32 0.0, %v610
        %612 = vmatmul.bf16.gmra.mxu0 %v384
        %v613 = vpop.f32.mrf.mxu0
        %v614 = vadd.f32 0.0, %v613
        %v615 = vpop.f32.mrf.mxu0
        %v616 = vadd.f32 0.0, %v615
        %617 = vmatmul.bf16.gmra.mxu0 %v385
        %v618 = vpop.f32.mrf.mxu0
        %v619 = vadd.f32 0.0, %v618
        %v620 = vpop.f32.mrf.mxu0
        %v621 = vadd.f32 0.0, %v620
        %622 = vmatmul.bf16.gmra.mxu0 %v386
        %v623 = vpop.f32.mrf.mxu0
        %v624 = vadd.f32 0.0, %v623
        %v625 = vpop.f32.mrf.mxu0
        %v626 = vadd.f32 0.0, %v625
        %627 = vmatmul.bf16.gmra.mxu0 %v387
        %v628 = vpop.f32.mrf.mxu0
        %v629 = vadd.f32 0.0, %v628
        %v630 = vpop.f32.mrf.mxu0
        %v631 = vadd.f32 0.0, %v630
        %632 = vmatmul.bf16.gmra.mxu0 %v388
        %v633 = vpop.f32.mrf.mxu0
        %v634 = vadd.f32 0.0, %v633
        %v635 = vpop.f32.mrf.mxu0
        %v636 = vadd.f32 0.0, %v635
        %637 = vdwg.mxu0
        %638 = vmatpush.bf16.xpose.msra.mxu0 %v540
        %639 = vmatpush.bf16.xpose.msra.mxu0 %v539
        %640 = vmatpush.bf16.xpose.msra.mxu0 %v538
        %641 = vmatpush.bf16.xpose.msra.mxu0 %v537
        %642 = vmatpush.bf16.xpose.msra.mxu0 %v536
        %643 = vmatpush.bf16.xpose.msra.mxu0 %v535
        %644 = vmatpush.bf16.xpose.msra.mxu0 %v534
        %645 = vmatpush.bf16.xpose.msra.mxu0 %v533
        %646 = vmatmul.bf16.gmra.mxu0 %v381
        %v647 = vpop.f32.mrf.mxu0
        %v648 = vadd.f32 0.0, %v647
        %v649 = vpop.f32.mrf.mxu0
        %v650 = vadd.f32 0.0, %v649
        %651 = vmatmul.bf16.gmra.mxu0 %v382
        %v652 = vpop.f32.mrf.mxu0
        %v653 = vadd.f32 0.0, %v652
        %v654 = vpop.f32.mrf.mxu0
        %v655 = vadd.f32 0.0, %v654
        %656 = vmatmul.bf16.gmra.mxu0 %v383
        %v657 = vpop.f32.mrf.mxu0
        %v658 = vadd.f32 0.0, %v657
        %v659 = vpop.f32.mrf.mxu0
        %v660 = vadd.f32 0.0, %v659
        %661 = vmatmul.bf16.gmra.mxu0 %v384
        %v662 = vpop.f32.mrf.mxu0
        %v663 = vadd.f32 0.0, %v662
        %v664 = vpop.f32.mrf.mxu0
        %v665 = vadd.f32 0.0, %v664
        %666 = vmatmul.bf16.gmra.mxu0 %v385
        %v667 = vpop.f32.mrf.mxu0
        %v668 = vadd.f32 0.0, %v667
        %v669 = vpop.f32.mrf.mxu0
        %v670 = vadd.f32 0.0, %v669
        %671 = vmatmul.bf16.gmra.mxu0 %v386
        %v672 = vpop.f32.mrf.mxu0
        %v673 = vadd.f32 0.0, %v672
        %v674 = vpop.f32.mrf.mxu0
        %v675 = vadd.f32 0.0, %v674
        %676 = vmatmul.bf16.gmra.mxu0 %v387
        %v677 = vpop.f32.mrf.mxu0
        %v678 = vadd.f32 0.0, %v677
        %v679 = vpop.f32.mrf.mxu0
        %v680 = vadd.f32 0.0, %v679
        %681 = vmatmul.bf16.gmra.mxu0 %v388
        %v682 = vpop.f32.mrf.mxu0
        %v683 = vadd.f32 0.0, %v682
        %v684 = vpop.f32.mrf.mxu0
        %v685 = vadd.f32 0.0, %v684
        %686 = vdwg.mxu0
        %687 = vmatpush.bf16.xpose.msra.mxu0 %v548
        %688 = vmatpush.bf16.xpose.msra.mxu0 %v547
        %689 = vmatpush.bf16.xpose.msra.mxu0 %v546
        %690 = vmatpush.bf16.xpose.msra.mxu0 %v545
        %691 = vmatpush.bf16.xpose.msra.mxu0 %v544
        %692 = vmatpush.bf16.xpose.msra.mxu0 %v543
        %693 = vmatpush.bf16.xpose.msra.mxu0 %v542
        %694 = vmatpush.bf16.xpose.msra.mxu0 %v541
        %695 = vmatmul.bf16.gmra.mxu0 %v381
        %v696 = vpop.f32.mrf.mxu0
        %v697 = vadd.f32 0.0, %v696
        %v698 = vpop.f32.mrf.mxu0
        %v699 = vadd.f32 0.0, %v698
        %700 = vmatmul.bf16.gmra.mxu0 %v382
        %v701 = vpop.f32.mrf.mxu0
        %v702 = vadd.f32 0.0, %v701
        %v703 = vpop.f32.mrf.mxu0
        %v704 = vadd.f32 0.0, %v703
        %705 = vmatmul.bf16.gmra.mxu0 %v383
        %v706 = vpop.f32.mrf.mxu0
        %v707 = vadd.f32 0.0, %v706
        %v708 = vpop.f32.mrf.mxu0
        %v709 = vadd.f32 0.0, %v708
        %710 = vmatmul.bf16.gmra.mxu0 %v384
        %v711 = vpop.f32.mrf.mxu0
        %v712 = vadd.f32 0.0, %v711
        %v713 = vpop.f32.mrf.mxu0
        %v714 = vadd.f32 0.0, %v713
        %715 = vmatmul.bf16.gmra.mxu0 %v385
        %v716 = vpop.f32.mrf.mxu0
        %v717 = vadd.f32 0.0, %v716
        %v718 = vpop.f32.mrf.mxu0
        %v719 = vadd.f32 0.0, %v718
        %720 = vmatmul.bf16.gmra.mxu0 %v386
        %v721 = vpop.f32.mrf.mxu0
        %v722 = vadd.f32 0.0, %v721
        %v723 = vpop.f32.mrf.mxu0
        %v724 = vadd.f32 0.0, %v723
        %725 = vmatmul.bf16.gmra.mxu0 %v387
        %v726 = vpop.f32.mrf.mxu0
        %v727 = vadd.f32 0.0, %v726
        %v728 = vpop.f32.mrf.mxu0
        %v729 = vadd.f32 0.0, %v728
        %730 = vmatmul.bf16.gmra.mxu0 %v388
        %v731 = vpop.f32.mrf.mxu0
        %v732 = vadd.f32 0.0, %v731
        %v733 = vpop.f32.mrf.mxu0
        %v734 = vadd.f32 0.0, %v733
        %735 = vdwg.mxu0
        %736 = vmatpush.bf16.xpose.msra.mxu0 %v556
        %737 = vmatpush.bf16.xpose.msra.mxu0 %v555
        %738 = vmatpush.bf16.xpose.msra.mxu0 %v554
        %739 = vmatpush.bf16.xpose.msra.mxu0 %v553
        %740 = vmatpush.bf16.xpose.msra.mxu0 %v552
        %741 = vmatpush.bf16.xpose.msra.mxu0 %v551
        %742 = vmatpush.bf16.xpose.msra.mxu0 %v550
        %743 = vmatpush.bf16.xpose.msra.mxu0 %v549
        %744 = vmatmul.bf16.gmra.mxu0 %v381
        %v745 = vpop.f32.mrf.mxu0
        %v746 = vadd.f32 0.0, %v745
        %v747 = vpop.f32.mrf.mxu0
        %v748 = vadd.f32 0.0, %v747
        %749 = vmatmul.bf16.gmra.mxu0 %v382
        %v750 = vpop.f32.mrf.mxu0
        %v751 = vadd.f32 0.0, %v750
        %v752 = vpop.f32.mrf.mxu0
        %v753 = vadd.f32 0.0, %v752
        %754 = vmatmul.bf16.gmra.mxu0 %v383
        %v755 = vpop.f32.mrf.mxu0
        %v756 = vadd.f32 0.0, %v755
        %v757 = vpop.f32.mrf.mxu0
        %v758 = vadd.f32 0.0, %v757
        %759 = vmatmul.bf16.gmra.mxu0 %v384
        %v760 = vpop.f32.mrf.mxu0
        %v761 = vadd.f32 0.0, %v760
        %v762 = vpop.f32.mrf.mxu0
        %v763 = vadd.f32 0.0, %v762
        %764 = vmatmul.bf16.gmra.mxu0 %v385
        %v765 = vpop.f32.mrf.mxu0
        %v766 = vadd.f32 0.0, %v765
        %v767 = vpop.f32.mrf.mxu0
        %v768 = vadd.f32 0.0, %v767
        %769 = vmatmul.bf16.gmra.mxu0 %v386
        %v770 = vpop.f32.mrf.mxu0
        %v771 = vadd.f32 0.0, %v770
        %v772 = vpop.f32.mrf.mxu0
        %v773 = vadd.f32 0.0, %v772
        %774 = vmatmul.bf16.gmra.mxu0 %v387
        %v775 = vpop.f32.mrf.mxu0
        %v776 = vadd.f32 0.0, %v775
        %v777 = vpop.f32.mrf.mxu0
        %v778 = vadd.f32 0.0, %v777
        %779 = vmatmul.bf16.gmra.mxu0 %v388
        %v780 = vpop.f32.mrf.mxu0
        %v781 = vadd.f32 0.0, %v780
        %v782 = vpop.f32.mrf.mxu0
        %v783 = vadd.f32 0.0, %v782
        %784 = vdwg.mxu0
        %v785 = vmax.f32 %v599, %v648
        %v786 = vmax.f32 %v785, %v697
        %v787 = vmax.f32 %v786, %v746
        %788 = vmax.xlane.f32.xlu0 %v787
        %v789 = vpop.xlane.xlu0 %788
        %v790 = vmax.f32 %v601, %v650
        %v791 = vmax.f32 %v790, %v699
        %v792 = vmax.f32 %v791, %v748
        %793 = vmax.xlane.f32.xlu0 %v792
        %v794 = vpop.xlane.xlu0 %793
        %v795 = vmax.f32 %v604, %v653
        %v796 = vmax.f32 %v795, %v702
        %v797 = vmax.f32 %v796, %v751
        %798 = vmax.xlane.f32.xlu0 %v797
        %v799 = vpop.xlane.xlu0 %798
        %v800 = vmax.f32 %v606, %v655
        %v801 = vmax.f32 %v800, %v704
        %v802 = vmax.f32 %v801, %v753
        %803 = vmax.xlane.f32.xlu0 %v802
        %v804 = vpop.xlane.xlu0 %803
        %v805 = vmax.f32 %v609, %v658
        %v806 = vmax.f32 %v805, %v707
        %v807 = vmax.f32 %v806, %v756
        %808 = vmax.xlane.f32.xlu0 %v807
        %v809 = vpop.xlane.xlu0 %808
        %v810 = vmax.f32 %v611, %v660
        %v811 = vmax.f32 %v810, %v709
        %v812 = vmax.f32 %v811, %v758
        %813 = vmax.xlane.f32.xlu0 %v812
        %v814 = vpop.xlane.xlu0 %813
        %v815 = vmax.f32 %v614, %v663
        %v816 = vmax.f32 %v815, %v712
        %v817 = vmax.f32 %v816, %v761
        %818 = vmax.xlane.f32.xlu0 %v817
        %v819 = vpop.xlane.xlu0 %818
        %v820 = vmax.f32 %v616, %v665
        %v821 = vmax.f32 %v820, %v714
        %v822 = vmax.f32 %v821, %v763
        %823 = vmax.xlane.f32.xlu0 %v822
        %v824 = vpop.xlane.xlu0 %823
        %v825 = vmax.f32 %v619, %v668
        %v826 = vmax.f32 %v825, %v717
        %v827 = vmax.f32 %v826, %v766
        %828 = vmax.xlane.f32.xlu0 %v827
        %v829 = vpop.xlane.xlu0 %828
        %v830 = vmax.f32 %v621, %v670
        %v831 = vmax.f32 %v830, %v719
        %v832 = vmax.f32 %v831, %v768
        %833 = vmax.xlane.f32.xlu0 %v832
        %v834 = vpop.xlane.xlu0 %833
        %v835 = vmax.f32 %v624, %v673
        %v836 = vmax.f32 %v835, %v722
        %v837 = vmax.f32 %v836, %v771
        %838 = vmax.xlane.f32.xlu0 %v837
        %v839 = vpop.xlane.xlu0 %838
        %v840 = vmax.f32 %v626, %v675
        %v841 = vmax.f32 %v840, %v724
        %v842 = vmax.f32 %v841, %v773
        %843 = vmax.xlane.f32.xlu0 %v842
        %v844 = vpop.xlane.xlu0 %843
        %v845 = vmax.f32 %v629, %v678
        %v846 = vmax.f32 %v845, %v727
        %v847 = vmax.f32 %v846, %v776
        %848 = vmax.xlane.f32.xlu0 %v847
        %v849 = vpop.xlane.xlu0 %848
        %v850 = vmax.f32 %v631, %v680
        %v851 = vmax.f32 %v850, %v729
        %v852 = vmax.f32 %v851, %v778
        %853 = vmax.xlane.f32.xlu0 %v852
        %v854 = vpop.xlane.xlu0 %853
        %v855 = vmax.f32 %v634, %v683
        %v856 = vmax.f32 %v855, %v732
        %v857 = vmax.f32 %v856, %v781
        %858 = vmax.xlane.f32.xlu0 %v857
        %v859 = vpop.xlane.xlu0 %858
        %v860 = vmax.f32 %v636, %v685
        %v861 = vmax.f32 %v860, %v734
        %v862 = vmax.f32 %v861, %v783
        %863 = vmax.xlane.f32.xlu0 %v862
        %v864 = vpop.xlane.xlu0 %863
        %v865 = vsub.f32 %v599, %v789
        %v866 = vsub.f32 %v648, %v789
        %v867 = vsub.f32 %v697, %v789
        %v868 = vsub.f32 %v746, %v789
        %v869 = vsub.f32 %v601, %v794
        %v870 = vsub.f32 %v650, %v794
        %v871 = vsub.f32 %v699, %v794
        %v872 = vsub.f32 %v748, %v794
        %v873 = vsub.f32 %v604, %v799
        %v874 = vsub.f32 %v653, %v799
        %v875 = vsub.f32 %v702, %v799
        %v876 = vsub.f32 %v751, %v799
        %v877 = vsub.f32 %v606, %v804
        %v878 = vsub.f32 %v655, %v804
        %v879 = vsub.f32 %v704, %v804
        %v880 = vsub.f32 %v753, %v804
        %v881 = vsub.f32 %v609, %v809
        %v882 = vsub.f32 %v658, %v809
        %v883 = vsub.f32 %v707, %v809
        %v884 = vsub.f32 %v756, %v809
        %v885 = vsub.f32 %v611, %v814
        %v886 = vsub.f32 %v660, %v814
        %v887 = vsub.f32 %v709, %v814
        %v888 = vsub.f32 %v758, %v814
        %v889 = vsub.f32 %v614, %v819
        %v890 = vsub.f32 %v663, %v819
        %v891 = vsub.f32 %v712, %v819
        %v892 = vsub.f32 %v761, %v819
        %v893 = vsub.f32 %v616, %v824
        %v894 = vsub.f32 %v665, %v824
        %v895 = vsub.f32 %v714, %v824
        %v896 = vsub.f32 %v763, %v824
        %v897 = vsub.f32 %v619, %v829
        %v898 = vsub.f32 %v668, %v829
        %v899 = vsub.f32 %v717, %v829
        %v900 = vsub.f32 %v766, %v829
        %v901 = vsub.f32 %v621, %v834
        %v902 = vsub.f32 %v670, %v834
        %v903 = vsub.f32 %v719, %v834
        %v904 = vsub.f32 %v768, %v834
        %v905 = vsub.f32 %v624, %v839
        %v906 = vsub.f32 %v673, %v839
        %v907 = vsub.f32 %v722, %v839
        %v908 = vsub.f32 %v771, %v839
        %v909 = vsub.f32 %v626, %v844
        %v910 = vsub.f32 %v675, %v844
        %v911 = vsub.f32 %v724, %v844
        %v912 = vsub.f32 %v773, %v844
        %v913 = vsub.f32 %v629, %v849
        %v914 = vsub.f32 %v678, %v849
        %v915 = vsub.f32 %v727, %v849
        %v916 = vsub.f32 %v776, %v849
        %v917 = vsub.f32 %v631, %v854
        %v918 = vsub.f32 %v680, %v854
        %v919 = vsub.f32 %v729, %v854
        %v920 = vsub.f32 %v778, %v854
        %v921 = vsub.f32 %v634, %v859
        %v922 = vsub.f32 %v683, %v859
        %v923 = vsub.f32 %v732, %v859
        %v924 = vsub.f32 %v781, %v859
        %v925 = vsub.f32 %v636, %v864
        %v926 = vsub.f32 %v685, %v864
        %v927 = vsub.f32 %v734, %v864
        %v928 = vsub.f32 %v783, %v864
        %v929 = vmul.f32 %v865, 0.125
        %v930 = vmul.f32 %v866, 0.125
        %v931 = vmul.f32 %v867, 0.125
        %v932 = vmul.f32 %v868, 0.125
        %v933 = vmul.f32 %v869, 0.125
        %v934 = vmul.f32 %v870, 0.125
        %v935 = vmul.f32 %v871, 0.125
        %v936 = vmul.f32 %v872, 0.125
        %v937 = vmul.f32 %v873, 0.125
        %v938 = vmul.f32 %v874, 0.125
        %v939 = vmul.f32 %v875, 0.125
        %v940 = vmul.f32 %v876, 0.125
        %v941 = vmul.f32 %v877, 0.125
        %v942 = vmul.f32 %v878, 0.125
        %v943 = vmul.f32 %v879, 0.125
        %v944 = vmul.f32 %v880, 0.125
        %v945 = vmul.f32 %v881, 0.125
        %v946 = vmul.f32 %v882, 0.125
        %v947 = vmul.f32 %v883, 0.125
        %v948 = vmul.f32 %v884, 0.125
        %v949 = vmul.f32 %v885, 0.125
        %v950 = vmul.f32 %v886, 0.125
        %v951 = vmul.f32 %v887, 0.125
        %v952 = vmul.f32 %v888, 0.125
        %v953 = vmul.f32 %v889, 0.125
        %v954 = vmul.f32 %v890, 0.125
        %v955 = vmul.f32 %v891, 0.125
        %v956 = vmul.f32 %v892, 0.125
        %v957 = vmul.f32 %v893, 0.125
        %v958 = vmul.f32 %v894, 0.125
        %v959 = vmul.f32 %v895, 0.125
        %v960 = vmul.f32 %v896, 0.125
        %v961 = vmul.f32 %v897, 0.125
        %v962 = vmul.f32 %v898, 0.125
        %v963 = vmul.f32 %v899, 0.125
        %v964 = vmul.f32 %v900, 0.125
        %v965 = vmul.f32 %v901, 0.125
        %v966 = vmul.f32 %v902, 0.125
        %v967 = vmul.f32 %v903, 0.125
        %v968 = vmul.f32 %v904, 0.125
        %v969 = vmul.f32 %v905, 0.125
        %v970 = vmul.f32 %v906, 0.125
        %v971 = vmul.f32 %v907, 0.125
        %v972 = vmul.f32 %v908, 0.125
        %v973 = vmul.f32 %v909, 0.125
        %v974 = vmul.f32 %v910, 0.125
        %v975 = vmul.f32 %v911, 0.125
        %v976 = vmul.f32 %v912, 0.125
        %v977 = vmul.f32 %v913, 0.125
        %v978 = vmul.f32 %v914, 0.125
        %v979 = vmul.f32 %v915, 0.125
        %v980 = vmul.f32 %v916, 0.125
        %v981 = vmul.f32 %v917, 0.125
        %v982 = vmul.f32 %v918, 0.125
        %v983 = vmul.f32 %v919, 0.125
        %v984 = vmul.f32 %v920, 0.125
        %v985 = vmul.f32 %v921, 0.125
        %v986 = vmul.f32 %v922, 0.125
        %v987 = vmul.f32 %v923, 0.125
        %v988 = vmul.f32 %v924, 0.125
        %v989 = vmul.f32 %v925, 0.125
        %v990 = vmul.f32 %v926, 0.125
        %v991 = vmul.f32 %v927, 0.125
        %v992 = vmul.f32 %v928, 0.125
        %v993 = vmul.f32 %v929, 1.442695
        %v994 = vpow.pop %v993
        %v995 = vmul.f32 %v930, 1.442695
        %v996 = vpow.pop %v995
        %v997 = vmul.f32 %v931, 1.442695
        %v998 = vpow.pop %v997
        %v999 = vmul.f32 %v932, 1.442695
        %v1000 = vpow.pop %v999
        %v1001 = vmul.f32 %v933, 1.442695
        %v1002 = vpow.pop %v1001
        %v1003 = vmul.f32 %v934, 1.442695
        %v1004 = vpow.pop %v1003
        %v1005 = vmul.f32 %v935, 1.442695
        %v1006 = vpow.pop %v1005
        %v1007 = vmul.f32 %v936, 1.442695
        %v1008 = vpow.pop %v1007
        %v1009 = vmul.f32 %v937, 1.442695
        %v1010 = vpow.pop %v1009
        %v1011 = vmul.f32 %v938, 1.442695
        %v1012 = vpow.pop %v1011
        %v1013 = vmul.f32 %v939, 1.442695
        %v1014 = vpow.pop %v1013
        %v1015 = vmul.f32 %v940, 1.442695
        %v1016 = vpow.pop %v1015
        %v1017 = vmul.f32 %v941, 1.442695
        %v1018 = vpow.pop %v1017
        %v1019 = vmul.f32 %v942, 1.442695
        %v1020 = vpow.pop %v1019
        %v1021 = vmul.f32 %v943, 1.442695
        %v1022 = vpow.pop %v1021
        %v1023 = vmul.f32 %v944, 1.442695
        %v1024 = vpow.pop %v1023
        %v1025 = vmul.f32 %v945, 1.442695
        %v1026 = vpow.pop %v1025
        %v1027 = vmul.f32 %v946, 1.442695
        %v1028 = vpow.pop %v1027
        %v1029 = vmul.f32 %v947, 1.442695
        %v1030 = vpow.pop %v1029
        %v1031 = vmul.f32 %v948, 1.442695
        %v1032 = vpow.pop %v1031
        %v1033 = vmul.f32 %v949, 1.442695
        %v1034 = vpow.pop %v1033
        %v1035 = vmul.f32 %v950, 1.442695
        %v1036 = vpow.pop %v1035
        %v1037 = vmul.f32 %v951, 1.442695
        %v1038 = vpow.pop %v1037
        %v1039 = vmul.f32 %v952, 1.442695
        %v1040 = vpow.pop %v1039
        %v1041 = vmul.f32 %v953, 1.442695
        %v1042 = vpow.pop %v1041
        %v1043 = vmul.f32 %v954, 1.442695
        %v1044 = vpow.pop %v1043
        %v1045 = vmul.f32 %v955, 1.442695
        %v1046 = vpow.pop %v1045
        %v1047 = vmul.f32 %v956, 1.442695
        %v1048 = vpow.pop %v1047
        %v1049 = vmul.f32 %v957, 1.442695
        %v1050 = vpow.pop %v1049
        %v1051 = vmul.f32 %v958, 1.442695
        %v1052 = vpow.pop %v1051
        %v1053 = vmul.f32 %v959, 1.442695
        %v1054 = vpow.pop %v1053
        %v1055 = vmul.f32 %v960, 1.442695
        %v1056 = vpow.pop %v1055
        %v1057 = vmul.f32 %v961, 1.442695
        %v1058 = vpow.pop %v1057
        %v1059 = vmul.f32 %v962, 1.442695
        %v1060 = vpow.pop %v1059
        %v1061 = vmul.f32 %v963, 1.442695
        %v1062 = vpow.pop %v1061
        %v1063 = vmul.f32 %v964, 1.442695
        %v1064 = vpow.pop %v1063
        %v1065 = vmul.f32 %v965, 1.442695
        %v1066 = vpow.pop %v1065
        %v1067 = vmul.f32 %v966, 1.442695
        %v1068 = vpow.pop %v1067
        %v1069 = vmul.f32 %v967, 1.442695
        %v1070 = vpow.pop %v1069
        %v1071 = vmul.f32 %v968, 1.442695
        %v1072 = vpow.pop %v1071
        %v1073 = vmul.f32 %v969, 1.442695
        %v1074 = vpow.pop %v1073
        %v1075 = vmul.f32 %v970, 1.442695
        %v1076 = vpow.pop %v1075
        %v1077 = vmul.f32 %v971, 1.442695
        %v1078 = vpow.pop %v1077
        %v1079 = vmul.f32 %v972, 1.442695
        %v1080 = vpow.pop %v1079
        %v1081 = vmul.f32 %v973, 1.442695
        %v1082 = vpow.pop %v1081
        %v1083 = vmul.f32 %v974, 1.442695
        %v1084 = vpow.pop %v1083
        %v1085 = vmul.f32 %v975, 1.442695
        %v1086 = vpow.pop %v1085
        %v1087 = vmul.f32 %v976, 1.442695
        %v1088 = vpow.pop %v1087
        %v1089 = vmul.f32 %v977, 1.442695
        %v1090 = vpow.pop %v1089
        %v1091 = vmul.f32 %v978, 1.442695
        %v1092 = vpow.pop %v1091
        %v1093 = vmul.f32 %v979, 1.442695
        %v1094 = vpow.pop %v1093
        %v1095 = vmul.f32 %v980, 1.442695
        %v1096 = vpow.pop %v1095
        %v1097 = vmul.f32 %v981, 1.442695
        %v1098 = vpow.pop %v1097
        %v1099 = vmul.f32 %v982, 1.442695
        %v1100 = vpow.pop %v1099
        %v1101 = vmul.f32 %v983, 1.442695
        %v1102 = vpow.pop %v1101
        %v1103 = vmul.f32 %v984, 1.442695
        %v1104 = vpow.pop %v1103
        %v1105 = vmul.f32 %v985, 1.442695
        %v1106 = vpow.pop %v1105
        %v1107 = vmul.f32 %v986, 1.442695
        %v1108 = vpow.pop %v1107
        %v1109 = vmul.f32 %v987, 1.442695
        %v1110 = vpow.pop %v1109
        %v1111 = vmul.f32 %v988, 1.442695
        %v1112 = vpow.pop %v1111
        %v1113 = vmul.f32 %v989, 1.442695
        %v1114 = vpow.pop %v1113
        %v1115 = vmul.f32 %v990, 1.442695
        %v1116 = vpow.pop %v1115
        %v1117 = vmul.f32 %v991, 1.442695
        %v1118 = vpow.pop %v1117
        %v1119 = vmul.f32 %v992, 1.442695
        %v1120 = vpow.pop %v1119
        %v1121 = vadd.f32 %v994, %v996
        %v1122 = vadd.f32 %v1121, %v998
        %v1123 = vadd.f32 %v1122, %v1000
        %1124 = vadd.xlane.f32.xlu0 %v1123
        %v1125 = vpop.xlane.xlu0 %1124
        %v1126 = vadd.f32 %v1002, %v1004
        %v1127 = vadd.f32 %v1126, %v1006
        %v1128 = vadd.f32 %v1127, %v1008
        %1129 = vadd.xlane.f32.xlu0 %v1128
        %v1130 = vpop.xlane.xlu0 %1129
        %v1131 = vadd.f32 %v1010, %v1012
        %v1132 = vadd.f32 %v1131, %v1014
        %v1133 = vadd.f32 %v1132, %v1016
        %1134 = vadd.xlane.f32.xlu0 %v1133
        %v1135 = vpop.xlane.xlu0 %1134
        %v1136 = vadd.f32 %v1018, %v1020
        %v1137 = vadd.f32 %v1136, %v1022
        %v1138 = vadd.f32 %v1137, %v1024
        %1139 = vadd.xlane.f32.xlu0 %v1138
        %v1140 = vpop.xlane.xlu0 %1139
        %v1141 = vadd.f32 %v1026, %v1028
        %v1142 = vadd.f32 %v1141, %v1030
        %v1143 = vadd.f32 %v1142, %v1032
        %1144 = vadd.xlane.f32.xlu0 %v1143
        %v1145 = vpop.xlane.xlu0 %1144
        %v1146 = vadd.f32 %v1034, %v1036
        %v1147 = vadd.f32 %v1146, %v1038
        %v1148 = vadd.f32 %v1147, %v1040
        %1149 = vadd.xlane.f32.xlu0 %v1148
        %v1150 = vpop.xlane.xlu0 %1149
        %v1151 = vadd.f32 %v1042, %v1044
        %v1152 = vadd.f32 %v1151, %v1046
        %v1153 = vadd.f32 %v1152, %v1048
        %1154 = vadd.xlane.f32.xlu0 %v1153
        %v1155 = vpop.xlane.xlu0 %1154
        %v1156 = vadd.f32 %v1050, %v1052
        %v1157 = vadd.f32 %v1156, %v1054
        %v1158 = vadd.f32 %v1157, %v1056
        %1159 = vadd.xlane.f32.xlu0 %v1158
        %v1160 = vpop.xlane.xlu0 %1159
        %v1161 = vadd.f32 %v1058, %v1060
        %v1162 = vadd.f32 %v1161, %v1062
        %v1163 = vadd.f32 %v1162, %v1064
        %1164 = vadd.xlane.f32.xlu0 %v1163
        %v1165 = vpop.xlane.xlu0 %1164
        %v1166 = vadd.f32 %v1066, %v1068
        %v1167 = vadd.f32 %v1166, %v1070
        %v1168 = vadd.f32 %v1167, %v1072
        %1169 = vadd.xlane.f32.xlu0 %v1168
        %v1170 = vpop.xlane.xlu0 %1169
        %v1171 = vadd.f32 %v1074, %v1076
        %v1172 = vadd.f32 %v1171, %v1078
        %v1173 = vadd.f32 %v1172, %v1080
        %1174 = vadd.xlane.f32.xlu0 %v1173
        %v1175 = vpop.xlane.xlu0 %1174
        %v1176 = vadd.f32 %v1082, %v1084
        %v1177 = vadd.f32 %v1176, %v1086
        %v1178 = vadd.f32 %v1177, %v1088
        %1179 = vadd.xlane.f32.xlu0 %v1178
        %v1180 = vpop.xlane.xlu0 %1179
        %v1181 = vadd.f32 %v1090, %v1092
        %v1182 = vadd.f32 %v1181, %v1094
        %v1183 = vadd.f32 %v1182, %v1096
        %1184 = vadd.xlane.f32.xlu0 %v1183
        %v1185 = vpop.xlane.xlu0 %1184
        %v1186 = vadd.f32 %v1098, %v1100
        %v1187 = vadd.f32 %v1186, %v1102
        %v1188 = vadd.f32 %v1187, %v1104
        %1189 = vadd.xlane.f32.xlu0 %v1188
        %v1190 = vpop.xlane.xlu0 %1189
        %v1191 = vadd.f32 %v1106, %v1108
        %v1192 = vadd.f32 %v1191, %v1110
        %v1193 = vadd.f32 %v1192, %v1112
        %1194 = vadd.xlane.f32.xlu0 %v1193
        %v1195 = vpop.xlane.xlu0 %1194
        %v1196 = vadd.f32 %v1114, %v1116
        %v1197 = vadd.f32 %v1196, %v1118
        %v1198 = vadd.f32 %v1197, %v1120
        %1199 = vadd.xlane.f32.xlu0 %v1198
        %v1200 = vpop.xlane.xlu0 %1199
        %v1201 = vrcp.pop %v1125
        %v1202 = vrcp.pop %v1130
        %v1203 = vrcp.pop %v1135
        %v1204 = vrcp.pop %v1140
        %v1205 = vrcp.pop %v1145
        %v1206 = vrcp.pop %v1150
        %v1207 = vrcp.pop %v1155
        %v1208 = vrcp.pop %v1160
        %v1209 = vrcp.pop %v1165
        %v1210 = vrcp.pop %v1170
        %v1211 = vrcp.pop %v1175
        %v1212 = vrcp.pop %v1180
        %v1213 = vrcp.pop %v1185
        %v1214 = vrcp.pop %v1190
        %v1215 = vrcp.pop %v1195
        %v1216 = vrcp.pop %v1200
        %v1217 = vpack.c.bf16 %v1002, %v994
        %v1218 = vpack.c.bf16 %v1004, %v996
        %v1219 = vpack.c.bf16 %v1006, %v998
        %v1220 = vpack.c.bf16 %v1008, %v1000
        %v1221 = vpack.c.bf16 %v1018, %v1010
        %v1222 = vpack.c.bf16 %v1020, %v1012
        %v1223 = vpack.c.bf16 %v1022, %v1014
        %v1224 = vpack.c.bf16 %v1024, %v1016
        %v1225 = vpack.c.bf16 %v1034, %v1026
        %v1226 = vpack.c.bf16 %v1036, %v1028
        %v1227 = vpack.c.bf16 %v1038, %v1030
        %v1228 = vpack.c.bf16 %v1040, %v1032
        %v1229 = vpack.c.bf16 %v1050, %v1042
        %v1230 = vpack.c.bf16 %v1052, %v1044
        %v1231 = vpack.c.bf16 %v1054, %v1046
        %v1232 = vpack.c.bf16 %v1056, %v1048
        %v1233 = vpack.c.bf16 %v1066, %v1058
        %v1234 = vpack.c.bf16 %v1068, %v1060
        %v1235 = vpack.c.bf16 %v1070, %v1062
        %v1236 = vpack.c.bf16 %v1072, %v1064
        %v1237 = vpack.c.bf16 %v1082, %v1074
        %v1238 = vpack.c.bf16 %v1084, %v1076
        %v1239 = vpack.c.bf16 %v1086, %v1078
        %v1240 = vpack.c.bf16 %v1088, %v1080
        %v1241 = vpack.c.bf16 %v1098, %v1090
        %v1242 = vpack.c.bf16 %v1100, %v1092
        %v1243 = vpack.c.bf16 %v1102, %v1094
        %v1244 = vpack.c.bf16 %v1104, %v1096
        %v1245 = vpack.c.bf16 %v1114, %v1106
        %v1246 = vpack.c.bf16 %v1116, %v1108
        %v1247 = vpack.c.bf16 %v1118, %v1110
        %v1248 = vpack.c.bf16 %v1120, %v1112
        %v1249 = vld [vmem:[#allocation7] sm:$0xff]
        %v1250 = vld [vmem:[#allocation7 + $0x8] sm:$0xff]
        %v1251 = vld [vmem:[#allocation7 + $0x10] sm:$0xff]
        %v1252 = vld [vmem:[#allocation7 + $0x18] sm:$0xff]
        %v1253 = vld [vmem:[#allocation7 + $0x20] sm:$0xff]
        %v1254 = vld [vmem:[#allocation7 + $0x28] sm:$0xff]
        %v1255 = vld [vmem:[#allocation7 + $0x30] sm:$0xff]
        %v1256 = vld [vmem:[#allocation7 + $0x38] sm:$0xff]
        %v1257 = vld [vmem:[#allocation7 + $0x40] sm:$0xff]
        %v1258 = vld [vmem:[#allocation7 + $0x48] sm:$0xff]
        %v1259 = vld [vmem:[#allocation7 + $0x50] sm:$0xff]
        %v1260 = vld [vmem:[#allocation7 + $0x58] sm:$0xff]
        %v1261 = vld [vmem:[#allocation7 + $0x60] sm:$0xff]
        %v1262 = vld [vmem:[#allocation7 + $0x68] sm:$0xff]
        %v1263 = vld [vmem:[#allocation7 + $0x70] sm:$0xff]
        %v1264 = vld [vmem:[#allocation7 + $0x78] sm:$0xff]
        %v1265 = vld [vmem:[#allocation7 + $0x80] sm:$0xff]
        %v1266 = vld [vmem:[#allocation7 + $0x88] sm:$0xff]
        %v1267 = vld [vmem:[#allocation7 + $0x90] sm:$0xff]
        %v1268 = vld [vmem:[#allocation7 + $0x98] sm:$0xff]
        %v1269 = vld [vmem:[#allocation7 + $0xa0] sm:$0xff]
        %v1270 = vld [vmem:[#allocation7 + $0xa8] sm:$0xff]
        %v1271 = vld [vmem:[#allocation7 + $0xb0] sm:$0xff]
        %v1272 = vld [vmem:[#allocation7 + $0xb8] sm:$0xff]
        %v1273 = vld [vmem:[#allocation7 + $0xc0] sm:$0xff]
        %v1274 = vld [vmem:[#allocation7 + $0xc8] sm:$0xff]
        %v1275 = vld [vmem:[#allocation7 + $0xd0] sm:$0xff]
        %v1276 = vld [vmem:[#allocation7 + $0xd8] sm:$0xff]
        %v1277 = vld [vmem:[#allocation7 + $0xe0] sm:$0xff]
        %v1278 = vld [vmem:[#allocation7 + $0xe8] sm:$0xff]
        %v1279 = vld [vmem:[#allocation7 + $0xf0] sm:$0xff]
        %v1280 = vld [vmem:[#allocation7 + $0xf8] sm:$0xff]
        %v1281 = vld [vmem:[#allocation7 + $0x100] sm:$0xff]
        %v1282 = vld [vmem:[#allocation7 + $0x108] sm:$0xff]
        %v1283 = vld [vmem:[#allocation7 + $0x110] sm:$0xff]
        %v1284 = vld [vmem:[#allocation7 + $0x118] sm:$0xff]
        %v1285 = vld [vmem:[#allocation7 + $0x120] sm:$0xff]
        %v1286 = vld [vmem:[#allocation7 + $0x128] sm:$0xff]
        %v1287 = vld [vmem:[#allocation7 + $0x130] sm:$0xff]
        %v1288 = vld [vmem:[#allocation7 + $0x138] sm:$0xff]
        %v1289 = vld [vmem:[#allocation7 + $0x140] sm:$0xff]
        %v1290 = vld [vmem:[#allocation7 + $0x148] sm:$0xff]
        %v1291 = vld [vmem:[#allocation7 + $0x150] sm:$0xff]
        %v1292 = vld [vmem:[#allocation7 + $0x158] sm:$0xff]
        %v1293 = vld [vmem:[#allocation7 + $0x160] sm:$0xff]
        %v1294 = vld [vmem:[#allocation7 + $0x168] sm:$0xff]
        %v1295 = vld [vmem:[#allocation7 + $0x170] sm:$0xff]
        %v1296 = vld [vmem:[#allocation7 + $0x178] sm:$0xff]
        %v1297 = vld [vmem:[#allocation7 + $0x180] sm:$0xff]
        %v1298 = vld [vmem:[#allocation7 + $0x188] sm:$0xff]
        %v1299 = vld [vmem:[#allocation7 + $0x190] sm:$0xff]
        %v1300 = vld [vmem:[#allocation7 + $0x198] sm:$0xff]
        %v1301 = vld [vmem:[#allocation7 + $0x1a0] sm:$0xff]
        %v1302 = vld [vmem:[#allocation7 + $0x1a8] sm:$0xff]
        %v1303 = vld [vmem:[#allocation7 + $0x1b0] sm:$0xff]
        %v1304 = vld [vmem:[#allocation7 + $0x1b8] sm:$0xff]
        %v1305 = vld [vmem:[#allocation7 + $0x1c0] sm:$0xff]
        %v1306 = vld [vmem:[#allocation7 + $0x1c8] sm:$0xff]
        %v1307 = vld [vmem:[#allocation7 + $0x1d0] sm:$0xff]
        %v1308 = vld [vmem:[#allocation7 + $0x1d8] sm:$0xff]
        %v1309 = vld [vmem:[#allocation7 + $0x1e0] sm:$0xff]
        %v1310 = vld [vmem:[#allocation7 + $0x1e8] sm:$0xff]
        %v1311 = vld [vmem:[#allocation7 + $0x1f0] sm:$0xff]
        %v1312 = vld [vmem:[#allocation7 + $0x1f8] sm:$0xff]
        %v1377 = vunpack.c.l.b16 %v1249
        %v1378 = vunpack.c.h.b16 %v1249
        %v1379 = vunpack.c.l.b16 %v1250
        %v1380 = vunpack.c.h.b16 %v1250
        %v1381 = vunpack.c.l.b16 %v1251
        %v1382 = vunpack.c.h.b16 %v1251
        %v1383 = vunpack.c.l.b16 %v1252
        %v1384 = vunpack.c.h.b16 %v1252
        %v1385 = vunpack.c.l.b16 %v1253
        %v1386 = vunpack.c.h.b16 %v1253
        %v1387 = vunpack.c.l.b16 %v1254
        %v1388 = vunpack.c.h.b16 %v1254
        %v1389 = vunpack.c.l.b16 %v1255
        %v1390 = vunpack.c.h.b16 %v1255
        %v1391 = vunpack.c.l.b16 %v1256
        %v1392 = vunpack.c.h.b16 %v1256
        %v1393 = vunpack.c.l.b16 %v1257
        %v1394 = vunpack.c.h.b16 %v1257
        %v1395 = vunpack.c.l.b16 %v1258
        %v1396 = vunpack.c.h.b16 %v1258
        %v1397 = vunpack.c.l.b16 %v1259
        %v1398 = vunpack.c.h.b16 %v1259
        %v1399 = vunpack.c.l.b16 %v1260
        %v1400 = vunpack.c.h.b16 %v1260
        %v1401 = vunpack.c.l.b16 %v1261
        %v1402 = vunpack.c.h.b16 %v1261
        %v1403 = vunpack.c.l.b16 %v1262
        %v1404 = vunpack.c.h.b16 %v1262
        %v1405 = vunpack.c.l.b16 %v1263
        %v1406 = vunpack.c.h.b16 %v1263
        %v1407 = vunpack.c.l.b16 %v1264
        %v1408 = vunpack.c.h.b16 %v1264
        %v1409 = vunpack.c.l.b16 %v1265
        %v1410 = vunpack.c.h.b16 %v1265
        %v1411 = vunpack.c.l.b16 %v1266
        %v1412 = vunpack.c.h.b16 %v1266
        %v1413 = vunpack.c.l.b16 %v1267
        %v1414 = vunpack.c.h.b16 %v1267
        %v1415 = vunpack.c.l.b16 %v1268
        %v1416 = vunpack.c.h.b16 %v1268
        %v1417 = vunpack.c.l.b16 %v1269
        %v1418 = vunpack.c.h.b16 %v1269
        %v1419 = vunpack.c.l.b16 %v1270
        %v1420 = vunpack.c.h.b16 %v1270
        %v1421 = vunpack.c.l.b16 %v1271
        %v1422 = vunpack.c.h.b16 %v1271
        %v1423 = vunpack.c.l.b16 %v1272
        %v1424 = vunpack.c.h.b16 %v1272
        %v1425 = vunpack.c.l.b16 %v1273
        %v1426 = vunpack.c.h.b16 %v1273
        %v1427 = vunpack.c.l.b16 %v1274
        %v1428 = vunpack.c.h.b16 %v1274
        %v1429 = vunpack.c.l.b16 %v1275
        %v1430 = vunpack.c.h.b16 %v1275
        %v1431 = vunpack.c.l.b16 %v1276
        %v1432 = vunpack.c.h.b16 %v1276
        %v1433 = vunpack.c.l.b16 %v1277
        %v1434 = vunpack.c.h.b16 %v1277
        %v1435 = vunpack.c.l.b16 %v1278
        %v1436 = vunpack.c.h.b16 %v1278
        %v1437 = vunpack.c.l.b16 %v1279
        %v1438 = vunpack.c.h.b16 %v1279
        %v1439 = vunpack.c.l.b16 %v1280
        %v1440 = vunpack.c.h.b16 %v1280
        %v1441 = vunpack.c.l.b16 %v1281
        %v1442 = vunpack.c.h.b16 %v1281
        %v1443 = vunpack.c.l.b16 %v1282
        %v1444 = vunpack.c.h.b16 %v1282
        %v1445 = vunpack.c.l.b16 %v1283
        %v1446 = vunpack.c.h.b16 %v1283
        %v1447 = vunpack.c.l.b16 %v1284
        %v1448 = vunpack.c.h.b16 %v1284
        %v1449 = vunpack.c.l.b16 %v1285
        %v1450 = vunpack.c.h.b16 %v1285
        %v1451 = vunpack.c.l.b16 %v1286
        %v1452 = vunpack.c.h.b16 %v1286
        %v1453 = vunpack.c.l.b16 %v1287
        %v1454 = vunpack.c.h.b16 %v1287
        %v1455 = vunpack.c.l.b16 %v1288
        %v1456 = vunpack.c.h.b16 %v1288
        %v1457 = vunpack.c.l.b16 %v1289
        %v1458 = vunpack.c.h.b16 %v1289
        %v1459 = vunpack.c.l.b16 %v1290
        %v1460 = vunpack.c.h.b16 %v1290
        %v1461 = vunpack.c.l.b16 %v1291
        %v1462 = vunpack.c.h.b16 %v1291
        %v1463 = vunpack.c.l.b16 %v1292
        %v1464 = vunpack.c.h.b16 %v1292
        %v1465 = vunpack.c.l.b16 %v1293
        %v1466 = vunpack.c.h.b16 %v1293
        %v1467 = vunpack.c.l.b16 %v1294
        %v1468 = vunpack.c.h.b16 %v1294
        %v1469 = vunpack.c.l.b16 %v1295
        %v1470 = vunpack.c.h.b16 %v1295
        %v1471 = vunpack.c.l.b16 %v1296
        %v1472 = vunpack.c.h.b16 %v1296
        %v1473 = vunpack.c.l.b16 %v1297
        %v1474 = vunpack.c.h.b16 %v1297
        %v1475 = vunpack.c.l.b16 %v1298
        %v1476 = vunpack.c.h.b16 %v1298
        %v1477 = vunpack.c.l.b16 %v1299
        %v1478 = vunpack.c.h.b16 %v1299
        %v1479 = vunpack.c.l.b16 %v1300
        %v1480 = vunpack.c.h.b16 %v1300
        %v1481 = vunpack.c.l.b16 %v1301
        %v1482 = vunpack.c.h.b16 %v1301
        %v1483 = vunpack.c.l.b16 %v1302
        %v1484 = vunpack.c.h.b16 %v1302
        %v1485 = vunpack.c.l.b16 %v1303
        %v1486 = vunpack.c.h.b16 %v1303
        %v1487 = vunpack.c.l.b16 %v1304
        %v1488 = vunpack.c.h.b16 %v1304
        %v1489 = vunpack.c.l.b16 %v1305
        %v1490 = vunpack.c.h.b16 %v1305
        %v1491 = vunpack.c.l.b16 %v1306
        %v1492 = vunpack.c.h.b16 %v1306
        %v1493 = vunpack.c.l.b16 %v1307
        %v1494 = vunpack.c.h.b16 %v1307
        %v1495 = vunpack.c.l.b16 %v1308
        %v1496 = vunpack.c.h.b16 %v1308
        %v1497 = vunpack.c.l.b16 %v1309
        %v1498 = vunpack.c.h.b16 %v1309
        %v1499 = vunpack.c.l.b16 %v1310
        %v1500 = vunpack.c.h.b16 %v1310
        %v1501 = vunpack.c.l.b16 %v1311
        %v1502 = vunpack.c.h.b16 %v1311
        %v1503 = vunpack.c.l.b16 %v1312
        %v1504 = vunpack.c.h.b16 %v1312
        %v1505 = vpack.c.b16 %v1379, %v1377
        %v1506 = vpack.c.b16 %v1380, %v1378
        %v1507 = vpack.c.b16 %v1383, %v1381
        %v1508 = vpack.c.b16 %v1384, %v1382
        %v1509 = vpack.c.b16 %v1387, %v1385
        %v1510 = vpack.c.b16 %v1388, %v1386
        %v1511 = vpack.c.b16 %v1391, %v1389
        %v1512 = vpack.c.b16 %v1392, %v1390
        %v1513 = vpack.c.b16 %v1395, %v1393
        %v1514 = vpack.c.b16 %v1396, %v1394
        %v1515 = vpack.c.b16 %v1399, %v1397
        %v1516 = vpack.c.b16 %v1400, %v1398
        %v1517 = vpack.c.b16 %v1403, %v1401
        %v1518 = vpack.c.b16 %v1404, %v1402
        %v1519 = vpack.c.b16 %v1407, %v1405
        %v1520 = vpack.c.b16 %v1408, %v1406
        %v1521 = vpack.c.b16 %v1411, %v1409
        %v1522 = vpack.c.b16 %v1412, %v1410
        %v1523 = vpack.c.b16 %v1415, %v1413
        %v1524 = vpack.c.b16 %v1416, %v1414
        %v1525 = vpack.c.b16 %v1419, %v1417
        %v1526 = vpack.c.b16 %v1420, %v1418
        %v1527 = vpack.c.b16 %v1423, %v1421
        %v1528 = vpack.c.b16 %v1424, %v1422
        %v1529 = vpack.c.b16 %v1427, %v1425
        %v1530 = vpack.c.b16 %v1428, %v1426
        %v1531 = vpack.c.b16 %v1431, %v1429
        %v1532 = vpack.c.b16 %v1432, %v1430
        %v1533 = vpack.c.b16 %v1435, %v1433
        %v1534 = vpack.c.b16 %v1436, %v1434
        %v1535 = vpack.c.b16 %v1439, %v1437
        %v1536 = vpack.c.b16 %v1440, %v1438
        %v1537 = vpack.c.b16 %v1443, %v1441
        %v1538 = vpack.c.b16 %v1444, %v1442
        %v1539 = vpack.c.b16 %v1447, %v1445
        %v1540 = vpack.c.b16 %v1448, %v1446
        %v1541 = vpack.c.b16 %v1451, %v1449
        %v1542 = vpack.c.b16 %v1452, %v1450
        %v1543 = vpack.c.b16 %v1455, %v1453
        %v1544 = vpack.c.b16 %v1456, %v1454
        %v1545 = vpack.c.b16 %v1459, %v1457
        %v1546 = vpack.c.b16 %v1460, %v1458
        %v1547 = vpack.c.b16 %v1463, %v1461
        %v1548 = vpack.c.b16 %v1464, %v1462
        %v1549 = vpack.c.b16 %v1467, %v1465
        %v1550 = vpack.c.b16 %v1468, %v1466
        %v1551 = vpack.c.b16 %v1471, %v1469
        %v1552 = vpack.c.b16 %v1472, %v1470
        %v1553 = vpack.c.b16 %v1475, %v1473
        %v1554 = vpack.c.b16 %v1476, %v1474
        %v1555 = vpack.c.b16 %v1479, %v1477
        %v1556 = vpack.c.b16 %v1480, %v1478
        %v1557 = vpack.c.b16 %v1483, %v1481
        %v1558 = vpack.c.b16 %v1484, %v1482
        %v1559 = vpack.c.b16 %v1487, %v1485
        %v1560 = vpack.c.b16 %v1488, %v1486
        %v1561 = vpack.c.b16 %v1491, %v1489
        %v1562 = vpack.c.b16 %v1492, %v1490
        %v1563 = vpack.c.b16 %v1495, %v1493
        %v1564 = vpack.c.b16 %v1496, %v1494
        %v1565 = vpack.c.b16 %v1499, %v1497
        %v1566 = vpack.c.b16 %v1500, %v1498
        %v1567 = vpack.c.b16 %v1503, %v1501
        %v1568 = vpack.c.b16 %v1504, %v1502
        %1633 = vmatpush.bf16.msra.mxu0 %v1519
        %1634 = vmatpush.bf16.msra.mxu0 %v1517
        %1635 = vmatpush.bf16.msra.mxu0 %v1515
        %1636 = vmatpush.bf16.msra.mxu0 %v1513
        %1637 = vmatpush.bf16.msra.mxu0 %v1511
        %1638 = vmatpush.bf16.msra.mxu0 %v1509
        %1639 = vmatpush.bf16.msra.mxu0 %v1507
        %1640 = vmatpush.bf16.msra.mxu0 %v1505
        %1641 = vmatmul.bf16.gmra.mxu0 %v1217
        %v1642 = vpop.f32.mrf.mxu0
        %v1643 = vadd.f32 0.0, %v1642
        %v1644 = vpop.f32.mrf.mxu0
        %v1645 = vadd.f32 0.0, %v1644
        %1646 = vmatmul.bf16.gmra.mxu0 %v1221
        %v1647 = vpop.f32.mrf.mxu0
        %v1648 = vadd.f32 0.0, %v1647
        %v1649 = vpop.f32.mrf.mxu0
        %v1650 = vadd.f32 0.0, %v1649
        %1651 = vmatmul.bf16.gmra.mxu0 %v1225
        %v1652 = vpop.f32.mrf.mxu0
        %v1653 = vadd.f32 0.0, %v1652
        %v1654 = vpop.f32.mrf.mxu0
        %v1655 = vadd.f32 0.0, %v1654
        %1656 = vmatmul.bf16.gmra.mxu0 %v1229
        %v1657 = vpop.f32.mrf.mxu0
        %v1658 = vadd.f32 0.0, %v1657
        %v1659 = vpop.f32.mrf.mxu0
        %v1660 = vadd.f32 0.0, %v1659
        %1661 = vmatmul.bf16.gmra.mxu0 %v1233
        %v1662 = vpop.f32.mrf.mxu0
        %v1663 = vadd.f32 0.0, %v1662
        %v1664 = vpop.f32.mrf.mxu0
        %v1665 = vadd.f32 0.0, %v1664
        %1666 = vmatmul.bf16.gmra.mxu0 %v1237
        %v1667 = vpop.f32.mrf.mxu0
        %v1668 = vadd.f32 0.0, %v1667
        %v1669 = vpop.f32.mrf.mxu0
        %v1670 = vadd.f32 0.0, %v1669
        %1671 = vmatmul.bf16.gmra.mxu0 %v1241
        %v1672 = vpop.f32.mrf.mxu0
        %v1673 = vadd.f32 0.0, %v1672
        %v1674 = vpop.f32.mrf.mxu0
        %v1675 = vadd.f32 0.0, %v1674
        %1676 = vmatmul.bf16.gmra.mxu0 %v1245
        %v1677 = vpop.f32.mrf.mxu0
        %v1678 = vadd.f32 0.0, %v1677
        %v1679 = vpop.f32.mrf.mxu0
        %v1680 = vadd.f32 0.0, %v1679
        %1681 = vdwg.mxu0
        %1682 = vmatpush.bf16.msra.mxu0 %v1535
        %1683 = vmatpush.bf16.msra.mxu0 %v1533
        %1684 = vmatpush.bf16.msra.mxu0 %v1531
        %1685 = vmatpush.bf16.msra.mxu0 %v1529
        %1686 = vmatpush.bf16.msra.mxu0 %v1527
        %1687 = vmatpush.bf16.msra.mxu0 %v1525
        %1688 = vmatpush.bf16.msra.mxu0 %v1523
        %1689 = vmatpush.bf16.msra.mxu0 %v1521
        %1690 = vmatmul.bf16.gmra.mxu0 %v1218
        %v1691 = vpop.f32.mrf.mxu0
        %v1692 = vadd.f32 %v1643, %v1691
        %v1693 = vpop.f32.mrf.mxu0
        %v1694 = vadd.f32 %v1645, %v1693
        %1695 = vmatmul.bf16.gmra.mxu0 %v1222
        %v1696 = vpop.f32.mrf.mxu0
        %v1697 = vadd.f32 %v1648, %v1696
        %v1698 = vpop.f32.mrf.mxu0
        %v1699 = vadd.f32 %v1650, %v1698
        %1700 = vmatmul.bf16.gmra.mxu0 %v1226
        %v1701 = vpop.f32.mrf.mxu0
        %v1702 = vadd.f32 %v1653, %v1701
        %v1703 = vpop.f32.mrf.mxu0
        %v1704 = vadd.f32 %v1655, %v1703
        %1705 = vmatmul.bf16.gmra.mxu0 %v1230
        %v1706 = vpop.f32.mrf.mxu0
        %v1707 = vadd.f32 %v1658, %v1706
        %v1708 = vpop.f32.mrf.mxu0
        %v1709 = vadd.f32 %v1660, %v1708
        %1710 = vmatmul.bf16.gmra.mxu0 %v1234
        %v1711 = vpop.f32.mrf.mxu0
        %v1712 = vadd.f32 %v1663, %v1711
        %v1713 = vpop.f32.mrf.mxu0
        %v1714 = vadd.f32 %v1665, %v1713
        %1715 = vmatmul.bf16.gmra.mxu0 %v1238
        %v1716 = vpop.f32.mrf.mxu0
        %v1717 = vadd.f32 %v1668, %v1716
        %v1718 = vpop.f32.mrf.mxu0
        %v1719 = vadd.f32 %v1670, %v1718
        %1720 = vmatmul.bf16.gmra.mxu0 %v1242
        %v1721 = vpop.f32.mrf.mxu0
        %v1722 = vadd.f32 %v1673, %v1721
        %v1723 = vpop.f32.mrf.mxu0
        %v1724 = vadd.f32 %v1675, %v1723
        %1725 = vmatmul.bf16.gmra.mxu0 %v1246
        %v1726 = vpop.f32.mrf.mxu0
        %v1727 = vadd.f32 %v1678, %v1726
        %v1728 = vpop.f32.mrf.mxu0
        %v1729 = vadd.f32 %v1680, %v1728
        %1730 = vdwg.mxu0
        %1731 = vmatpush.bf16.msra.mxu0 %v1551
        %1732 = vmatpush.bf16.msra.mxu0 %v1549
        %1733 = vmatpush.bf16.msra.mxu0 %v1547
        %1734 = vmatpush.bf16.msra.mxu0 %v1545
        %1735 = vmatpush.bf16.msra.mxu0 %v1543
        %1736 = vmatpush.bf16.msra.mxu0 %v1541
        %1737 = vmatpush.bf16.msra.mxu0 %v1539
        %1738 = vmatpush.bf16.msra.mxu0 %v1537
        %1739 = vmatmul.bf16.gmra.mxu0 %v1219
        %v1740 = vpop.f32.mrf.mxu0
        %v1741 = vadd.f32 %v1692, %v1740
        %v1742 = vpop.f32.mrf.mxu0
        %v1743 = vadd.f32 %v1694, %v1742
        %1744 = vmatmul.bf16.gmra.mxu0 %v1223
        %v1745 = vpop.f32.mrf.mxu0
        %v1746 = vadd.f32 %v1697, %v1745
        %v1747 = vpop.f32.mrf.mxu0
        %v1748 = vadd.f32 %v1699, %v1747
        %1749 = vmatmul.bf16.gmra.mxu0 %v1227
        %v1750 = vpop.f32.mrf.mxu0
        %v1751 = vadd.f32 %v1702, %v1750
        %v1752 = vpop.f32.mrf.mxu0
        %v1753 = vadd.f32 %v1704, %v1752
        %1754 = vmatmul.bf16.gmra.mxu0 %v1231
        %v1755 = vpop.f32.mrf.mxu0
        %v1756 = vadd.f32 %v1707, %v1755
        %v1757 = vpop.f32.mrf.mxu0
        %v1758 = vadd.f32 %v1709, %v1757
        %1759 = vmatmul.bf16.gmra.mxu0 %v1235
        %v1760 = vpop.f32.mrf.mxu0
        %v1761 = vadd.f32 %v1712, %v1760
        %v1762 = vpop.f32.mrf.mxu0
        %v1763 = vadd.f32 %v1714, %v1762
        %1764 = vmatmul.bf16.gmra.mxu0 %v1239
        %v1765 = vpop.f32.mrf.mxu0
        %v1766 = vadd.f32 %v1717, %v1765
        %v1767 = vpop.f32.mrf.mxu0
        %v1768 = vadd.f32 %v1719, %v1767
        %1769 = vmatmul.bf16.gmra.mxu0 %v1243
        %v1770 = vpop.f32.mrf.mxu0
        %v1771 = vadd.f32 %v1722, %v1770
        %v1772 = vpop.f32.mrf.mxu0
        %v1773 = vadd.f32 %v1724, %v1772
        %1774 = vmatmul.bf16.gmra.mxu0 %v1247
        %v1775 = vpop.f32.mrf.mxu0
        %v1776 = vadd.f32 %v1727, %v1775
        %v1777 = vpop.f32.mrf.mxu0
        %v1778 = vadd.f32 %v1729, %v1777
        %1779 = vdwg.mxu0
        %1780 = vmatpush.bf16.msra.mxu0 %v1567
        %1781 = vmatpush.bf16.msra.mxu0 %v1565
        %1782 = vmatpush.bf16.msra.mxu0 %v1563
        %1783 = vmatpush.bf16.msra.mxu0 %v1561
        %1784 = vmatpush.bf16.msra.mxu0 %v1559
        %1785 = vmatpush.bf16.msra.mxu0 %v1557
        %1786 = vmatpush.bf16.msra.mxu0 %v1555
        %1787 = vmatpush.bf16.msra.mxu0 %v1553
        %1788 = vmatmul.bf16.gmra.mxu0 %v1220
        %v1789 = vpop.f32.mrf.mxu0
        %v1790 = vadd.f32 %v1741, %v1789
        %v1791 = vpop.f32.mrf.mxu0
        %v1792 = vadd.f32 %v1743, %v1791
        %1793 = vmatmul.bf16.gmra.mxu0 %v1224
        %v1794 = vpop.f32.mrf.mxu0
        %v1795 = vadd.f32 %v1746, %v1794
        %v1796 = vpop.f32.mrf.mxu0
        %v1797 = vadd.f32 %v1748, %v1796
        %1798 = vmatmul.bf16.gmra.mxu0 %v1228
        %v1799 = vpop.f32.mrf.mxu0
        %v1800 = vadd.f32 %v1751, %v1799
        %v1801 = vpop.f32.mrf.mxu0
        %v1802 = vadd.f32 %v1753, %v1801
        %1803 = vmatmul.bf16.gmra.mxu0 %v1232
        %v1804 = vpop.f32.mrf.mxu0
        %v1805 = vadd.f32 %v1756, %v1804
        %v1806 = vpop.f32.mrf.mxu0
        %v1807 = vadd.f32 %v1758, %v1806
        %1808 = vmatmul.bf16.gmra.mxu0 %v1236
        %v1809 = vpop.f32.mrf.mxu0
        %v1810 = vadd.f32 %v1761, %v1809
        %v1811 = vpop.f32.mrf.mxu0
        %v1812 = vadd.f32 %v1763, %v1811
        %1813 = vmatmul.bf16.gmra.mxu0 %v1240
        %v1814 = vpop.f32.mrf.mxu0
        %v1815 = vadd.f32 %v1766, %v1814
        %v1816 = vpop.f32.mrf.mxu0
        %v1817 = vadd.f32 %v1768, %v1816
        %1818 = vmatmul.bf16.gmra.mxu0 %v1244
        %v1819 = vpop.f32.mrf.mxu0
        %v1820 = vadd.f32 %v1771, %v1819
        %v1821 = vpop.f32.mrf.mxu0
        %v1822 = vadd.f32 %v1773, %v1821
        %1823 = vmatmul.bf16.gmra.mxu0 %v1248
        %v1824 = vpop.f32.mrf.mxu0
        %v1825 = vadd.f32 %v1776, %v1824
        %v1826 = vpop.f32.mrf.mxu0
        %v1827 = vadd.f32 %v1778, %v1826
        %1828 = vdwg.mxu0
        %1829 = vmatpush.bf16.msra.mxu0 %v1520
        %1830 = vmatpush.bf16.msra.mxu0 %v1518
        %1831 = vmatpush.bf16.msra.mxu0 %v1516
        %1832 = vmatpush.bf16.msra.mxu0 %v1514
        %1833 = vmatpush.bf16.msra.mxu0 %v1512
        %1834 = vmatpush.bf16.msra.mxu0 %v1510
        %1835 = vmatpush.bf16.msra.mxu0 %v1508
        %1836 = vmatpush.bf16.msra.mxu0 %v1506
        %1837 = vmatmul.bf16.gmra.mxu0 %v1217
        %v1838 = vpop.f32.mrf.mxu0
        %v1839 = vadd.f32 0.0, %v1838
        %v1840 = vpop.f32.mrf.mxu0
        %v1841 = vadd.f32 0.0, %v1840
        %1842 = vmatmul.bf16.gmra.mxu0 %v1221
        %v1843 = vpop.f32.mrf.mxu0
        %v1844 = vadd.f32 0.0, %v1843
        %v1845 = vpop.f32.mrf.mxu0
        %v1846 = vadd.f32 0.0, %v1845
        %1847 = vmatmul.bf16.gmra.mxu0 %v1225
        %v1848 = vpop.f32.mrf.mxu0
        %v1849 = vadd.f32 0.0, %v1848
        %v1850 = vpop.f32.mrf.mxu0
        %v1851 = vadd.f32 0.0, %v1850
        %1852 = vmatmul.bf16.gmra.mxu0 %v1229
        %v1853 = vpop.f32.mrf.mxu0
        %v1854 = vadd.f32 0.0, %v1853
        %v1855 = vpop.f32.mrf.mxu0
        %v1856 = vadd.f32 0.0, %v1855
        %1857 = vmatmul.bf16.gmra.mxu0 %v1233
        %v1858 = vpop.f32.mrf.mxu0
        %v1859 = vadd.f32 0.0, %v1858
        %v1860 = vpop.f32.mrf.mxu0
        %v1861 = vadd.f32 0.0, %v1860
        %1862 = vmatmul.bf16.gmra.mxu0 %v1237
        %v1863 = vpop.f32.mrf.mxu0
        %v1864 = vadd.f32 0.0, %v1863
        %v1865 = vpop.f32.mrf.mxu0
        %v1866 = vadd.f32 0.0, %v1865
        %1867 = vmatmul.bf16.gmra.mxu0 %v1241
        %v1868 = vpop.f32.mrf.mxu0
        %v1869 = vadd.f32 0.0, %v1868
        %v1870 = vpop.f32.mrf.mxu0
        %v1871 = vadd.f32 0.0, %v1870
        %1872 = vmatmul.bf16.gmra.mxu0 %v1245
        %v1873 = vpop.f32.mrf.mxu0
        %v1874 = vadd.f32 0.0, %v1873
        %v1875 = vpop.f32.mrf.mxu0
        %v1876 = vadd.f32 0.0, %v1875
        %1877 = vdwg.mxu0
        %1878 = vmatpush.bf16.msra.mxu0 %v1536
        %1879 = vmatpush.bf16.msra.mxu0 %v1534
        %1880 = vmatpush.bf16.msra.mxu0 %v1532
        %1881 = vmatpush.bf16.msra.mxu0 %v1530
        %1882 = vmatpush.bf16.msra.mxu0 %v1528
        %1883 = vmatpush.bf16.msra.mxu0 %v1526
        %1884 = vmatpush.bf16.msra.mxu0 %v1524
        %1885 = vmatpush.bf16.msra.mxu0 %v1522
        %1886 = vmatmul.bf16.gmra.mxu0 %v1218
        %v1887 = vpop.f32.mrf.mxu0
        %v1888 = vadd.f32 %v1839, %v1887
        %v1889 = vpop.f32.mrf.mxu0
        %v1890 = vadd.f32 %v1841, %v1889
        %1891 = vmatmul.bf16.gmra.mxu0 %v1222
        %v1892 = vpop.f32.mrf.mxu0
        %v1893 = vadd.f32 %v1844, %v1892
        %v1894 = vpop.f32.mrf.mxu0
        %v1895 = vadd.f32 %v1846, %v1894
        %1896 = vmatmul.bf16.gmra.mxu0 %v1226
        %v1897 = vpop.f32.mrf.mxu0
        %v1898 = vadd.f32 %v1849, %v1897
        %v1899 = vpop.f32.mrf.mxu0
        %v1900 = vadd.f32 %v1851, %v1899
        %1901 = vmatmul.bf16.gmra.mxu0 %v1230
        %v1902 = vpop.f32.mrf.mxu0
        %v1903 = vadd.f32 %v1854, %v1902
        %v1904 = vpop.f32.mrf.mxu0
        %v1905 = vadd.f32 %v1856, %v1904
        %1906 = vmatmul.bf16.gmra.mxu0 %v1234
        %v1907 = vpop.f32.mrf.mxu0
        %v1908 = vadd.f32 %v1859, %v1907
        %v1909 = vpop.f32.mrf.mxu0
        %v1910 = vadd.f32 %v1861, %v1909
        %1911 = vmatmul.bf16.gmra.mxu0 %v1238
        %v1912 = vpop.f32.mrf.mxu0
        %v1913 = vadd.f32 %v1864, %v1912
        %v1914 = vpop.f32.mrf.mxu0
        %v1915 = vadd.f32 %v1866, %v1914
        %1916 = vmatmul.bf16.gmra.mxu0 %v1242
        %v1917 = vpop.f32.mrf.mxu0
        %v1918 = vadd.f32 %v1869, %v1917
        %v1919 = vpop.f32.mrf.mxu0
        %v1920 = vadd.f32 %v1871, %v1919
        %1921 = vmatmul.bf16.gmra.mxu0 %v1246
        %v1922 = vpop.f32.mrf.mxu0
        %v1923 = vadd.f32 %v1874, %v1922
        %v1924 = vpop.f32.mrf.mxu0
        %v1925 = vadd.f32 %v1876, %v1924
        %1926 = vdwg.mxu0
        %1927 = vmatpush.bf16.msra.mxu0 %v1552
        %1928 = vmatpush.bf16.msra.mxu0 %v1550
        %1929 = vmatpush.bf16.msra.mxu0 %v1548
        %1930 = vmatpush.bf16.msra.mxu0 %v1546
        %1931 = vmatpush.bf16.msra.mxu0 %v1544
        %1932 = vmatpush.bf16.msra.mxu0 %v1542
        %1933 = vmatpush.bf16.msra.mxu0 %v1540
        %1934 = vmatpush.bf16.msra.mxu0 %v1538
        %1935 = vmatmul.bf16.gmra.mxu0 %v1219
        %v1936 = vpop.f32.mrf.mxu0
        %v1937 = vadd.f32 %v1888, %v1936
        %v1938 = vpop.f32.mrf.mxu0
        %v1939 = vadd.f32 %v1890, %v1938
        %1940 = vmatmul.bf16.gmra.mxu0 %v1223
        %v1941 = vpop.f32.mrf.mxu0
        %v1942 = vadd.f32 %v1893, %v1941
        %v1943 = vpop.f32.mrf.mxu0
        %v1944 = vadd.f32 %v1895, %v1943
        %1945 = vmatmul.bf16.gmra.mxu0 %v1227
        %v1946 = vpop.f32.mrf.mxu0
        %v1947 = vadd.f32 %v1898, %v1946
        %v1948 = vpop.f32.mrf.mxu0
        %v1949 = vadd.f32 %v1900, %v1948
        %1950 = vmatmul.bf16.gmra.mxu0 %v1231
        %v1951 = vpop.f32.mrf.mxu0
        %v1952 = vadd.f32 %v1903, %v1951
        %v1953 = vpop.f32.mrf.mxu0
        %v1954 = vadd.f32 %v1905, %v1953
        %1955 = vmatmul.bf16.gmra.mxu0 %v1235
        %v1956 = vpop.f32.mrf.mxu0
        %v1957 = vadd.f32 %v1908, %v1956
        %v1958 = vpop.f32.mrf.mxu0
        %v1959 = vadd.f32 %v1910, %v1958
        %1960 = vmatmul.bf16.gmra.mxu0 %v1239
        %v1961 = vpop.f32.mrf.mxu0
        %v1962 = vadd.f32 %v1913, %v1961
        %v1963 = vpop.f32.mrf.mxu0
        %v1964 = vadd.f32 %v1915, %v1963
        %1965 = vmatmul.bf16.gmra.mxu0 %v1243
        %v1966 = vpop.f32.mrf.mxu0
        %v1967 = vadd.f32 %v1918, %v1966
        %v1968 = vpop.f32.mrf.mxu0
        %v1969 = vadd.f32 %v1920, %v1968
        %1970 = vmatmul.bf16.gmra.mxu0 %v1247
        %v1971 = vpop.f32.mrf.mxu0
        %v1972 = vadd.f32 %v1923, %v1971
        %v1973 = vpop.f32.mrf.mxu0
        %v1974 = vadd.f32 %v1925, %v1973
        %1975 = vdwg.mxu0
        %1976 = vmatpush.bf16.msra.mxu0 %v1568
        %1977 = vmatpush.bf16.msra.mxu0 %v1566
        %1978 = vmatpush.bf16.msra.mxu0 %v1564
        %1979 = vmatpush.bf16.msra.mxu0 %v1562
        %1980 = vmatpush.bf16.msra.mxu0 %v1560
        %1981 = vmatpush.bf16.msra.mxu0 %v1558
        %1982 = vmatpush.bf16.msra.mxu0 %v1556
        %1983 = vmatpush.bf16.msra.mxu0 %v1554
        %1984 = vmatmul.bf16.gmra.mxu0 %v1220
        %v1985 = vpop.f32.mrf.mxu0
        %v1986 = vadd.f32 %v1937, %v1985
        %v1987 = vpop.f32.mrf.mxu0
        %v1988 = vadd.f32 %v1939, %v1987
        %1989 = vmatmul.bf16.gmra.mxu0 %v1224
        %v1990 = vpop.f32.mrf.mxu0
        %v1991 = vadd.f32 %v1942, %v1990
        %v1992 = vpop.f32.mrf.mxu0
        %v1993 = vadd.f32 %v1944, %v1992
        %1994 = vmatmul.bf16.gmra.mxu0 %v1228
        %v1995 = vpop.f32.mrf.mxu0
        %v1996 = vadd.f32 %v1947, %v1995
        %v1997 = vpop.f32.mrf.mxu0
        %v1998 = vadd.f32 %v1949, %v1997
        %1999 = vmatmul.bf16.gmra.mxu0 %v1232
        %v2000 = vpop.f32.mrf.mxu0
        %v2001 = vadd.f32 %v1952, %v2000
        %v2002 = vpop.f32.mrf.mxu0
        %v2003 = vadd.f32 %v1954, %v2002
        %2004 = vmatmul.bf16.gmra.mxu0 %v1236
        %v2005 = vpop.f32.mrf.mxu0
        %v2006 = vadd.f32 %v1957, %v2005
        %v2007 = vpop.f32.mrf.mxu0
        %v2008 = vadd.f32 %v1959, %v2007
        %2009 = vmatmul.bf16.gmra.mxu0 %v1240
        %v2010 = vpop.f32.mrf.mxu0
        %v2011 = vadd.f32 %v1962, %v2010
        %v2012 = vpop.f32.mrf.mxu0
        %v2013 = vadd.f32 %v1964, %v2012
        %2014 = vmatmul.bf16.gmra.mxu0 %v1244
        %v2015 = vpop.f32.mrf.mxu0
        %v2016 = vadd.f32 %v1967, %v2015
        %v2017 = vpop.f32.mrf.mxu0
        %v2018 = vadd.f32 %v1969, %v2017
        %2019 = vmatmul.bf16.gmra.mxu0 %v1248
        %v2020 = vpop.f32.mrf.mxu0
        %v2021 = vadd.f32 %v1972, %v2020
        %v2022 = vpop.f32.mrf.mxu0
        %v2023 = vadd.f32 %v1974, %v2022
        %2024 = vdwg.mxu0
        %v2025 = vmul.f32 %v1790, %v1201
        %v2026 = vmul.f32 %v1986, %v1201
        %v2027 = vmul.f32 %v1792, %v1202
        %v2028 = vmul.f32 %v1988, %v1202
        %v2029 = vmul.f32 %v1795, %v1203
        %v2030 = vmul.f32 %v1991, %v1203
        %v2031 = vmul.f32 %v1797, %v1204
        %v2032 = vmul.f32 %v1993, %v1204
        %v2033 = vmul.f32 %v1800, %v1205
        %v2034 = vmul.f32 %v1996, %v1205
        %v2035 = vmul.f32 %v1802, %v1206
        %v2036 = vmul.f32 %v1998, %v1206
        %v2037 = vmul.f32 %v1805, %v1207
        %v2038 = vmul.f32 %v2001, %v1207
        %v2039 = vmul.f32 %v1807, %v1208
        %v2040 = vmul.f32 %v2003, %v1208
        %v2041 = vmul.f32 %v1810, %v1209
        %v2042 = vmul.f32 %v2006, %v1209
        %v2043 = vmul.f32 %v1812, %v1210
        %v2044 = vmul.f32 %v2008, %v1210
        %v2045 = vmul.f32 %v1815, %v1211
        %v2046 = vmul.f32 %v2011, %v1211
        %v2047 = vmul.f32 %v1817, %v1212
        %v2048 = vmul.f32 %v2013, %v1212
        %v2049 = vmul.f32 %v1820, %v1213
        %v2050 = vmul.f32 %v2016, %v1213
        %v2051 = vmul.f32 %v1822, %v1214
        %v2052 = vmul.f32 %v2018, %v1214
        %v2053 = vmul.f32 %v1825, %v1215
        %v2054 = vmul.f32 %v2021, %v1215
        %v2055 = vmul.f32 %v1827, %v1216
        %v2056 = vmul.f32 %v2023, %v1216
        %v2057 = vpack.c.bf16 %v2026, %v2025
        %v2058 = vpack.c.bf16 %v2028, %v2027
        %v2059 = vpack.c.bf16 %v2030, %v2029
        %v2060 = vpack.c.bf16 %v2032, %v2031
        %v2061 = vpack.c.bf16 %v2034, %v2033
        %v2062 = vpack.c.bf16 %v2036, %v2035
        %v2063 = vpack.c.bf16 %v2038, %v2037
        %v2064 = vpack.c.bf16 %v2040, %v2039
        %v2065 = vpack.c.bf16 %v2042, %v2041
        %v2066 = vpack.c.bf16 %v2044, %v2043
        %v2067 = vpack.c.bf16 %v2046, %v2045
        %v2068 = vpack.c.bf16 %v2048, %v2047
        %v2069 = vpack.c.bf16 %v2050, %v2049
        %v2070 = vpack.c.bf16 %v2052, %v2051
        %v2071 = vpack.c.bf16 %v2054, %v2053
        %v2072 = vpack.c.bf16 %v2056, %v2055
        %2073 = vst [vmem:[%s266] sm:$0xff] %v2057
        %2074 = vst [vmem:[%s266 + $0x8] sm:$0xff] %v2058
        %2075 = vst [vmem:[%s266 + $0x10] sm:$0xff] %v2059
        %2076 = vst [vmem:[%s266 + $0x18] sm:$0xff] %v2060
        %2077 = vst [vmem:[%s266 + $0x20] sm:$0xff] %v2061
        %2078 = vst [vmem:[%s266 + $0x28] sm:$0xff] %v2062
        %2079 = vst [vmem:[%s266 + $0x30] sm:$0xff] %v2063
        %2080 = vst [vmem:[%s266 + $0x38] sm:$0xff] %v2064
        %2081 = vst [vmem:[%s266 + $0x40] sm:$0xff] %v2065
        %2082 = vst [vmem:[%s266 + $0x48] sm:$0xff] %v2066
        %2083 = vst [vmem:[%s266 + $0x50] sm:$0xff] %v2067
        %2084 = vst [vmem:[%s266 + $0x58] sm:$0xff] %v2068
        %2085 = vst [vmem:[%s266 + $0x60] sm:$0xff] %v2069
        %2086 = vst [vmem:[%s266 + $0x68] sm:$0xff] %v2070
        %2087 = vst [vmem:[%s266 + $0x70] sm:$0xff] %v2071
        %2088 = vst [vmem:[%s266 + $0x78] sm:$0xff] %v2072
        %s2089 = sand.u32 %s120, 1
        %s2090 = scalar_lea.sflag [#allocation4], %s2089
        %s2091 = sand.u32 %s120, 1
        %s2092 = smul.addr %s2091, 128
        %s2093 = scalar_lea.vmem [#allocation8], %s2092
        // Predicated region
        $region45: #{tpu_custom_call.1} parent=31 // pred_check
          %p2094 = pneg %p130
        $region46: #{tpu_custom_call.1} parent=31 // pred_check_branch
          %2096 = sbr.rel (%p2094) target = $region48
        $region47: #{tpu_custom_call.1} parent=31 // pred_region
          %s2097 = smul.u32 16, %s28
          %2099 = vsyncadd %s2090, 0
          %s2100 = smul.addr %s2097, 2
          %s2101 = smul.addr %s27, 64
          %s2102 = sadd.s32 %s2100, %s2101
          %s2103 = smul.addr %s2102, 4
          %s2104 = scalar_lea.hbm %s3, %s2103
          %s2105 = sshll.u32 %s2093, 4
          %s2106 = int_to_ptr.vmem [resolvable:$true] %s2105
          %s2107 = sshll.u32 %s2104, 4
          %s2108 = int_to_ptr.hbm [resolvable:$true] %s2107
          %2113 = dma.vmem_to_hbm [thread:$0]  %s2106, 2048, %s2108, %s2090, 128, 128, 8
        $region48: #{tpu_custom_call.1} parent=31 // pred_fallthru
          _
      $region32: #{tpu_custom_call.1} parent=5 // pred_fallthru
        _
      %p2114 = scmp.le.s32.totalorder 2, %s18
      // Predicated region
      $region49: #{tpu_custom_call.1} parent=5 // pred_check
        %p2115 = pneg %p2114
      $region50: #{tpu_custom_call.1} parent=5 // pred_check_branch
        %2117 = sbr.rel (%p2115) target = $region52
      $region51: #{tpu_custom_call.1} parent=5 // pred_region
        %s2118 = ssub.s32 %s18, 2
        // Predicated region
        $region53: #{tpu_custom_call.1} parent=51 // pred_check
          %p2119 = pneg %p136
        $region54: #{tpu_custom_call.1} parent=51 // pred_check_branch
          %2121 = sbr.rel (%p2119) target = $region56
        $region55: #{tpu_custom_call.1} parent=51 // pred_region
          %s2122 = sand.u32 %s121, 1
          %s2123 = scalar_lea.sflag [#allocation4], %s2122
          %s2124 = sand.u32 %s121, 1
          %s2125 = smul.addr %s2124, 128
          %s2126 = scalar_lea.vmem [#allocation8], %s2125
          %2128 = dma.done %s2123, 2048
        $region56: #{tpu_custom_call.1} parent=51 // pred_fallthru
          _
      $region52: #{tpu_custom_call.1} parent=5 // pred_fallthru
        _
    $region6: #{tpu_custom_call.1} parent=1 // loop_footer
      %s22 = sadd.s32 1, %s18
    $region7: #{tpu_custom_call.1} parent=1 // loop_footer_branch
      %17 = sbr.rel target = $region3
    $region8: #{tpu_custom_call.1} parent=1 // loop_exit
      _
    %2129 = vsyncpa [#allocation3], 1
    %s2130 = scalar_lea.sflag [#allocation3], 1
    %2131 = vsyncpa %s2130, 1
    %2132 = vsyncpa [#allocation6], 1
    %s2133 = scalar_lea.sflag [#allocation6], 1
    %2134 = vsyncpa %s2133, 1
    %2135 = vsyncpa [#allocation4], 1
    %s2136 = scalar_lea.sflag [#allocation4], 1
    %2137 = vsyncpa %s2136, 1

</llo_original>
